<compile_context>
chip_gen: v6e
topology: v6e:2x2x1
jax: 0.10.0
libtpu: 0.0.40
codegen_flags: <defaults>
</compile_context>

<pallas_src>
import jax
import jax.numpy as jnp
from jax import lax
from jax.experimental import pallas as pl
from jax.experimental.pallas import tpu as pltpu

L_IN = 64        # input sequence length (>= 22 so every conv/pool is valid)
C_IN = 4         # input channels
N_CLASSES = 4
FC_PAD = 128     # FC output padded to 128 lanes for lane-dense stores

K1, K2, K3 = 7, 5, 3
C1, C2, C3 = 32, 64, 128
L3_VALID = 10    # true conv3 output length for L_IN=64 (used for the average)

# Padded (all multiples of 8) position counts of the stride-free formulation.
LP1 = 72         # conv1 positions computed per sample (valid: 0..57)
M1L = 64         # adjacent-pair-max positions kept        (valid: 0..56)
U2 = 56          # dilated-conv2 positions computed        (valid even rows)
M2L = 48         # adjacent(+2)-max positions kept         (valid rows 0,4,..,44)
U3 = 40          # dilated-conv3 positions computed        (valid rows 0,4,..,36)


def _round_up(x, m):
    return ((x + m - 1) // m) * m


def fault_cnn_kernel(c1_ref, w1_ref, b1_ref, w2_ref, b2_ref, w3_ref, b3_ref,
                     wfc_ref, bfc_ref, out_ref):
    bt = out_ref.shape[0]                                   # batch tile (static)

    # ---- conv1: one MXU matmul on the wrapper-built im2col (bf16 in, f32 acc)
    h1 = jnp.dot(c1_ref[...], w1_ref[...], preferred_element_type=jnp.float32)
    h1 = jnp.maximum(h1 + b1_ref[...], 0.0)                 # (bt*72, 32) f32
    h1 = h1.reshape(bt, LP1, C1)                            # free: 72 % 8 == 0

    # ---- pool1 as full-resolution adjacent max: pool1[p] == m1[2p]
    m1 = jnp.maximum(h1[:, 0:M1L, :], h1[:, 1:M1L + 1, :])  # (bt, 64, 32)

    # ---- conv2 as a stride-2 dilated conv on m1 (even rows are true conv2)
    c2 = jnp.concatenate([m1[:, 2 * j:2 * j + U2, :] for j in range(K2)],
                         axis=2)                            # (bt, 56, 160) f32
    h2 = jnp.dot(c2.reshape(bt * U2, K2 * C1).astype(jnp.bfloat16),
                 w2_ref[...], preferred_element_type=jnp.float32)
    h2 = jnp.maximum(h2 + b2_ref[...], 0.0)                 # (bt*56, 64) f32
    h2 = h2.reshape(bt, U2, C2)                             # free: 56 % 8 == 0

    # ---- pool2 as adjacent(+2) max: pool2[r] == m2[4r]
    m2 = jnp.maximum(h2[:, 0:M2L, :], h2[:, 2:M2L + 2, :])  # (bt, 48, 64)

    # ---- conv3 as a stride-4 dilated conv on m2 (rows 0,4,... are true conv3)
    c3 = jnp.concatenate([m2[:, 4 * k:4 * k + U3, :] for k in range(K3)],
                         axis=2)                            # (bt, 40, 192) f32
    h3 = jnp.dot(c3.reshape(bt * U3, K3 * C2).astype(jnp.bfloat16),
                 w3_ref[...], preferred_element_type=jnp.float32)
    h3 = jnp.maximum(h3 + b3_ref[...], 0.0)                 # (bt*40, 128) f32
    h3 = h3.reshape(bt, U3, C3)                             # free: 40 % 8 == 0

    # ---- global average pool over the 10 valid conv3 rows u = 0,4,...,36.
    # (the 1/10 is folded into wfc in the wrapper)
    u = lax.broadcasted_iota(jnp.int32, (1, U3, 1), 1)
    g = jnp.sum(jnp.where((u & 3) == 0, h3, 0.0), axis=1)   # (bt, 128) f32

    # ---- fully connected, zero-padded to 128 output lanes (lane-dense store)
    out_ref[...] = (jnp.dot(g.astype(jnp.bfloat16), wfc_ref[...],
                            preferred_element_type=jnp.float32)
                    + bfc_ref[...])                         # (bt, 128) f32


def fault_cnn_forward(x_ncl, params, b_tile=128):
    """x_ncl: (N, 4, L_IN) float32 in PyTorch NCL layout -> (N, 4) logits."""
    n = x_ncl.shape[0]
    x = jnp.transpose(x_ncl, (0, 2, 1)).astype(jnp.float32)      # (N, 64, 4)

    # Batch tile: multiple of 8 sublanes; prefer >=2 grid steps so the
    # "parallel" batch axis can actually use both v7x TensorCores.
    bt = min(b_tile, _round_up(n, 8))
    n_pad = _round_up(n, bt)
    if n_pad // bt < 2 and n_pad > 8:
        bt = _round_up(n_pad // 2, 8)
        n_pad = _round_up(n, bt)
    if n_pad != n:
        x = jnp.pad(x, ((0, n_pad - n), (0, 0), (0, 0)))

    # ---- conv1 im2col in the wrapper (layout plumbing, not compute).
    # Feature index = k*C_IN + c ; positions padded to LP1 (garbage past 57).
    xp = jnp.pad(x, ((0, 0), (0, LP1 + K1 - 1 - L_IN), (0, 0)))  # (n_pad, 78, 4)
    c1 = jnp.concatenate([xp[:, k:k + LP1, :] for k in range(K1)], axis=2)
    c1 = c1.reshape(n_pad * LP1, K1 * C_IN).astype(jnp.bfloat16)  # (n_pad*72, 28)

    # im2col-folded conv weights: PyTorch (Cout, Cin, K) -> (K*Cin, Cout),
    # row index = k*Cin + c, matching the concat ordering above / in-kernel.
    def fold(w):
        return jnp.transpose(w, (2, 1, 0)).reshape(-1, w.shape[0]).astype(jnp.float32)

    w1 = fold(params["w1"]).astype(jnp.bfloat16)            # (28, 32)
    w2 = fold(params["w2"]).astype(jnp.bfloat16)            # (160, 64)
    w3 = fold(params["w3"]).astype(jnp.bfloat16)            # (192, 128)
    b1 = params["b1"].reshape(1, -1).astype(jnp.float32)
    b2 = params["b2"].reshape(1, -1).astype(jnp.float32)
    b3 = params["b3"].reshape(1, -1).astype(jnp.float32)

    # FC padded to 128 output lanes; 1/L3 of the global average folded in.
    wfc = jnp.zeros((C3, FC_PAD), jnp.float32).at[:, :N_CLASSES].set(
        params["wfc"].T.astype(jnp.float32) / float(L3_VALID)).astype(jnp.bfloat16)
    bfc = jnp.zeros((1, FC_PAD), jnp.float32).at[0, :N_CLASSES].set(
        params["bfc"].astype(jnp.float32))

    out = pl.pallas_call(
        fault_cnn_kernel,
        out_shape=jax.ShapeDtypeStruct((n_pad, FC_PAD), jnp.float32),
        grid_spec=pltpu.PrefetchScalarGridSpec(
            num_scalar_prefetch=0,
            grid=(n_pad // bt,),
            in_specs=[
                pl.BlockSpec((bt * LP1, K1 * C_IN), lambda i: (i, 0)),
                pl.BlockSpec((K1 * C_IN, C1), lambda i: (0, 0)),
                pl.BlockSpec((1, C1), lambda i: (0, 0)),
                pl.BlockSpec((K2 * C1, C2), lambda i: (0, 0)),
                pl.BlockSpec((1, C2), lambda i: (0, 0)),
                pl.BlockSpec((K3 * C2, C3), lambda i: (0, 0)),
                pl.BlockSpec((1, C3), lambda i: (0, 0)),
                pl.BlockSpec((C3, FC_PAD), lambda i: (0, 0)),
                pl.BlockSpec((1, FC_PAD), lambda i: (0, 0)),
            ],
            out_specs=pl.BlockSpec((bt, FC_PAD), lambda i: (i, 0)),
        ),
        compiler_params=pltpu.CompilerParams(
            dimension_semantics=("parallel",),        # batch axis independent
            vmem_limit_bytes=48 * 1024 * 1024),       # headroom incl. v7x 64MiB
    )(c1, w1, b1, w2, b2, w3, b3, wfc, bfc)
    return out[:n, :N_CLASSES]


def reference_forward(x_ncl, params):
    """Pure-JAX f32 reference mirroring the PyTorch module (NCL layout)."""
    def conv(h, w, b):
        y = lax.conv_general_dilated(h, w, window_strides=(1,),
                                     padding="VALID",
                                     dimension_numbers=("NCH", "OIH", "NCH"))
        return y + b[None, :, None]

    def maxpool2(h):
        return lax.reduce_window(h, -jnp.inf, lax.max,
                                 (1, 1, 2), (1, 1, 2), "VALID")

    h = jnp.maximum(conv(x_ncl, params["w1"], params["b1"]), 0.0)
    h = maxpool2(h)
    h = jnp.maximum(conv(h, params["w2"], params["b2"]), 0.0)
    h = maxpool2(h)
    h = jnp.maximum(conv(h, params["w3"], params["b3"]), 0.0)
    g = jnp.mean(h, axis=2)                         # adaptive avg pool -> (N, 128)
    return g @ params["wfc"].T + params["bfc"]


def init_params(key):
    """Deterministic PyTorch-like (uniform +/- 1/sqrt(fan_in)) initialization."""
    def uconv(k, shape):   # shape = (Cout, Cin, K)
        bound = 1.0 / jnp.sqrt(shape[1] * shape[2])
        return jax.random.uniform(k, shape, jnp.float32, -bound, bound)

    def ubias(k, c, fan_in):
        bound = 1.0 / jnp.sqrt(fan_in)
        return jax.random.uniform(k, (c,), jnp.float32, -bound, bound)

    ks = jax.random.split(key, 8)
    return {
        "w1": uconv(ks[0], (32, 4, 7)),    "b1": ubias(ks[1], 32, 4 * 7),
        "w2": uconv(ks[2], (64, 32, 5)),   "b2": ubias(ks[3], 64, 32 * 5),
        "w3": uconv(ks[4], (128, 64, 3)),  "b3": ubias(ks[5], 128, 64 * 3),
        "wfc": jax.random.uniform(ks[6], (4, 128), jnp.float32,
                                  -1.0 / jnp.sqrt(128.0), 1.0 / jnp.sqrt(128.0)),
        "bfc": ubias(ks[7], 4, 128),
    }


if __name__ == "__main__":
    key = jax.random.PRNGKey(0)
    k_x, k_p = jax.random.split(key)
    batch = 2
    x = jax.random.normal(k_x, (batch, C_IN, L_IN), jnp.float32)  # NCL layout
    params = init_params(k_p)

    out = jax.block_until_ready(fault_cnn_forward(x, params))
    ref = jax.block_until_ready(reference_forward(x, params))

    assert out.shape == (batch, N_CLASSES)
    # bf16-staged MXU inputs -> loosened tolerance vs the pure-f32 reference.
    assert jnp.allclose(out, ref, rtol=2e-2, atol=2e-2), (out, ref)

    print("KERNEL_OK")
</pallas_src>

<mosaic_0001>
module attributes {stable_mosaic.version = 11 : i64} {
  func.func @fault_cnn_kernel(%arg0: i32, %arg1: memref<576x28xbf16, #tpu.memory_space<vmem>>, %arg2: memref<28x32xbf16, #tpu.memory_space<vmem>>, %arg3: memref<1x32xf32, #tpu.memory_space<vmem>>, %arg4: memref<160x64xbf16, #tpu.memory_space<vmem>>, %arg5: memref<1x64xf32, #tpu.memory_space<vmem>>, %arg6: memref<192x128xbf16, #tpu.memory_space<vmem>>, %arg7: memref<1x128xf32, #tpu.memory_space<vmem>>, %arg8: memref<128x128xbf16, #tpu.memory_space<vmem>>, %arg9: memref<1x128xf32, #tpu.memory_space<vmem>>, %arg10: memref<8x128xf32, #tpu.memory_space<vmem>>) attributes {dimension_semantics = [#tpu.dimension_semantics<parallel>], iteration_bounds = array<i64: 1>, scalar_prefetch = 0 : i64, scratch_operands = 0 : i64, tpu.core_type = #tpu.core_type<tc>, window_params = [{transform_indices = @transform_0, window_bounds = array<i64: 576, 28>}, {pipeline_mode = #tpu.pipeline_mode<synchronous>, transform_indices = @transform_1, window_bounds = array<i64: 28, 32>}, {pipeline_mode = #tpu.pipeline_mode<synchronous>, transform_indices = @transform_2, window_bounds = array<i64: 1, 32>}, {pipeline_mode = #tpu.pipeline_mode<synchronous>, transform_indices = @transform_3, window_bounds = array<i64: 160, 64>}, {pipeline_mode = #tpu.pipeline_mode<synchronous>, transform_indices = @transform_4, window_bounds = array<i64: 1, 64>}, {pipeline_mode = #tpu.pipeline_mode<synchronous>, transform_indices = @transform_5, window_bounds = array<i64: 192, 128>}, {pipeline_mode = #tpu.pipeline_mode<synchronous>, transform_indices = @transform_6, window_bounds = array<i64: 1, 128>}, {pipeline_mode = #tpu.pipeline_mode<synchronous>, transform_indices = @transform_7, window_bounds = array<i64: 128, 128>}, {pipeline_mode = #tpu.pipeline_mode<synchronous>, transform_indices = @transform_8, window_bounds = array<i64: 1, 128>}, {transform_indices = @transform_9, window_bounds = array<i64: 8, 128>}]} {
    %c0 = arith.constant 0 : index
    %c0_0 = arith.constant 0 : index
    %0 = vector.load %arg1[%c0, %c0_0] : memref<576x28xbf16, #tpu.memory_space<vmem>>, vector<576x28xbf16>
    %c0_1 = arith.constant 0 : index
    %c0_2 = arith.constant 0 : index
    %1 = vector.load %arg2[%c0_1, %c0_2] : memref<28x32xbf16, #tpu.memory_space<vmem>>, vector<28x32xbf16>
    %cst = arith.constant dense<0.000000e+00> : vector<576x32xf32>
    %2 = tpu.matmul %0, %1, %cst {dimension_numbers = #tpu.dot_dimension_numbers<[1], [0], [0], [1], [0, 0, 1, 1], [], []>} : vector<576x28xbf16>, vector<28x32xbf16>, vector<576x32xf32> -> vector<576x32xf32>
    %c0_3 = arith.constant 0 : index
    %c0_4 = arith.constant 0 : index
    %3 = vector.load %arg3[%c0_3, %c0_4] : memref<1x32xf32, #tpu.memory_space<vmem>>, vector<1x32xf32>
    %4 = vector.broadcast %3 : vector<1x32xf32> to vector<576x32xf32>
    %5 = arith.addf %2, %4 : vector<576x32xf32>
    %cst_5 = arith.constant 0.000000e+00 : f32
    %6 = vector.broadcast %cst_5 : f32 to vector<576x32xf32>
    %7 = arith.maximumf %5, %6 : vector<576x32xf32>
    %8 = vector.shape_cast %7 : vector<576x32xf32> to vector<8x72x32xf32>
    %9 = vector.extract_strided_slice %8 {offsets = [0, 0, 0], sizes = [8, 64, 32], strides = [1, 1, 1]} : vector<8x72x32xf32> to vector<8x64x32xf32>
    %10 = vector.extract_strided_slice %8 {offsets = [0, 1, 0], sizes = [8, 64, 32], strides = [1, 1, 1]} : vector<8x72x32xf32> to vector<8x64x32xf32>
    %11 = arith.maximumf %9, %10 : vector<8x64x32xf32>
    %12 = vector.extract_strided_slice %11 {offsets = [0, 0, 0], sizes = [8, 56, 32], strides = [1, 1, 1]} : vector<8x64x32xf32> to vector<8x56x32xf32>
    %13 = vector.extract_strided_slice %11 {offsets = [0, 2, 0], sizes = [8, 56, 32], strides = [1, 1, 1]} : vector<8x64x32xf32> to vector<8x56x32xf32>
    %14 = vector.extract_strided_slice %11 {offsets = [0, 4, 0], sizes = [8, 56, 32], strides = [1, 1, 1]} : vector<8x64x32xf32> to vector<8x56x32xf32>
    %15 = vector.extract_strided_slice %11 {offsets = [0, 6, 0], sizes = [8, 56, 32], strides = [1, 1, 1]} : vector<8x64x32xf32> to vector<8x56x32xf32>
    %16 = vector.extract_strided_slice %11 {offsets = [0, 8, 0], sizes = [8, 56, 32], strides = [1, 1, 1]} : vector<8x64x32xf32> to vector<8x56x32xf32>
    %17 = tpu.concatenate %12, %13, %14, %15, %16 in 2 : vector<8x56x32xf32>, vector<8x56x32xf32>, vector<8x56x32xf32>, vector<8x56x32xf32>, vector<8x56x32xf32> -> vector<8x56x160xf32>
    %18 = vector.shape_cast %17 : vector<8x56x160xf32> to vector<448x160xf32>
    %19 = arith.truncf %18 : vector<448x160xf32> to vector<448x160xbf16>
    %c0_6 = arith.constant 0 : index
    %c0_7 = arith.constant 0 : index
    %20 = vector.load %arg4[%c0_6, %c0_7] : memref<160x64xbf16, #tpu.memory_space<vmem>>, vector<160x64xbf16>
    %cst_8 = arith.constant dense<0.000000e+00> : vector<448x64xf32>
    %21 = tpu.matmul %19, %20, %cst_8 {dimension_numbers = #tpu.dot_dimension_numbers<[1], [0], [0], [1], [0, 0, 1, 1], [], []>} : vector<448x160xbf16>, vector<160x64xbf16>, vector<448x64xf32> -> vector<448x64xf32>
    %c0_9 = arith.constant 0 : index
    %c0_10 = arith.constant 0 : index
    %22 = vector.load %arg5[%c0_9, %c0_10] : memref<1x64xf32, #tpu.memory_space<vmem>>, vector<1x64xf32>
    %23 = vector.broadcast %22 : vector<1x64xf32> to vector<448x64xf32>
    %24 = arith.addf %21, %23 : vector<448x64xf32>
    %cst_11 = arith.constant 0.000000e+00 : f32
    %25 = vector.broadcast %cst_11 : f32 to vector<448x64xf32>
    %26 = arith.maximumf %24, %25 : vector<448x64xf32>
    %27 = vector.shape_cast %26 : vector<448x64xf32> to vector<8x56x64xf32>
    %28 = vector.extract_strided_slice %27 {offsets = [0, 0, 0], sizes = [8, 48, 64], strides = [1, 1, 1]} : vector<8x56x64xf32> to vector<8x48x64xf32>
    %29 = vector.extract_strided_slice %27 {offsets = [0, 2, 0], sizes = [8, 48, 64], strides = [1, 1, 1]} : vector<8x56x64xf32> to vector<8x48x64xf32>
    %30 = arith.maximumf %28, %29 : vector<8x48x64xf32>
    %31 = vector.extract_strided_slice %30 {offsets = [0, 0, 0], sizes = [8, 40, 64], strides = [1, 1, 1]} : vector<8x48x64xf32> to vector<8x40x64xf32>
    %32 = vector.extract_strided_slice %30 {offsets = [0, 4, 0], sizes = [8, 40, 64], strides = [1, 1, 1]} : vector<8x48x64xf32> to vector<8x40x64xf32>
    %33 = vector.extract_strided_slice %30 {offsets = [0, 8, 0], sizes = [8, 40, 64], strides = [1, 1, 1]} : vector<8x48x64xf32> to vector<8x40x64xf32>
    %34 = tpu.concatenate %31, %32, %33 in 2 : vector<8x40x64xf32>, vector<8x40x64xf32>, vector<8x40x64xf32> -> vector<8x40x192xf32>
    %35 = vector.shape_cast %34 : vector<8x40x192xf32> to vector<320x192xf32>
    %36 = arith.truncf %35 : vector<320x192xf32> to vector<320x192xbf16>
    %c0_12 = arith.constant 0 : index
    %c0_13 = arith.constant 0 : index
    %37 = vector.load %arg6[%c0_12, %c0_13] : memref<192x128xbf16, #tpu.memory_space<vmem>>, vector<192x128xbf16>
    %cst_14 = arith.constant dense<0.000000e+00> : vector<320x128xf32>
    %38 = tpu.matmul %36, %37, %cst_14 {dimension_numbers = #tpu.dot_dimension_numbers<[1], [0], [0], [1], [0, 0, 1, 1], [], []>} : vector<320x192xbf16>, vector<192x128xbf16>, vector<320x128xf32> -> vector<320x128xf32>
    %c0_15 = arith.constant 0 : index
    %c0_16 = arith.constant 0 : index
    %39 = vector.load %arg7[%c0_15, %c0_16] : memref<1x128xf32, #tpu.memory_space<vmem>>, vector<1x128xf32>
    %40 = vector.broadcast %39 : vector<1x128xf32> to vector<320x128xf32>
    %41 = arith.addf %38, %40 : vector<320x128xf32>
    %cst_17 = arith.constant 0.000000e+00 : f32
    %42 = vector.broadcast %cst_17 : f32 to vector<320x128xf32>
    %43 = arith.maximumf %41, %42 : vector<320x128xf32>
    %44 = vector.shape_cast %43 : vector<320x128xf32> to vector<8x40x128xf32>
    %45 = tpu.iota {dimensions = array<i32: 1>} : vector<1x40x1xi32>
    %c3_i32 = arith.constant 3 : i32
    %46 = vector.broadcast %c3_i32 : i32 to vector<1x40x1xi32>
    %47 = arith.andi %45, %46 : vector<1x40x1xi32>
    %c0_i32 = arith.constant 0 : i32
    %48 = vector.broadcast %c0_i32 : i32 to vector<1x40x1xi32>
    %49 = arith.cmpi eq, %47, %48 : vector<1x40x1xi32>
    %cst_18 = arith.constant 0.000000e+00 : f32
    %50 = vector.shape_cast %49 : vector<1x40x1xi1> to vector<1x40x1xi1>
    %51 = vector.broadcast %50 : vector<1x40x1xi1> to vector<8x40x128xi1>
    %52 = vector.broadcast %cst_18 : f32 to vector<8x40x128xf32>
    %53 = arith.select %51, %44, %52 : vector<8x40x128xi1>, vector<8x40x128xf32>
    %cst_19 = arith.constant dense<0.000000e+00> : vector<8x128xf32>
    %54 = vector.multi_reduction <add>, %53, %cst_19 [1] : vector<8x40x128xf32> to vector<8x128xf32>
    %55 = arith.truncf %54 : vector<8x128xf32> to vector<8x128xbf16>
    %c0_20 = arith.constant 0 : index
    %c0_21 = arith.constant 0 : index
    %56 = vector.load %arg8[%c0_20, %c0_21] : memref<128x128xbf16, #tpu.memory_space<vmem>>, vector<128x128xbf16>
    %cst_22 = arith.constant dense<0.000000e+00> : vector<8x128xf32>
    %57 = tpu.matmul %55, %56, %cst_22 {dimension_numbers = #tpu.dot_dimension_numbers<[1], [0], [0], [1], [0, 0, 1, 1], [], []>} : vector<8x128xbf16>, vector<128x128xbf16>, vector<8x128xf32> -> vector<8x128xf32>
    %c0_23 = arith.constant 0 : index
    %c0_24 = arith.constant 0 : index
    %58 = vector.load %arg9[%c0_23, %c0_24] : memref<1x128xf32, #tpu.memory_space<vmem>>, vector<1x128xf32>
    %59 = vector.broadcast %58 : vector<1x128xf32> to vector<8x128xf32>
    %60 = arith.addf %57, %59 : vector<8x128xf32>
    %c0_25 = arith.constant 0 : index
    %c0_26 = arith.constant 0 : index
    %61 = vector.load %arg10[%c0_25, %c0_26] : memref<8x128xf32, #tpu.memory_space<vmem>>, vector<8x128xf32>
    tpu.vector_store %arg10[%c0_25, %c0_26], %60 {strides = array<i32>} : memref<8x128xf32, #tpu.memory_space<vmem>>, vector<8x128xf32>,
    return
  }
  func.func @transform_0(%arg0: i32) -> (i32, i32) {
    %c0_i32 = arith.constant 0 : i32
    %c0_i32_0 = arith.constant 0 : i32
    return %arg0, %c0_i32 : i32, i32
  }
  func.func @transform_1(%arg0: i32) -> (i32, i32) {
    %c0_i32 = arith.constant 0 : i32
    %c0_i32_0 = arith.constant 0 : i32
    %c0_i32_1 = arith.constant 0 : i32
    return %c0_i32, %c0_i32_0 : i32, i32
  }
  func.func @transform_2(%arg0: i32) -> (i32, i32) {
    %c0_i32 = arith.constant 0 : i32
    %c0_i32_0 = arith.constant 0 : i32
    %c0_i32_1 = arith.constant 0 : i32
    return %c0_i32, %c0_i32_0 : i32, i32
  }
  func.func @transform_3(%arg0: i32) -> (i32, i32) {
    %c0_i32 = arith.constant 0 : i32
    %c0_i32_0 = arith.constant 0 : i32
    %c0_i32_1 = arith.constant 0 : i32
    return %c0_i32, %c0_i32_0 : i32, i32
  }
  func.func @transform_4(%arg0: i32) -> (i32, i32) {
    %c0_i32 = arith.constant 0 : i32
    %c0_i32_0 = arith.constant 0 : i32
    %c0_i32_1 = arith.constant 0 : i32
    return %c0_i32, %c0_i32_0 : i32, i32
  }
  func.func @transform_5(%arg0: i32) -> (i32, i32) {
    %c0_i32 = arith.constant 0 : i32
    %c0_i32_0 = arith.constant 0 : i32
    %c0_i32_1 = arith.constant 0 : i32
    return %c0_i32, %c0_i32_0 : i32, i32
  }
  func.func @transform_6(%arg0: i32) -> (i32, i32) {
    %c0_i32 = arith.constant 0 : i32
    %c0_i32_0 = arith.constant 0 : i32
    %c0_i32_1 = arith.constant 0 : i32
    return %c0_i32, %c0_i32_0 : i32, i32
  }
  func.func @transform_7(%arg0: i32) -> (i32, i32) {
    %c0_i32 = arith.constant 0 : i32
    %c0_i32_0 = arith.constant 0 : i32
    %c0_i32_1 = arith.constant 0 : i32
    return %c0_i32, %c0_i32_0 : i32, i32
  }
  func.func @transform_8(%arg0: i32) -> (i32, i32) {
    %c0_i32 = arith.constant 0 : i32
    %c0_i32_0 = arith.constant 0 : i32
    %c0_i32_1 = arith.constant 0 : i32
    return %c0_i32, %c0_i32_0 : i32, i32
  }
  func.func @transform_9(%arg0: i32) -> (i32, i32) {
    %c0_i32 = arith.constant 0 : i32
    %c0_i32_0 = arith.constant 0 : i32
    return %arg0, %c0_i32 : i32, i32
  }
}

</mosaic_0001>

<llo_original>
// kernel: tpu_custom_call.1
$region0: #{tpu_custom_call.1}
  #allocation0 [shape = 'u32[]', space=smem, size = 0x4, offset = 0x4, fixed_abs, tag = 'smem constant byte address 0x4 - core index']
  #allocation1 [shape = 'u32[144,128]{1,0:T(1,128)}', space=vmem, size = 0x12000, scoped, tag = 'internal scratch']
  %s0 = inlined_call_operand.vmem [shape: bf16[576,28], index: 0, kind: input, shape index: {}]
  %s1 = inlined_call_operand.vmem [shape: bf16[28,32], index: 1, kind: input, shape index: {}]
  %s2 = inlined_call_operand.vmem [shape: f32[1,32], index: 2, kind: input, shape index: {}]
  %s3 = inlined_call_operand.vmem [shape: bf16[160,64], index: 3, kind: input, shape index: {}]
  %s4 = inlined_call_operand.vmem [shape: f32[1,64], index: 4, kind: input, shape index: {}]
  %s5 = inlined_call_operand.vmem [shape: bf16[192,128], index: 5, kind: input, shape index: {}]
  %s6 = inlined_call_operand.vmem [shape: f32[1,128], index: 6, kind: input, shape index: {}]
  %s7 = inlined_call_operand.vmem [shape: bf16[128,128], index: 7, kind: input, shape index: {}]
  %s8 = inlined_call_operand.vmem [shape: f32[1,128], index: 8, kind: input, shape index: {}]
  %s9 = inlined_call_operand.hbm [shape: f32[8,128], index: 9, kind: output, shape index: {}]
  %s10 = sld [smem:[#allocation0]]
  $region46: #{tpu_custom_call.1} parent=0
    _
  %s12 = ssub.s32 1, %s10
  %s13 = scalar_select 0, %s12, %s10
  $region1: #{tpu_custom_call.1} parent=0
    #allocation2 [shape = 'u8[4096]{0}', space=vmem, size = 0x1000, scoped, tag = 'output window, operand 0, single buffered']
    #allocation3 [shape = 's32[1]{0}', space=sflag, size = 0x4, scoped, tag = 'scoped memory for tpu_custom_call.1']
    %14 = vsyncpa [#allocation3], 0
    // Predicated region
    $region2: #{tpu_custom_call.1} parent=1 // pred_check
      _
    $region3: #{tpu_custom_call.1} parent=1 // pred_check_branch
      %16 = sbr.rel (0) target = $region5
    $region4: #{tpu_custom_call.1} parent=1 // pred_region
      _
    $region5: #{tpu_custom_call.1} parent=1 // pred_fallthru
      _
    // Predicated region
    $region6: #{tpu_custom_call.1} parent=1 // pred_check
      _
    $region7: #{tpu_custom_call.1} parent=1 // pred_check_branch
      %18 = sbr.rel (0) target = $region9
    $region8: #{tpu_custom_call.1} parent=1 // pred_region
      _
    $region9: #{tpu_custom_call.1} parent=1 // pred_fallthru
      _
    // Predicated region
    $region10: #{tpu_custom_call.1} parent=1 // pred_check
      _
    $region11: #{tpu_custom_call.1} parent=1 // pred_check_branch
      %20 = sbr.rel (0) target = $region13
    $region12: #{tpu_custom_call.1} parent=1 // pred_region
      _
    $region13: #{tpu_custom_call.1} parent=1 // pred_fallthru
      _
    // Predicated region
    $region14: #{tpu_custom_call.1} parent=1 // pred_check
      _
    $region15: #{tpu_custom_call.1} parent=1 // pred_check_branch
      %22 = sbr.rel (0) target = $region17
    $region16: #{tpu_custom_call.1} parent=1 // pred_region
      _
    $region17: #{tpu_custom_call.1} parent=1 // pred_fallthru
      _
    // Predicated region
    $region18: #{tpu_custom_call.1} parent=1 // pred_check
      _
    $region19: #{tpu_custom_call.1} parent=1 // pred_check_branch
      %24 = sbr.rel (0) target = $region21
    $region20: #{tpu_custom_call.1} parent=1 // pred_region
      _
    $region21: #{tpu_custom_call.1} parent=1 // pred_fallthru
      _
    // Predicated region
    $region22: #{tpu_custom_call.1} parent=1 // pred_check
      _
    $region23: #{tpu_custom_call.1} parent=1 // pred_check_branch
      %26 = sbr.rel (0) target = $region25
    $region24: #{tpu_custom_call.1} parent=1 // pred_region
      _
    $region25: #{tpu_custom_call.1} parent=1 // pred_fallthru
      _
    // Predicated region
    $region26: #{tpu_custom_call.1} parent=1 // pred_check
      _
    $region27: #{tpu_custom_call.1} parent=1 // pred_check_branch
      %28 = sbr.rel (0) target = $region29
    $region28: #{tpu_custom_call.1} parent=1 // pred_region
      _
    $region29: #{tpu_custom_call.1} parent=1 // pred_fallthru
      _
    // Predicated region
    $region30: #{tpu_custom_call.1} parent=1 // pred_check
      _
    $region31: #{tpu_custom_call.1} parent=1 // pred_check_branch
      %30 = sbr.rel (0) target = $region33
    $region32: #{tpu_custom_call.1} parent=1 // pred_region
      _
    $region33: #{tpu_custom_call.1} parent=1 // pred_fallthru
      _
    // Predicated region
    $region34: #{tpu_custom_call.1} parent=1 // pred_check
      _
    $region35: #{tpu_custom_call.1} parent=1 // pred_check_branch
      %32 = sbr.rel (0) target = $region37
    $region36: #{tpu_custom_call.1} parent=1 // pred_region
      _
    $region37: #{tpu_custom_call.1} parent=1 // pred_fallthru
      _
    %v34 = vld [vmem:[%s0] sm:$0xf]
    %v35 = vld [vmem:[%s0 + $0x4] sm:$0xf]
    %v36 = vld [vmem:[%s0 + $0x8] sm:$0xf]
    %v37 = vld [vmem:[%s0 + $0xc] sm:$0xf]
    %v38 = vld [vmem:[%s0 + $0x10] sm:$0xf]
    %v39 = vld [vmem:[%s0 + $0x14] sm:$0xf]
    %v40 = vld [vmem:[%s0 + $0x18] sm:$0xf]
    %v41 = vld [vmem:[%s0 + $0x1c] sm:$0xf]
    %v42 = vld [vmem:[%s0 + $0x20] sm:$0xf]
    %v43 = vld [vmem:[%s0 + $0x24] sm:$0xf]
    %v44 = vld [vmem:[%s0 + $0x28] sm:$0xf]
    %v45 = vld [vmem:[%s0 + $0x2c] sm:$0xf]
    %v46 = vld [vmem:[%s0 + $0x30] sm:$0xf]
    %v47 = vld [vmem:[%s0 + $0x34] sm:$0xf]
    %v48 = vld [vmem:[%s0 + $0x38] sm:$0xf]
    %v49 = vld [vmem:[%s0 + $0x3c] sm:$0xf]
    %v50 = vld [vmem:[%s0 + $0x40] sm:$0xf]
    %v51 = vld [vmem:[%s0 + $0x44] sm:$0xf]
    %v52 = vld [vmem:[%s0 + $0x48] sm:$0xf]
    %v53 = vld [vmem:[%s0 + $0x4c] sm:$0xf]
    %v54 = vld [vmem:[%s0 + $0x50] sm:$0xf]
    %v55 = vld [vmem:[%s0 + $0x54] sm:$0xf]
    %v56 = vld [vmem:[%s0 + $0x58] sm:$0xf]
    %v57 = vld [vmem:[%s0 + $0x5c] sm:$0xf]
    %v58 = vld [vmem:[%s0 + $0x60] sm:$0xf]
    %v59 = vld [vmem:[%s0 + $0x64] sm:$0xf]
    %v60 = vld [vmem:[%s0 + $0x68] sm:$0xf]
    %v61 = vld [vmem:[%s0 + $0x6c] sm:$0xf]
    %v62 = vld [vmem:[%s0 + $0x70] sm:$0xf]
    %v63 = vld [vmem:[%s0 + $0x74] sm:$0xf]
    %v64 = vld [vmem:[%s0 + $0x78] sm:$0xf]
    %v65 = vld [vmem:[%s0 + $0x7c] sm:$0xf]
    %v66 = vld [vmem:[%s0 + $0x80] sm:$0xf]
    %v67 = vld [vmem:[%s0 + $0x84] sm:$0xf]
    %v68 = vld [vmem:[%s0 + $0x88] sm:$0xf]
    %v69 = vld [vmem:[%s0 + $0x8c] sm:$0xf]
    %v70 = vld [vmem:[%s0 + $0x90] sm:$0xf]
    %v71 = vld [vmem:[%s0 + $0x94] sm:$0xf]
    %v72 = vld [vmem:[%s0 + $0x98] sm:$0xf]
    %v73 = vld [vmem:[%s0 + $0x9c] sm:$0xf]
    %v74 = vld [vmem:[%s0 + $0xa0] sm:$0xf]
    %v75 = vld [vmem:[%s0 + $0xa4] sm:$0xf]
    %v76 = vld [vmem:[%s0 + $0xa8] sm:$0xf]
    %v77 = vld [vmem:[%s0 + $0xac] sm:$0xf]
    %v78 = vld [vmem:[%s0 + $0xb0] sm:$0xf]
    %v79 = vld [vmem:[%s0 + $0xb4] sm:$0xf]
    %v80 = vld [vmem:[%s0 + $0xb8] sm:$0xf]
    %v81 = vld [vmem:[%s0 + $0xbc] sm:$0xf]
    %v82 = vld [vmem:[%s0 + $0xc0] sm:$0xf]
    %v83 = vld [vmem:[%s0 + $0xc4] sm:$0xf]
    %v84 = vld [vmem:[%s0 + $0xc8] sm:$0xf]
    %v85 = vld [vmem:[%s0 + $0xcc] sm:$0xf]
    %v86 = vld [vmem:[%s0 + $0xd0] sm:$0xf]
    %v87 = vld [vmem:[%s0 + $0xd4] sm:$0xf]
    %v88 = vld [vmem:[%s0 + $0xd8] sm:$0xf]
    %v89 = vld [vmem:[%s0 + $0xdc] sm:$0xf]
    %v90 = vld [vmem:[%s0 + $0xe0] sm:$0xf]
    %v91 = vld [vmem:[%s0 + $0xe4] sm:$0xf]
    %v92 = vld [vmem:[%s0 + $0xe8] sm:$0xf]
    %v93 = vld [vmem:[%s0 + $0xec] sm:$0xf]
    %v94 = vld [vmem:[%s0 + $0xf0] sm:$0xf]
    %v95 = vld [vmem:[%s0 + $0xf4] sm:$0xf]
    %v96 = vld [vmem:[%s0 + $0xf8] sm:$0xf]
    %v97 = vld [vmem:[%s0 + $0xfc] sm:$0xf]
    %v98 = vld [vmem:[%s0 + $0x100] sm:$0xf]
    %v99 = vld [vmem:[%s0 + $0x104] sm:$0xf]
    %v100 = vld [vmem:[%s0 + $0x108] sm:$0xf]
    %v101 = vld [vmem:[%s0 + $0x10c] sm:$0xf]
    %v102 = vld [vmem:[%s0 + $0x110] sm:$0xf]
    %v103 = vld [vmem:[%s0 + $0x114] sm:$0xf]
    %v104 = vld [vmem:[%s0 + $0x118] sm:$0xf]
    %v105 = vld [vmem:[%s0 + $0x11c] sm:$0xf]
    %v106 = vld [vmem:[%s1] sm:$0xf]
    %v107 = vld [vmem:[%s1 + $0x4] sm:$0xf]
    %v108 = vld [vmem:[%s1 + $0x8] sm:$0xf]
    %v109 = vld [vmem:[%s1 + $0xc] sm:$0x3]
    %v110 = vld [vmem:[%s2] sm:$0x1]
    %v112 = vlaneseq
    %v113 = vshrl.u32 %v112, 7
    %v114 = vsub.s32 0, %v113
    %v115 = vrot.slane %v110, %v114
    %v189 = vunpack.c.l.b16 %v34
    %v190 = vunpack.c.l.b16 %v35
    %v191 = vunpack.c.l.b16 %v36
    %v192 = vunpack.c.l.b16 %v37
    %v193 = vunpack.c.l.b16 %v38
    %v194 = vunpack.c.l.b16 %v39
    %v195 = vunpack.c.l.b16 %v40
    %v196 = vunpack.c.l.b16 %v41
    %v197 = vunpack.c.l.b16 %v42
    %v198 = vunpack.c.l.b16 %v43
    %v199 = vunpack.c.l.b16 %v44
    %v200 = vunpack.c.l.b16 %v45
    %v201 = vunpack.c.l.b16 %v46
    %v202 = vunpack.c.l.b16 %v47
    %v203 = vunpack.c.l.b16 %v48
    %v204 = vunpack.c.l.b16 %v49
    %v205 = vunpack.c.l.b16 %v50
    %v206 = vunpack.c.l.b16 %v51
    %v207 = vunpack.c.l.b16 %v52
    %v208 = vunpack.c.l.b16 %v53
    %v209 = vunpack.c.l.b16 %v54
    %v210 = vunpack.c.l.b16 %v55
    %v211 = vunpack.c.l.b16 %v56
    %v212 = vunpack.c.l.b16 %v57
    %v213 = vunpack.c.l.b16 %v58
    %v214 = vunpack.c.l.b16 %v59
    %v215 = vunpack.c.l.b16 %v60
    %v216 = vunpack.c.l.b16 %v61
    %v217 = vunpack.c.l.b16 %v62
    %v218 = vunpack.c.l.b16 %v63
    %v219 = vunpack.c.l.b16 %v64
    %v220 = vunpack.c.l.b16 %v65
    %v221 = vunpack.c.l.b16 %v66
    %v222 = vunpack.c.l.b16 %v67
    %v223 = vunpack.c.l.b16 %v68
    %v224 = vunpack.c.l.b16 %v69
    %v225 = vunpack.c.l.b16 %v70
    %v226 = vunpack.c.l.b16 %v71
    %v227 = vunpack.c.l.b16 %v72
    %v228 = vunpack.c.l.b16 %v73
    %v229 = vunpack.c.l.b16 %v74
    %v230 = vunpack.c.l.b16 %v75
    %v231 = vunpack.c.l.b16 %v76
    %v232 = vunpack.c.l.b16 %v77
    %v233 = vunpack.c.l.b16 %v78
    %v234 = vunpack.c.l.b16 %v79
    %v235 = vunpack.c.l.b16 %v80
    %v236 = vunpack.c.l.b16 %v81
    %v237 = vunpack.c.l.b16 %v82
    %v238 = vunpack.c.l.b16 %v83
    %v239 = vunpack.c.l.b16 %v84
    %v240 = vunpack.c.l.b16 %v85
    %v241 = vunpack.c.l.b16 %v86
    %v242 = vunpack.c.l.b16 %v87
    %v243 = vunpack.c.l.b16 %v88
    %v244 = vunpack.c.l.b16 %v89
    %v245 = vunpack.c.l.b16 %v90
    %v246 = vunpack.c.l.b16 %v91
    %v247 = vunpack.c.l.b16 %v92
    %v248 = vunpack.c.l.b16 %v93
    %v249 = vunpack.c.l.b16 %v94
    %v250 = vunpack.c.l.b16 %v95
    %v251 = vunpack.c.l.b16 %v96
    %v252 = vunpack.c.l.b16 %v97
    %v253 = vunpack.c.l.b16 %v98
    %v254 = vunpack.c.l.b16 %v99
    %v255 = vunpack.c.l.b16 %v100
    %v256 = vunpack.c.l.b16 %v101
    %v257 = vunpack.c.l.b16 %v102
    %v258 = vunpack.c.l.b16 %v103
    %v259 = vunpack.c.l.b16 %v104
    %v260 = vunpack.c.l.b16 %v105
    %v261 = vpack.c.b16 %v190, %v189
    %v262 = vpack.c.b16 %v192, %v191
    %v263 = vpack.c.b16 %v194, %v193
    %v264 = vpack.c.b16 %v196, %v195
    %v265 = vpack.c.b16 %v198, %v197
    %v266 = vpack.c.b16 %v200, %v199
    %v267 = vpack.c.b16 %v202, %v201
    %v268 = vpack.c.b16 %v204, %v203
    %v269 = vpack.c.b16 %v206, %v205
    %v270 = vpack.c.b16 %v208, %v207
    %v271 = vpack.c.b16 %v210, %v209
    %v272 = vpack.c.b16 %v212, %v211
    %v273 = vpack.c.b16 %v214, %v213
    %v274 = vpack.c.b16 %v216, %v215
    %v275 = vpack.c.b16 %v218, %v217
    %v276 = vpack.c.b16 %v220, %v219
    %v277 = vpack.c.b16 %v222, %v221
    %v278 = vpack.c.b16 %v224, %v223
    %v279 = vpack.c.b16 %v226, %v225
    %v280 = vpack.c.b16 %v228, %v227
    %v281 = vpack.c.b16 %v230, %v229
    %v282 = vpack.c.b16 %v232, %v231
    %v283 = vpack.c.b16 %v234, %v233
    %v284 = vpack.c.b16 %v236, %v235
    %v285 = vpack.c.b16 %v238, %v237
    %v286 = vpack.c.b16 %v240, %v239
    %v287 = vpack.c.b16 %v242, %v241
    %v288 = vpack.c.b16 %v244, %v243
    %v289 = vpack.c.b16 %v246, %v245
    %v290 = vpack.c.b16 %v248, %v247
    %v291 = vpack.c.b16 %v250, %v249
    %v292 = vpack.c.b16 %v252, %v251
    %v293 = vpack.c.b16 %v254, %v253
    %v294 = vpack.c.b16 %v256, %v255
    %v295 = vpack.c.b16 %v258, %v257
    %v296 = vpack.c.b16 %v260, %v259
    %v301 = vunpack.c.l.b16 %v106
    %v302 = vunpack.c.l.b16 %v107
    %v303 = vunpack.c.l.b16 %v108
    %v304 = vunpack.c.l.b16 %v109
    %v305 = vpack.c.b16 %v302, %v301
    %v306 = vpack.c.b16 %v304, %v303
    %vm308 = vcmask 228352
    %v310 = vsel %vm308, %v261, 0
    %v313 = vsel %vm308, %v262, 0
    %v316 = vsel %vm308, %v263, 0
    %v319 = vsel %vm308, %v264, 0
    %v322 = vsel %vm308, %v265, 0
    %v325 = vsel %vm308, %v266, 0
    %v328 = vsel %vm308, %v267, 0
    %v331 = vsel %vm308, %v268, 0
    %v334 = vsel %vm308, %v269, 0
    %v337 = vsel %vm308, %v270, 0
    %v340 = vsel %vm308, %v271, 0
    %v343 = vsel %vm308, %v272, 0
    %v346 = vsel %vm308, %v273, 0
    %v349 = vsel %vm308, %v274, 0
    %v352 = vsel %vm308, %v275, 0
    %v355 = vsel %vm308, %v276, 0
    %v358 = vsel %vm308, %v277, 0
    %v361 = vsel %vm308, %v278, 0
    %v364 = vsel %vm308, %v279, 0
    %v367 = vsel %vm308, %v280, 0
    %v370 = vsel %vm308, %v281, 0
    %v373 = vsel %vm308, %v282, 0
    %v376 = vsel %vm308, %v283, 0
    %v379 = vsel %vm308, %v284, 0
    %v382 = vsel %vm308, %v285, 0
    %v385 = vsel %vm308, %v286, 0
    %v388 = vsel %vm308, %v287, 0
    %v391 = vsel %vm308, %v288, 0
    %v394 = vsel %vm308, %v289, 0
    %v397 = vsel %vm308, %v290, 0
    %v400 = vsel %vm308, %v291, 0
    %v403 = vsel %vm308, %v292, 0
    %v406 = vsel %vm308, %v293, 0
    %v409 = vsel %vm308, %v294, 0
    %v412 = vsel %vm308, %v295, 0
    %v415 = vsel %vm308, %v296, 0
    %vm417 = vcmask 1045504
    %v419 = vsel %vm417, %v306, 0
    %421 = vmatprep.subr.bf16.mxu0 0
    %422 = vmatpush1.bf16.msra.mxu0 0
    %423 = vmatprep.subr.bf16.mxu0 0
    %424 = vmatpush1.bf16.msra.mxu0 0
    %425 = vmatprep.subr.bf16.mxu0 0
    %426 = vmatpush1.bf16.msra.mxu0 0
    %427 = vmatprep.subr.bf16.mxu0 0
    %428 = vmatpush1.bf16.msra.mxu0 0
    %429 = vmatprep.subr.bf16.mxu0 0
    %430 = vmatpush1.bf16.msra.mxu0 0
    %431 = vmatprep.subr.bf16.mxu0 0
    %432 = vmatpush1.bf16.msra.mxu0 0
    %433 = vmatprep.subr.bf16.mxu0 0
    %434 = vmatpush1.bf16.msra.mxu0 %v419
    %435 = vmatprep.subr.bf16.mxu0 0
    %436 = vmatpush1.bf16.msra.mxu0 %v305
    %437 = vmatprep.subr.bf16.mxu0 0
    %438 = vmatpush2.bf16.msra.mxu0 0
    %439 = vmatprep.subr.bf16.mxu0 0
    %440 = vmatpush2.bf16.msra.mxu0 0
    %441 = vmatprep.subr.bf16.mxu0 0
    %442 = vmatpush2.bf16.msra.mxu0 0
    %443 = vmatprep.subr.bf16.mxu0 0
    %444 = vmatpush2.bf16.msra.mxu0 0
    %445 = vmatprep.subr.bf16.mxu0 0
    %446 = vmatpush2.bf16.msra.mxu0 0
    %447 = vmatprep.subr.bf16.mxu0 0
    %448 = vmatpush2.bf16.msra.mxu0 0
    %449 = vmatprep.subr.bf16.mxu0 0
    %450 = vmatpush2.bf16.msra.mxu0 0
    %451 = vmatprep.subr.bf16.mxu0 0
    %452 = vmatpush2.bf16.msra.mxu0 0
    %453 = vmatprep.mubr.bf16.mxu0 0
    %454 = vmatmul.mubr.bf16.gmra.mxu0 %v310
    %v455 = vpop.f32.mrf.mxu0
    %v456 = vadd.f32 %v115, %v455
    %v457 = vpop.f32.mrf.mxu0
    %v458 = vpop.f32.mrf.mxu0
    %v459 = vadd.f32 %v115, %v458
    %v460 = vpop.f32.mrf.mxu0
    %461 = vmatprep.mubr.bf16.mxu0 0
    %462 = vmatmul.mubr.bf16.gmra.mxu0 %v313
    %v463 = vpop.f32.mrf.mxu0
    %v464 = vadd.f32 %v115, %v463
    %v465 = vpop.f32.mrf.mxu0
    %v466 = vpop.f32.mrf.mxu0
    %v467 = vadd.f32 %v115, %v466
    %v468 = vpop.f32.mrf.mxu0
    %469 = vmatprep.mubr.bf16.mxu0 0
    %470 = vmatmul.mubr.bf16.gmra.mxu0 %v316
    %v471 = vpop.f32.mrf.mxu0
    %v472 = vadd.f32 %v115, %v471
    %v473 = vpop.f32.mrf.mxu0
    %v474 = vpop.f32.mrf.mxu0
    %v475 = vadd.f32 %v115, %v474
    %v476 = vpop.f32.mrf.mxu0
    %477 = vmatprep.mubr.bf16.mxu0 0
    %478 = vmatmul.mubr.bf16.gmra.mxu0 %v319
    %v479 = vpop.f32.mrf.mxu0
    %v480 = vadd.f32 %v115, %v479
    %v481 = vpop.f32.mrf.mxu0
    %v482 = vpop.f32.mrf.mxu0
    %v483 = vadd.f32 %v115, %v482
    %v484 = vpop.f32.mrf.mxu0
    %485 = vmatprep.mubr.bf16.mxu0 0
    %486 = vmatmul.mubr.bf16.gmra.mxu0 %v322
    %v487 = vpop.f32.mrf.mxu0
    %v488 = vadd.f32 %v115, %v487
    %v489 = vpop.f32.mrf.mxu0
    %v490 = vpop.f32.mrf.mxu0
    %v491 = vadd.f32 %v115, %v490
    %v492 = vpop.f32.mrf.mxu0
    %493 = vmatprep.mubr.bf16.mxu0 0
    %494 = vmatmul.mubr.bf16.gmra.mxu0 %v325
    %v495 = vpop.f32.mrf.mxu0
    %v496 = vadd.f32 %v115, %v495
    %v497 = vpop.f32.mrf.mxu0
    %v498 = vpop.f32.mrf.mxu0
    %v499 = vadd.f32 %v115, %v498
    %v500 = vpop.f32.mrf.mxu0
    %501 = vmatprep.mubr.bf16.mxu0 0
    %502 = vmatmul.mubr.bf16.gmra.mxu0 %v328
    %v503 = vpop.f32.mrf.mxu0
    %v504 = vadd.f32 %v115, %v503
    %v505 = vpop.f32.mrf.mxu0
    %v506 = vpop.f32.mrf.mxu0
    %v507 = vadd.f32 %v115, %v506
    %v508 = vpop.f32.mrf.mxu0
    %509 = vmatprep.mubr.bf16.mxu0 0
    %510 = vmatmul.mubr.bf16.gmra.mxu0 %v331
    %v511 = vpop.f32.mrf.mxu0
    %v512 = vadd.f32 %v115, %v511
    %v513 = vpop.f32.mrf.mxu0
    %v514 = vpop.f32.mrf.mxu0
    %v515 = vadd.f32 %v115, %v514
    %v516 = vpop.f32.mrf.mxu0
    %517 = vmatprep.mubr.bf16.mxu0 0
    %518 = vmatmul.mubr.bf16.gmra.mxu0 %v334
    %v519 = vpop.f32.mrf.mxu0
    %v520 = vadd.f32 %v115, %v519
    %v521 = vpop.f32.mrf.mxu0
    %v522 = vpop.f32.mrf.mxu0
    %v523 = vadd.f32 %v115, %v522
    %v524 = vpop.f32.mrf.mxu0
    %525 = vmatprep.mubr.bf16.mxu0 0
    %526 = vmatmul.mubr.bf16.gmra.mxu0 %v337
    %v527 = vpop.f32.mrf.mxu0
    %v528 = vadd.f32 %v115, %v527
    %v529 = vpop.f32.mrf.mxu0
    %v530 = vpop.f32.mrf.mxu0
    %v531 = vadd.f32 %v115, %v530
    %v532 = vpop.f32.mrf.mxu0
    %533 = vmatprep.mubr.bf16.mxu0 0
    %534 = vmatmul.mubr.bf16.gmra.mxu0 %v340
    %v535 = vpop.f32.mrf.mxu0
    %v536 = vadd.f32 %v115, %v535
    %v537 = vpop.f32.mrf.mxu0
    %v538 = vpop.f32.mrf.mxu0
    %v539 = vadd.f32 %v115, %v538
    %v540 = vpop.f32.mrf.mxu0
    %541 = vmatprep.mubr.bf16.mxu0 0
    %542 = vmatmul.mubr.bf16.gmra.mxu0 %v343
    %v543 = vpop.f32.mrf.mxu0
    %v544 = vadd.f32 %v115, %v543
    %v545 = vpop.f32.mrf.mxu0
    %v546 = vpop.f32.mrf.mxu0
    %v547 = vadd.f32 %v115, %v546
    %v548 = vpop.f32.mrf.mxu0
    %549 = vmatprep.mubr.bf16.mxu0 0
    %550 = vmatmul.mubr.bf16.gmra.mxu0 %v346
    %v551 = vpop.f32.mrf.mxu0
    %v552 = vadd.f32 %v115, %v551
    %v553 = vpop.f32.mrf.mxu0
    %v554 = vpop.f32.mrf.mxu0
    %v555 = vadd.f32 %v115, %v554
    %v556 = vpop.f32.mrf.mxu0
    %557 = vmatprep.mubr.bf16.mxu0 0
    %558 = vmatmul.mubr.bf16.gmra.mxu0 %v349
    %v559 = vpop.f32.mrf.mxu0
    %v560 = vadd.f32 %v115, %v559
    %v561 = vpop.f32.mrf.mxu0
    %v562 = vpop.f32.mrf.mxu0
    %v563 = vadd.f32 %v115, %v562
    %v564 = vpop.f32.mrf.mxu0
    %565 = vmatprep.mubr.bf16.mxu0 0
    %566 = vmatmul.mubr.bf16.gmra.mxu0 %v352
    %v567 = vpop.f32.mrf.mxu0
    %v568 = vadd.f32 %v115, %v567
    %v569 = vpop.f32.mrf.mxu0
    %v570 = vpop.f32.mrf.mxu0
    %v571 = vadd.f32 %v115, %v570
    %v572 = vpop.f32.mrf.mxu0
    %573 = vmatprep.mubr.bf16.mxu0 0
    %574 = vmatmul.mubr.bf16.gmra.mxu0 %v355
    %v575 = vpop.f32.mrf.mxu0
    %v576 = vadd.f32 %v115, %v575
    %v577 = vpop.f32.mrf.mxu0
    %v578 = vpop.f32.mrf.mxu0
    %v579 = vadd.f32 %v115, %v578
    %v580 = vpop.f32.mrf.mxu0
    %581 = vmatprep.mubr.bf16.mxu0 0
    %582 = vmatmul.mubr.bf16.gmra.mxu0 %v358
    %v583 = vpop.f32.mrf.mxu0
    %v584 = vadd.f32 %v115, %v583
    %v585 = vpop.f32.mrf.mxu0
    %v586 = vpop.f32.mrf.mxu0
    %v587 = vadd.f32 %v115, %v586
    %v588 = vpop.f32.mrf.mxu0
    %589 = vmatprep.mubr.bf16.mxu0 0
    %590 = vmatmul.mubr.bf16.gmra.mxu0 %v361
    %v591 = vpop.f32.mrf.mxu0
    %v592 = vadd.f32 %v115, %v591
    %v593 = vpop.f32.mrf.mxu0
    %v594 = vpop.f32.mrf.mxu0
    %v595 = vadd.f32 %v115, %v594
    %v596 = vpop.f32.mrf.mxu0
    %597 = vmatprep.mubr.bf16.mxu0 0
    %598 = vmatmul.mubr.bf16.gmra.mxu0 %v364
    %v599 = vpop.f32.mrf.mxu0
    %v600 = vadd.f32 %v115, %v599
    %v601 = vpop.f32.mrf.mxu0
    %v602 = vpop.f32.mrf.mxu0
    %v603 = vadd.f32 %v115, %v602
    %v604 = vpop.f32.mrf.mxu0
    %605 = vmatprep.mubr.bf16.mxu0 0
    %606 = vmatmul.mubr.bf16.gmra.mxu0 %v367
    %v607 = vpop.f32.mrf.mxu0
    %v608 = vadd.f32 %v115, %v607
    %v609 = vpop.f32.mrf.mxu0
    %v610 = vpop.f32.mrf.mxu0
    %v611 = vadd.f32 %v115, %v610
    %v612 = vpop.f32.mrf.mxu0
    %613 = vmatprep.mubr.bf16.mxu0 0
    %614 = vmatmul.mubr.bf16.gmra.mxu0 %v370
    %v615 = vpop.f32.mrf.mxu0
    %v616 = vadd.f32 %v115, %v615
    %v617 = vpop.f32.mrf.mxu0
    %v618 = vpop.f32.mrf.mxu0
    %v619 = vadd.f32 %v115, %v618
    %v620 = vpop.f32.mrf.mxu0
    %621 = vmatprep.mubr.bf16.mxu0 0
    %622 = vmatmul.mubr.bf16.gmra.mxu0 %v373
    %v623 = vpop.f32.mrf.mxu0
    %v624 = vadd.f32 %v115, %v623
    %v625 = vpop.f32.mrf.mxu0
    %v626 = vpop.f32.mrf.mxu0
    %v627 = vadd.f32 %v115, %v626
    %v628 = vpop.f32.mrf.mxu0
    %629 = vmatprep.mubr.bf16.mxu0 0
    %630 = vmatmul.mubr.bf16.gmra.mxu0 %v376
    %v631 = vpop.f32.mrf.mxu0
    %v632 = vadd.f32 %v115, %v631
    %v633 = vpop.f32.mrf.mxu0
    %v634 = vpop.f32.mrf.mxu0
    %v635 = vadd.f32 %v115, %v634
    %v636 = vpop.f32.mrf.mxu0
    %637 = vmatprep.mubr.bf16.mxu0 0
    %638 = vmatmul.mubr.bf16.gmra.mxu0 %v379
    %v639 = vpop.f32.mrf.mxu0
    %v640 = vadd.f32 %v115, %v639
    %v641 = vpop.f32.mrf.mxu0
    %v642 = vpop.f32.mrf.mxu0
    %v643 = vadd.f32 %v115, %v642
    %v644 = vpop.f32.mrf.mxu0
    %645 = vmatprep.mubr.bf16.mxu0 0
    %646 = vmatmul.mubr.bf16.gmra.mxu0 %v382
    %v647 = vpop.f32.mrf.mxu0
    %v648 = vadd.f32 %v115, %v647
    %v649 = vpop.f32.mrf.mxu0
    %v650 = vpop.f32.mrf.mxu0
    %v651 = vadd.f32 %v115, %v650
    %v652 = vpop.f32.mrf.mxu0
    %653 = vmatprep.mubr.bf16.mxu0 0
    %654 = vmatmul.mubr.bf16.gmra.mxu0 %v385
    %v655 = vpop.f32.mrf.mxu0
    %v656 = vadd.f32 %v115, %v655
    %v657 = vpop.f32.mrf.mxu0
    %v658 = vpop.f32.mrf.mxu0
    %v659 = vadd.f32 %v115, %v658
    %v660 = vpop.f32.mrf.mxu0
    %661 = vmatprep.mubr.bf16.mxu0 0
    %662 = vmatmul.mubr.bf16.gmra.mxu0 %v388
    %v663 = vpop.f32.mrf.mxu0
    %v664 = vadd.f32 %v115, %v663
    %v665 = vpop.f32.mrf.mxu0
    %v666 = vpop.f32.mrf.mxu0
    %v667 = vadd.f32 %v115, %v666
    %v668 = vpop.f32.mrf.mxu0
    %669 = vmatprep.mubr.bf16.mxu0 0
    %670 = vmatmul.mubr.bf16.gmra.mxu0 %v391
    %v671 = vpop.f32.mrf.mxu0
    %v672 = vadd.f32 %v115, %v671
    %v673 = vpop.f32.mrf.mxu0
    %v674 = vpop.f32.mrf.mxu0
    %v675 = vadd.f32 %v115, %v674
    %v676 = vpop.f32.mrf.mxu0
    %677 = vmatprep.mubr.bf16.mxu0 0
    %678 = vmatmul.mubr.bf16.gmra.mxu0 %v394
    %v679 = vpop.f32.mrf.mxu0
    %v680 = vadd.f32 %v115, %v679
    %v681 = vpop.f32.mrf.mxu0
    %v682 = vpop.f32.mrf.mxu0
    %v683 = vadd.f32 %v115, %v682
    %v684 = vpop.f32.mrf.mxu0
    %685 = vmatprep.mubr.bf16.mxu0 0
    %686 = vmatmul.mubr.bf16.gmra.mxu0 %v397
    %v687 = vpop.f32.mrf.mxu0
    %v688 = vadd.f32 %v115, %v687
    %v689 = vpop.f32.mrf.mxu0
    %v690 = vpop.f32.mrf.mxu0
    %v691 = vadd.f32 %v115, %v690
    %v692 = vpop.f32.mrf.mxu0
    %693 = vmatprep.mubr.bf16.mxu0 0
    %694 = vmatmul.mubr.bf16.gmra.mxu0 %v400
    %v695 = vpop.f32.mrf.mxu0
    %v696 = vadd.f32 %v115, %v695
    %v697 = vpop.f32.mrf.mxu0
    %v698 = vpop.f32.mrf.mxu0
    %v699 = vadd.f32 %v115, %v698
    %v700 = vpop.f32.mrf.mxu0
    %701 = vmatprep.mubr.bf16.mxu0 0
    %702 = vmatmul.mubr.bf16.gmra.mxu0 %v403
    %v703 = vpop.f32.mrf.mxu0
    %v704 = vadd.f32 %v115, %v703
    %v705 = vpop.f32.mrf.mxu0
    %v706 = vpop.f32.mrf.mxu0
    %v707 = vadd.f32 %v115, %v706
    %v708 = vpop.f32.mrf.mxu0
    %709 = vmatprep.mubr.bf16.mxu0 0
    %710 = vmatmul.mubr.bf16.gmra.mxu0 %v406
    %v711 = vpop.f32.mrf.mxu0
    %v712 = vadd.f32 %v115, %v711
    %v713 = vpop.f32.mrf.mxu0
    %v714 = vpop.f32.mrf.mxu0
    %v715 = vadd.f32 %v115, %v714
    %v716 = vpop.f32.mrf.mxu0
    %717 = vmatprep.mubr.bf16.mxu0 0
    %718 = vmatmul.mubr.bf16.gmra.mxu0 %v409
    %v719 = vpop.f32.mrf.mxu0
    %v720 = vadd.f32 %v115, %v719
    %v721 = vpop.f32.mrf.mxu0
    %v722 = vpop.f32.mrf.mxu0
    %v723 = vadd.f32 %v115, %v722
    %v724 = vpop.f32.mrf.mxu0
    %725 = vmatprep.mubr.bf16.mxu0 0
    %726 = vmatmul.mubr.bf16.gmra.mxu0 %v412
    %v727 = vpop.f32.mrf.mxu0
    %v728 = vadd.f32 %v115, %v727
    %v729 = vpop.f32.mrf.mxu0
    %v730 = vpop.f32.mrf.mxu0
    %v731 = vadd.f32 %v115, %v730
    %v732 = vpop.f32.mrf.mxu0
    %733 = vmatprep.mubr.bf16.mxu0 0
    %734 = vmatmul.mubr.bf16.gmra.mxu0 %v415
    %v735 = vpop.f32.mrf.mxu0
    %v736 = vadd.f32 %v115, %v735
    %v737 = vpop.f32.mrf.mxu0
    %v738 = vpop.f32.mrf.mxu0
    %v739 = vadd.f32 %v115, %v738
    %v740 = vpop.f32.mrf.mxu0
    %741 = vdwg.mxu0
    %v742 = vmax.f32 %v456, 0.0
    %v743 = vmax.f32 %v459, 0.0
    %v744 = vmax.f32 %v464, 0.0
    %v745 = vmax.f32 %v467, 0.0
    %v746 = vmax.f32 %v472, 0.0
    %v747 = vmax.f32 %v475, 0.0
    %v748 = vmax.f32 %v480, 0.0
    %v749 = vmax.f32 %v483, 0.0
    %v750 = vmax.f32 %v488, 0.0
    %v751 = vmax.f32 %v491, 0.0
    %v752 = vmax.f32 %v496, 0.0
    %v753 = vmax.f32 %v499, 0.0
    %v754 = vmax.f32 %v504, 0.0
    %v755 = vmax.f32 %v507, 0.0
    %v756 = vmax.f32 %v512, 0.0
    %v757 = vmax.f32 %v515, 0.0
    %v758 = vmax.f32 %v520, 0.0
    %v759 = vmax.f32 %v523, 0.0
    %v760 = vmax.f32 %v528, 0.0
    %v761 = vmax.f32 %v531, 0.0
    %v762 = vmax.f32 %v536, 0.0
    %v763 = vmax.f32 %v539, 0.0
    %v764 = vmax.f32 %v544, 0.0
    %v765 = vmax.f32 %v547, 0.0
    %v766 = vmax.f32 %v552, 0.0
    %v767 = vmax.f32 %v555, 0.0
    %v768 = vmax.f32 %v560, 0.0
    %v769 = vmax.f32 %v563, 0.0
    %v770 = vmax.f32 %v568, 0.0
    %v771 = vmax.f32 %v571, 0.0
    %v772 = vmax.f32 %v576, 0.0
    %v773 = vmax.f32 %v579, 0.0
    %v774 = vmax.f32 %v584, 0.0
    %v775 = vmax.f32 %v587, 0.0
    %v776 = vmax.f32 %v592, 0.0
    %v777 = vmax.f32 %v595, 0.0
    %v778 = vmax.f32 %v600, 0.0
    %v779 = vmax.f32 %v603, 0.0
    %v780 = vmax.f32 %v608, 0.0
    %v781 = vmax.f32 %v611, 0.0
    %v782 = vmax.f32 %v616, 0.0
    %v783 = vmax.f32 %v619, 0.0
    %v784 = vmax.f32 %v624, 0.0
    %v785 = vmax.f32 %v627, 0.0
    %v786 = vmax.f32 %v632, 0.0
    %v787 = vmax.f32 %v635, 0.0
    %v788 = vmax.f32 %v640, 0.0
    %v789 = vmax.f32 %v643, 0.0
    %v790 = vmax.f32 %v648, 0.0
    %v791 = vmax.f32 %v651, 0.0
    %v792 = vmax.f32 %v656, 0.0
    %v793 = vmax.f32 %v659, 0.0
    %v794 = vmax.f32 %v664, 0.0
    %v795 = vmax.f32 %v667, 0.0
    %v796 = vmax.f32 %v672, 0.0
    %v797 = vmax.f32 %v675, 0.0
    %v798 = vmax.f32 %v680, 0.0
    %v799 = vmax.f32 %v683, 0.0
    %v800 = vmax.f32 %v688, 0.0
    %v801 = vmax.f32 %v691, 0.0
    %v802 = vmax.f32 %v696, 0.0
    %v803 = vmax.f32 %v699, 0.0
    %v804 = vmax.f32 %v704, 0.0
    %v805 = vmax.f32 %v707, 0.0
    %v806 = vmax.f32 %v712, 0.0
    %v807 = vmax.f32 %v715, 0.0
    %v808 = vmax.f32 %v720, 0.0
    %v809 = vmax.f32 %v723, 0.0
    %v810 = vmax.f32 %v728, 0.0
    %v811 = vmax.f32 %v731, 0.0
    %v812 = vmax.f32 %v736, 0.0
    %v813 = vmax.f32 %v739, 0.0
    %vm886 = vcmask 1046528
    %v887 = vrot.slane %v742, 1
    %v888 = vrot.slane %v743, 1
    %v889 = vsel %vm886, %v887, %v888
    %v890 = vrot.slane %v744, 1
    %v891 = vsel %vm886, %v888, %v890
    %v892 = vrot.slane %v745, 1
    %v893 = vsel %vm886, %v890, %v892
    %v894 = vrot.slane %v746, 1
    %v895 = vsel %vm886, %v892, %v894
    %v896 = vrot.slane %v747, 1
    %v897 = vsel %vm886, %v894, %v896
    %v898 = vrot.slane %v748, 1
    %v899 = vsel %vm886, %v896, %v898
    %v900 = vrot.slane %v749, 1
    %v901 = vsel %vm886, %v898, %v900
    %v902 = vrot.slane %v750, 1
    %v903 = vsel %vm886, %v900, %v902
    %v904 = vrot.slane %v751, 1
    %v905 = vrot.slane %v752, 1
    %v906 = vsel %vm886, %v904, %v905
    %v907 = vrot.slane %v753, 1
    %v908 = vsel %vm886, %v905, %v907
    %v909 = vrot.slane %v754, 1
    %v910 = vsel %vm886, %v907, %v909
    %v911 = vrot.slane %v755, 1
    %v912 = vsel %vm886, %v909, %v911
    %v913 = vrot.slane %v756, 1
    %v914 = vsel %vm886, %v911, %v913
    %v915 = vrot.slane %v757, 1
    %v916 = vsel %vm886, %v913, %v915
    %v917 = vrot.slane %v758, 1
    %v918 = vsel %vm886, %v915, %v917
    %v919 = vrot.slane %v759, 1
    %v920 = vsel %vm886, %v917, %v919
    %v921 = vrot.slane %v760, 1
    %v922 = vrot.slane %v761, 1
    %v923 = vsel %vm886, %v921, %v922
    %v924 = vrot.slane %v762, 1
    %v925 = vsel %vm886, %v922, %v924
    %v926 = vrot.slane %v763, 1
    %v927 = vsel %vm886, %v924, %v926
    %v928 = vrot.slane %v764, 1
    %v929 = vsel %vm886, %v926, %v928
    %v930 = vrot.slane %v765, 1
    %v931 = vsel %vm886, %v928, %v930
    %v932 = vrot.slane %v766, 1
    %v933 = vsel %vm886, %v930, %v932
    %v934 = vrot.slane %v767, 1
    %v935 = vsel %vm886, %v932, %v934
    %v936 = vrot.slane %v768, 1
    %v937 = vsel %vm886, %v934, %v936
    %v938 = vrot.slane %v769, 1
    %v939 = vrot.slane %v770, 1
    %v940 = vsel %vm886, %v938, %v939
    %v941 = vrot.slane %v771, 1
    %v942 = vsel %vm886, %v939, %v941
    %v943 = vrot.slane %v772, 1
    %v944 = vsel %vm886, %v941, %v943
    %v945 = vrot.slane %v773, 1
    %v946 = vsel %vm886, %v943, %v945
    %v947 = vrot.slane %v774, 1
    %v948 = vsel %vm886, %v945, %v947
    %v949 = vrot.slane %v775, 1
    %v950 = vsel %vm886, %v947, %v949
    %v951 = vrot.slane %v776, 1
    %v952 = vsel %vm886, %v949, %v951
    %v953 = vrot.slane %v777, 1
    %v954 = vsel %vm886, %v951, %v953
    %v955 = vrot.slane %v778, 1
    %v956 = vrot.slane %v779, 1
    %v957 = vsel %vm886, %v955, %v956
    %v958 = vrot.slane %v780, 1
    %v959 = vsel %vm886, %v956, %v958
    %v960 = vrot.slane %v781, 1
    %v961 = vsel %vm886, %v958, %v960
    %v962 = vrot.slane %v782, 1
    %v963 = vsel %vm886, %v960, %v962
    %v964 = vrot.slane %v783, 1
    %v965 = vsel %vm886, %v962, %v964
    %v966 = vrot.slane %v784, 1
    %v967 = vsel %vm886, %v964, %v966
    %v968 = vrot.slane %v785, 1
    %v969 = vsel %vm886, %v966, %v968
    %v970 = vrot.slane %v786, 1
    %v971 = vsel %vm886, %v968, %v970
    %v972 = vrot.slane %v787, 1
    %v973 = vrot.slane %v788, 1
    %v974 = vsel %vm886, %v972, %v973
    %v975 = vrot.slane %v789, 1
    %v976 = vsel %vm886, %v973, %v975
    %v977 = vrot.slane %v790, 1
    %v978 = vsel %vm886, %v975, %v977
    %v979 = vrot.slane %v791, 1
    %v980 = vsel %vm886, %v977, %v979
    %v981 = vrot.slane %v792, 1
    %v982 = vsel %vm886, %v979, %v981
    %v983 = vrot.slane %v793, 1
    %v984 = vsel %vm886, %v981, %v983
    %v985 = vrot.slane %v794, 1
    %v986 = vsel %vm886, %v983, %v985
    %v987 = vrot.slane %v795, 1
    %v988 = vsel %vm886, %v985, %v987
    %v989 = vrot.slane %v796, 1
    %v990 = vrot.slane %v797, 1
    %v991 = vsel %vm886, %v989, %v990
    %v992 = vrot.slane %v798, 1
    %v993 = vsel %vm886, %v990, %v992
    %v994 = vrot.slane %v799, 1
    %v995 = vsel %vm886, %v992, %v994
    %v996 = vrot.slane %v800, 1
    %v997 = vsel %vm886, %v994, %v996
    %v998 = vrot.slane %v801, 1
    %v999 = vsel %vm886, %v996, %v998
    %v1000 = vrot.slane %v802, 1
    %v1001 = vsel %vm886, %v998, %v1000
    %v1002 = vrot.slane %v803, 1
    %v1003 = vsel %vm886, %v1000, %v1002
    %v1004 = vrot.slane %v804, 1
    %v1005 = vsel %vm886, %v1002, %v1004
    %v1006 = vrot.slane %v805, 1
    %v1007 = vrot.slane %v806, 1
    %v1008 = vsel %vm886, %v1006, %v1007
    %v1009 = vrot.slane %v807, 1
    %v1010 = vsel %vm886, %v1007, %v1009
    %v1011 = vrot.slane %v808, 1
    %v1012 = vsel %vm886, %v1009, %v1011
    %v1013 = vrot.slane %v809, 1
    %v1014 = vsel %vm886, %v1011, %v1013
    %v1015 = vrot.slane %v810, 1
    %v1016 = vsel %vm886, %v1013, %v1015
    %v1017 = vrot.slane %v811, 1
    %v1018 = vsel %vm886, %v1015, %v1017
    %v1019 = vrot.slane %v812, 1
    %v1020 = vsel %vm886, %v1017, %v1019
    %v1021 = vrot.slane %v813, 1
    %v1022 = vsel %vm886, %v1019, %v1021
    %v1087 = vmax.f32 %v742, %v889
    %v1088 = vmax.f32 %v743, %v891
    %v1089 = vmax.f32 %v744, %v893
    %v1090 = vmax.f32 %v745, %v895
    %v1091 = vmax.f32 %v746, %v897
    %v1092 = vmax.f32 %v747, %v899
    %v1093 = vmax.f32 %v748, %v901
    %v1094 = vmax.f32 %v749, %v903
    %v1095 = vmax.f32 %v751, %v906
    %v1096 = vmax.f32 %v752, %v908
    %v1097 = vmax.f32 %v753, %v910
    %v1098 = vmax.f32 %v754, %v912
    %v1099 = vmax.f32 %v755, %v914
    %v1100 = vmax.f32 %v756, %v916
    %v1101 = vmax.f32 %v757, %v918
    %v1102 = vmax.f32 %v758, %v920
    %v1103 = vmax.f32 %v760, %v923
    %v1104 = vmax.f32 %v761, %v925
    %v1105 = vmax.f32 %v762, %v927
    %v1106 = vmax.f32 %v763, %v929
    %v1107 = vmax.f32 %v764, %v931
    %v1108 = vmax.f32 %v765, %v933
    %v1109 = vmax.f32 %v766, %v935
    %v1110 = vmax.f32 %v767, %v937
    %v1111 = vmax.f32 %v769, %v940
    %v1112 = vmax.f32 %v770, %v942
    %v1113 = vmax.f32 %v771, %v944
    %v1114 = vmax.f32 %v772, %v946
    %v1115 = vmax.f32 %v773, %v948
    %v1116 = vmax.f32 %v774, %v950
    %v1117 = vmax.f32 %v775, %v952
    %v1118 = vmax.f32 %v776, %v954
    %v1119 = vmax.f32 %v778, %v957
    %v1120 = vmax.f32 %v779, %v959
    %v1121 = vmax.f32 %v780, %v961
    %v1122 = vmax.f32 %v781, %v963
    %v1123 = vmax.f32 %v782, %v965
    %v1124 = vmax.f32 %v783, %v967
    %v1125 = vmax.f32 %v784, %v969
    %v1126 = vmax.f32 %v785, %v971
    %v1127 = vmax.f32 %v787, %v974
    %v1128 = vmax.f32 %v788, %v976
    %v1129 = vmax.f32 %v789, %v978
    %v1130 = vmax.f32 %v790, %v980
    %v1131 = vmax.f32 %v791, %v982
    %v1132 = vmax.f32 %v792, %v984
    %v1133 = vmax.f32 %v793, %v986
    %v1134 = vmax.f32 %v794, %v988
    %v1135 = vmax.f32 %v796, %v991
    %v1136 = vmax.f32 %v797, %v993
    %v1137 = vmax.f32 %v798, %v995
    %v1138 = vmax.f32 %v799, %v997
    %v1139 = vmax.f32 %v800, %v999
    %v1140 = vmax.f32 %v801, %v1001
    %v1141 = vmax.f32 %v802, %v1003
    %v1142 = vmax.f32 %v803, %v1005
    %v1143 = vmax.f32 %v805, %v1008
    %v1144 = vmax.f32 %v806, %v1010
    %v1145 = vmax.f32 %v807, %v1012
    %v1146 = vmax.f32 %v808, %v1014
    %v1147 = vmax.f32 %v809, %v1016
    %v1148 = vmax.f32 %v810, %v1018
    %v1149 = vmax.f32 %v811, %v1020
    %v1150 = vmax.f32 %v812, %v1022
    %v1215 = vrot.slane %v1087, 2
    %v1216 = vrot.slane %v1088, 2
    %v1217 = vsel %vm417, %v1215, %v1216
    %v1218 = vrot.slane %v1089, 2
    %v1219 = vsel %vm417, %v1216, %v1218
    %v1220 = vrot.slane %v1090, 2
    %v1221 = vsel %vm417, %v1218, %v1220
    %v1222 = vrot.slane %v1091, 2
    %v1223 = vsel %vm417, %v1220, %v1222
    %v1224 = vrot.slane %v1092, 2
    %v1225 = vsel %vm417, %v1222, %v1224
    %v1226 = vrot.slane %v1093, 2
    %v1227 = vsel %vm417, %v1224, %v1226
    %v1228 = vrot.slane %v1094, 2
    %v1229 = vsel %vm417, %v1226, %v1228
    %v1230 = vrot.slane %v1095, 2
    %v1231 = vrot.slane %v1096, 2
    %v1232 = vsel %vm417, %v1230, %v1231
    %v1233 = vrot.slane %v1097, 2
    %v1234 = vsel %vm417, %v1231, %v1233
    %v1235 = vrot.slane %v1098, 2
    %v1236 = vsel %vm417, %v1233, %v1235
    %v1237 = vrot.slane %v1099, 2
    %v1238 = vsel %vm417, %v1235, %v1237
    %v1239 = vrot.slane %v1100, 2
    %v1240 = vsel %vm417, %v1237, %v1239
    %v1241 = vrot.slane %v1101, 2
    %v1242 = vsel %vm417, %v1239, %v1241
    %v1243 = vrot.slane %v1102, 2
    %v1244 = vsel %vm417, %v1241, %v1243
    %v1245 = vrot.slane %v1103, 2
    %v1246 = vrot.slane %v1104, 2
    %v1247 = vsel %vm417, %v1245, %v1246
    %v1248 = vrot.slane %v1105, 2
    %v1249 = vsel %vm417, %v1246, %v1248
    %v1250 = vrot.slane %v1106, 2
    %v1251 = vsel %vm417, %v1248, %v1250
    %v1252 = vrot.slane %v1107, 2
    %v1253 = vsel %vm417, %v1250, %v1252
    %v1254 = vrot.slane %v1108, 2
    %v1255 = vsel %vm417, %v1252, %v1254
    %v1256 = vrot.slane %v1109, 2
    %v1257 = vsel %vm417, %v1254, %v1256
    %v1258 = vrot.slane %v1110, 2
    %v1259 = vsel %vm417, %v1256, %v1258
    %v1260 = vrot.slane %v1111, 2
    %v1261 = vrot.slane %v1112, 2
    %v1262 = vsel %vm417, %v1260, %v1261
    %v1263 = vrot.slane %v1113, 2
    %v1264 = vsel %vm417, %v1261, %v1263
    %v1265 = vrot.slane %v1114, 2
    %v1266 = vsel %vm417, %v1263, %v1265
    %v1267 = vrot.slane %v1115, 2
    %v1268 = vsel %vm417, %v1265, %v1267
    %v1269 = vrot.slane %v1116, 2
    %v1270 = vsel %vm417, %v1267, %v1269
    %v1271 = vrot.slane %v1117, 2
    %v1272 = vsel %vm417, %v1269, %v1271
    %v1273 = vrot.slane %v1118, 2
    %v1274 = vsel %vm417, %v1271, %v1273
    %v1275 = vrot.slane %v1119, 2
    %v1276 = vrot.slane %v1120, 2
    %v1277 = vsel %vm417, %v1275, %v1276
    %v1278 = vrot.slane %v1121, 2
    %v1279 = vsel %vm417, %v1276, %v1278
    %v1280 = vrot.slane %v1122, 2
    %v1281 = vsel %vm417, %v1278, %v1280
    %v1282 = vrot.slane %v1123, 2
    %v1283 = vsel %vm417, %v1280, %v1282
    %v1284 = vrot.slane %v1124, 2
    %v1285 = vsel %vm417, %v1282, %v1284
    %v1286 = vrot.slane %v1125, 2
    %v1287 = vsel %vm417, %v1284, %v1286
    %v1288 = vrot.slane %v1126, 2
    %v1289 = vsel %vm417, %v1286, %v1288
    %v1290 = vrot.slane %v1127, 2
    %v1291 = vrot.slane %v1128, 2
    %v1292 = vsel %vm417, %v1290, %v1291
    %v1293 = vrot.slane %v1129, 2
    %v1294 = vsel %vm417, %v1291, %v1293
    %v1295 = vrot.slane %v1130, 2
    %v1296 = vsel %vm417, %v1293, %v1295
    %v1297 = vrot.slane %v1131, 2
    %v1298 = vsel %vm417, %v1295, %v1297
    %v1299 = vrot.slane %v1132, 2
    %v1300 = vsel %vm417, %v1297, %v1299
    %v1301 = vrot.slane %v1133, 2
    %v1302 = vsel %vm417, %v1299, %v1301
    %v1303 = vrot.slane %v1134, 2
    %v1304 = vsel %vm417, %v1301, %v1303
    %v1305 = vrot.slane %v1135, 2
    %v1306 = vrot.slane %v1136, 2
    %v1307 = vsel %vm417, %v1305, %v1306
    %v1308 = vrot.slane %v1137, 2
    %v1309 = vsel %vm417, %v1306, %v1308
    %v1310 = vrot.slane %v1138, 2
    %v1311 = vsel %vm417, %v1308, %v1310
    %v1312 = vrot.slane %v1139, 2
    %v1313 = vsel %vm417, %v1310, %v1312
    %v1314 = vrot.slane %v1140, 2
    %v1315 = vsel %vm417, %v1312, %v1314
    %v1316 = vrot.slane %v1141, 2
    %v1317 = vsel %vm417, %v1314, %v1316
    %v1318 = vrot.slane %v1142, 2
    %v1319 = vsel %vm417, %v1316, %v1318
    %v1320 = vrot.slane %v1143, 2
    %v1321 = vrot.slane %v1144, 2
    %v1322 = vsel %vm417, %v1320, %v1321
    %v1323 = vrot.slane %v1145, 2
    %v1324 = vsel %vm417, %v1321, %v1323
    %v1325 = vrot.slane %v1146, 2
    %v1326 = vsel %vm417, %v1323, %v1325
    %v1327 = vrot.slane %v1147, 2
    %v1328 = vsel %vm417, %v1325, %v1327
    %v1329 = vrot.slane %v1148, 2
    %v1330 = vsel %vm417, %v1327, %v1329
    %v1331 = vrot.slane %v1149, 2
    %v1332 = vsel %vm417, %v1329, %v1331
    %v1333 = vrot.slane %v1150, 2
    %v1334 = vsel %vm417, %v1331, %v1333
    %1335 = vrot.lane.b32.xlu0 %v1217, 32
    %v1336 = vpop.permute.xlu0 %1335
    %1337 = vrot.lane.b32.xlu0 %v1219, 32
    %v1338 = vpop.permute.xlu0 %1337
    %1339 = vrot.lane.b32.xlu0 %v1221, 32
    %v1340 = vpop.permute.xlu0 %1339
    %1341 = vrot.lane.b32.xlu0 %v1223, 32
    %v1342 = vpop.permute.xlu0 %1341
    %1343 = vrot.lane.b32.xlu0 %v1225, 32
    %v1344 = vpop.permute.xlu0 %1343
    %1345 = vrot.lane.b32.xlu0 %v1227, 32
    %v1346 = vpop.permute.xlu0 %1345
    %1347 = vrot.lane.b32.xlu0 %v1229, 32
    %v1348 = vpop.permute.xlu0 %1347
    %1349 = vrot.lane.b32.xlu0 %v1232, 32
    %v1350 = vpop.permute.xlu0 %1349
    %1351 = vrot.lane.b32.xlu0 %v1234, 32
    %v1352 = vpop.permute.xlu0 %1351
    %1353 = vrot.lane.b32.xlu0 %v1236, 32
    %v1354 = vpop.permute.xlu0 %1353
    %1355 = vrot.lane.b32.xlu0 %v1238, 32
    %v1356 = vpop.permute.xlu0 %1355
    %1357 = vrot.lane.b32.xlu0 %v1240, 32
    %v1358 = vpop.permute.xlu0 %1357
    %1359 = vrot.lane.b32.xlu0 %v1242, 32
    %v1360 = vpop.permute.xlu0 %1359
    %1361 = vrot.lane.b32.xlu0 %v1244, 32
    %v1362 = vpop.permute.xlu0 %1361
    %1363 = vrot.lane.b32.xlu0 %v1247, 32
    %v1364 = vpop.permute.xlu0 %1363
    %1365 = vrot.lane.b32.xlu0 %v1249, 32
    %v1366 = vpop.permute.xlu0 %1365
    %1367 = vrot.lane.b32.xlu0 %v1251, 32
    %v1368 = vpop.permute.xlu0 %1367
    %1369 = vrot.lane.b32.xlu0 %v1253, 32
    %v1370 = vpop.permute.xlu0 %1369
    %1371 = vrot.lane.b32.xlu0 %v1255, 32
    %v1372 = vpop.permute.xlu0 %1371
    %1373 = vrot.lane.b32.xlu0 %v1257, 32
    %v1374 = vpop.permute.xlu0 %1373
    %1375 = vrot.lane.b32.xlu0 %v1259, 32
    %v1376 = vpop.permute.xlu0 %1375
    %1377 = vrot.lane.b32.xlu0 %v1262, 32
    %v1378 = vpop.permute.xlu0 %1377
    %1379 = vrot.lane.b32.xlu0 %v1264, 32
    %v1380 = vpop.permute.xlu0 %1379
    %1381 = vrot.lane.b32.xlu0 %v1266, 32
    %v1382 = vpop.permute.xlu0 %1381
    %1383 = vrot.lane.b32.xlu0 %v1268, 32
    %v1384 = vpop.permute.xlu0 %1383
    %1385 = vrot.lane.b32.xlu0 %v1270, 32
    %v1386 = vpop.permute.xlu0 %1385
    %1387 = vrot.lane.b32.xlu0 %v1272, 32
    %v1388 = vpop.permute.xlu0 %1387
    %1389 = vrot.lane.b32.xlu0 %v1274, 32
    %v1390 = vpop.permute.xlu0 %1389
    %1391 = vrot.lane.b32.xlu0 %v1277, 32
    %v1392 = vpop.permute.xlu0 %1391
    %1393 = vrot.lane.b32.xlu0 %v1279, 32
    %v1394 = vpop.permute.xlu0 %1393
    %1395 = vrot.lane.b32.xlu0 %v1281, 32
    %v1396 = vpop.permute.xlu0 %1395
    %1397 = vrot.lane.b32.xlu0 %v1283, 32
    %v1398 = vpop.permute.xlu0 %1397
    %1399 = vrot.lane.b32.xlu0 %v1285, 32
    %v1400 = vpop.permute.xlu0 %1399
    %1401 = vrot.lane.b32.xlu0 %v1287, 32
    %v1402 = vpop.permute.xlu0 %1401
    %1403 = vrot.lane.b32.xlu0 %v1289, 32
    %v1404 = vpop.permute.xlu0 %1403
    %1405 = vrot.lane.b32.xlu0 %v1292, 32
    %v1406 = vpop.permute.xlu0 %1405
    %1407 = vrot.lane.b32.xlu0 %v1294, 32
    %v1408 = vpop.permute.xlu0 %1407
    %1409 = vrot.lane.b32.xlu0 %v1296, 32
    %v1410 = vpop.permute.xlu0 %1409
    %1411 = vrot.lane.b32.xlu0 %v1298, 32
    %v1412 = vpop.permute.xlu0 %1411
    %1413 = vrot.lane.b32.xlu0 %v1300, 32
    %v1414 = vpop.permute.xlu0 %1413
    %1415 = vrot.lane.b32.xlu0 %v1302, 32
    %v1416 = vpop.permute.xlu0 %1415
    %1417 = vrot.lane.b32.xlu0 %v1304, 32
    %v1418 = vpop.permute.xlu0 %1417
    %1419 = vrot.lane.b32.xlu0 %v1307, 32
    %v1420 = vpop.permute.xlu0 %1419
    %1421 = vrot.lane.b32.xlu0 %v1309, 32
    %v1422 = vpop.permute.xlu0 %1421
    %1423 = vrot.lane.b32.xlu0 %v1311, 32
    %v1424 = vpop.permute.xlu0 %1423
    %1425 = vrot.lane.b32.xlu0 %v1313, 32
    %v1426 = vpop.permute.xlu0 %1425
    %1427 = vrot.lane.b32.xlu0 %v1315, 32
    %v1428 = vpop.permute.xlu0 %1427
    %1429 = vrot.lane.b32.xlu0 %v1317, 32
    %v1430 = vpop.permute.xlu0 %1429
    %1431 = vrot.lane.b32.xlu0 %v1319, 32
    %v1432 = vpop.permute.xlu0 %1431
    %1433 = vrot.lane.b32.xlu0 %v1322, 32
    %v1434 = vpop.permute.xlu0 %1433
    %1435 = vrot.lane.b32.xlu0 %v1324, 32
    %v1436 = vpop.permute.xlu0 %1435
    %1437 = vrot.lane.b32.xlu0 %v1326, 32
    %v1438 = vpop.permute.xlu0 %1437
    %1439 = vrot.lane.b32.xlu0 %v1328, 32
    %v1440 = vpop.permute.xlu0 %1439
    %1441 = vrot.lane.b32.xlu0 %v1330, 32
    %v1442 = vpop.permute.xlu0 %1441
    %1443 = vrot.lane.b32.xlu0 %v1332, 32
    %v1444 = vpop.permute.xlu0 %1443
    %1445 = vrot.lane.b32.xlu0 %v1334, 32
    %v1446 = vpop.permute.xlu0 %1445
    %vm1503 = vcmask 1043456
    %v1504 = vrot.slane %v1087, 4
    %v1505 = vrot.slane %v1088, 4
    %v1506 = vsel %vm1503, %v1504, %v1505
    %v1507 = vrot.slane %v1089, 4
    %v1508 = vsel %vm1503, %v1505, %v1507
    %v1509 = vrot.slane %v1090, 4
    %v1510 = vsel %vm1503, %v1507, %v1509
    %v1511 = vrot.slane %v1091, 4
    %v1512 = vsel %vm1503, %v1509, %v1511
    %v1513 = vrot.slane %v1092, 4
    %v1514 = vsel %vm1503, %v1511, %v1513
    %v1515 = vrot.slane %v1093, 4
    %v1516 = vsel %vm1503, %v1513, %v1515
    %v1517 = vrot.slane %v1094, 4
    %v1518 = vsel %vm1503, %v1515, %v1517
    %v1519 = vrot.slane %v1095, 4
    %v1520 = vrot.slane %v1096, 4
    %v1521 = vsel %vm1503, %v1519, %v1520
    %v1522 = vrot.slane %v1097, 4
    %v1523 = vsel %vm1503, %v1520, %v1522
    %v1524 = vrot.slane %v1098, 4
    %v1525 = vsel %vm1503, %v1522, %v1524
    %v1526 = vrot.slane %v1099, 4
    %v1527 = vsel %vm1503, %v1524, %v1526
    %v1528 = vrot.slane %v1100, 4
    %v1529 = vsel %vm1503, %v1526, %v1528
    %v1530 = vrot.slane %v1101, 4
    %v1531 = vsel %vm1503, %v1528, %v1530
    %v1532 = vrot.slane %v1102, 4
    %v1533 = vsel %vm1503, %v1530, %v1532
    %v1534 = vrot.slane %v1103, 4
    %v1535 = vrot.slane %v1104, 4
    %v1536 = vsel %vm1503, %v1534, %v1535
    %v1537 = vrot.slane %v1105, 4
    %v1538 = vsel %vm1503, %v1535, %v1537
    %v1539 = vrot.slane %v1106, 4
    %v1540 = vsel %vm1503, %v1537, %v1539
    %v1541 = vrot.slane %v1107, 4
    %v1542 = vsel %vm1503, %v1539, %v1541
    %v1543 = vrot.slane %v1108, 4
    %v1544 = vsel %vm1503, %v1541, %v1543
    %v1545 = vrot.slane %v1109, 4
    %v1546 = vsel %vm1503, %v1543, %v1545
    %v1547 = vrot.slane %v1110, 4
    %v1548 = vsel %vm1503, %v1545, %v1547
    %v1549 = vrot.slane %v1111, 4
    %v1550 = vrot.slane %v1112, 4
    %v1551 = vsel %vm1503, %v1549, %v1550
    %v1552 = vrot.slane %v1113, 4
    %v1553 = vsel %vm1503, %v1550, %v1552
    %v1554 = vrot.slane %v1114, 4
    %v1555 = vsel %vm1503, %v1552, %v1554
    %v1556 = vrot.slane %v1115, 4
    %v1557 = vsel %vm1503, %v1554, %v1556
    %v1558 = vrot.slane %v1116, 4
    %v1559 = vsel %vm1503, %v1556, %v1558
    %v1560 = vrot.slane %v1117, 4
    %v1561 = vsel %vm1503, %v1558, %v1560
    %v1562 = vrot.slane %v1118, 4
    %v1563 = vsel %vm1503, %v1560, %v1562
    %v1564 = vrot.slane %v1119, 4
    %v1565 = vrot.slane %v1120, 4
    %v1566 = vsel %vm1503, %v1564, %v1565
    %v1567 = vrot.slane %v1121, 4
    %v1568 = vsel %vm1503, %v1565, %v1567
    %v1569 = vrot.slane %v1122, 4
    %v1570 = vsel %vm1503, %v1567, %v1569
    %v1571 = vrot.slane %v1123, 4
    %v1572 = vsel %vm1503, %v1569, %v1571
    %v1573 = vrot.slane %v1124, 4
    %v1574 = vsel %vm1503, %v1571, %v1573
    %v1575 = vrot.slane %v1125, 4
    %v1576 = vsel %vm1503, %v1573, %v1575
    %v1577 = vrot.slane %v1126, 4
    %v1578 = vsel %vm1503, %v1575, %v1577
    %v1579 = vrot.slane %v1127, 4
    %v1580 = vrot.slane %v1128, 4
    %v1581 = vsel %vm1503, %v1579, %v1580
    %v1582 = vrot.slane %v1129, 4
    %v1583 = vsel %vm1503, %v1580, %v1582
    %v1584 = vrot.slane %v1130, 4
    %v1585 = vsel %vm1503, %v1582, %v1584
    %v1586 = vrot.slane %v1131, 4
    %v1587 = vsel %vm1503, %v1584, %v1586
    %v1588 = vrot.slane %v1132, 4
    %v1589 = vsel %vm1503, %v1586, %v1588
    %v1590 = vrot.slane %v1133, 4
    %v1591 = vsel %vm1503, %v1588, %v1590
    %v1592 = vrot.slane %v1134, 4
    %v1593 = vsel %vm1503, %v1590, %v1592
    %v1594 = vrot.slane %v1135, 4
    %v1595 = vrot.slane %v1136, 4
    %v1596 = vsel %vm1503, %v1594, %v1595
    %v1597 = vrot.slane %v1137, 4
    %v1598 = vsel %vm1503, %v1595, %v1597
    %v1599 = vrot.slane %v1138, 4
    %v1600 = vsel %vm1503, %v1597, %v1599
    %v1601 = vrot.slane %v1139, 4
    %v1602 = vsel %vm1503, %v1599, %v1601
    %v1603 = vrot.slane %v1140, 4
    %v1604 = vsel %vm1503, %v1601, %v1603
    %v1605 = vrot.slane %v1141, 4
    %v1606 = vsel %vm1503, %v1603, %v1605
    %v1607 = vrot.slane %v1142, 4
    %v1608 = vsel %vm1503, %v1605, %v1607
    %v1609 = vrot.slane %v1143, 4
    %v1610 = vrot.slane %v1144, 4
    %v1611 = vsel %vm1503, %v1609, %v1610
    %v1612 = vrot.slane %v1145, 4
    %v1613 = vsel %vm1503, %v1610, %v1612
    %v1614 = vrot.slane %v1146, 4
    %v1615 = vsel %vm1503, %v1612, %v1614
    %v1616 = vrot.slane %v1147, 4
    %v1617 = vsel %vm1503, %v1614, %v1616
    %v1618 = vrot.slane %v1148, 4
    %v1619 = vsel %vm1503, %v1616, %v1618
    %v1620 = vrot.slane %v1149, 4
    %v1621 = vsel %vm1503, %v1618, %v1620
    %v1622 = vrot.slane %v1150, 4
    %v1623 = vsel %vm1503, %v1620, %v1622
    %1624 = vrot.lane.b32.xlu0 %v1506, 64
    %v1625 = vpop.permute.xlu0 %1624
    %1626 = vrot.lane.b32.xlu0 %v1508, 64
    %v1627 = vpop.permute.xlu0 %1626
    %1628 = vrot.lane.b32.xlu0 %v1510, 64
    %v1629 = vpop.permute.xlu0 %1628
    %1630 = vrot.lane.b32.xlu0 %v1512, 64
    %v1631 = vpop.permute.xlu0 %1630
    %1632 = vrot.lane.b32.xlu0 %v1514, 64
    %v1633 = vpop.permute.xlu0 %1632
    %1634 = vrot.lane.b32.xlu0 %v1516, 64
    %v1635 = vpop.permute.xlu0 %1634
    %1636 = vrot.lane.b32.xlu0 %v1518, 64
    %v1637 = vpop.permute.xlu0 %1636
    %1638 = vrot.lane.b32.xlu0 %v1521, 64
    %v1639 = vpop.permute.xlu0 %1638
    %1640 = vrot.lane.b32.xlu0 %v1523, 64
    %v1641 = vpop.permute.xlu0 %1640
    %1642 = vrot.lane.b32.xlu0 %v1525, 64
    %v1643 = vpop.permute.xlu0 %1642
    %1644 = vrot.lane.b32.xlu0 %v1527, 64
    %v1645 = vpop.permute.xlu0 %1644
    %1646 = vrot.lane.b32.xlu0 %v1529, 64
    %v1647 = vpop.permute.xlu0 %1646
    %1648 = vrot.lane.b32.xlu0 %v1531, 64
    %v1649 = vpop.permute.xlu0 %1648
    %1650 = vrot.lane.b32.xlu0 %v1533, 64
    %v1651 = vpop.permute.xlu0 %1650
    %1652 = vrot.lane.b32.xlu0 %v1536, 64
    %v1653 = vpop.permute.xlu0 %1652
    %1654 = vrot.lane.b32.xlu0 %v1538, 64
    %v1655 = vpop.permute.xlu0 %1654
    %1656 = vrot.lane.b32.xlu0 %v1540, 64
    %v1657 = vpop.permute.xlu0 %1656
    %1658 = vrot.lane.b32.xlu0 %v1542, 64
    %v1659 = vpop.permute.xlu0 %1658
    %1660 = vrot.lane.b32.xlu0 %v1544, 64
    %v1661 = vpop.permute.xlu0 %1660
    %1662 = vrot.lane.b32.xlu0 %v1546, 64
    %v1663 = vpop.permute.xlu0 %1662
    %1664 = vrot.lane.b32.xlu0 %v1548, 64
    %v1665 = vpop.permute.xlu0 %1664
    %1666 = vrot.lane.b32.xlu0 %v1551, 64
    %v1667 = vpop.permute.xlu0 %1666
    %1668 = vrot.lane.b32.xlu0 %v1553, 64
    %v1669 = vpop.permute.xlu0 %1668
    %1670 = vrot.lane.b32.xlu0 %v1555, 64
    %v1671 = vpop.permute.xlu0 %1670
    %1672 = vrot.lane.b32.xlu0 %v1557, 64
    %v1673 = vpop.permute.xlu0 %1672
    %1674 = vrot.lane.b32.xlu0 %v1559, 64
    %v1675 = vpop.permute.xlu0 %1674
    %1676 = vrot.lane.b32.xlu0 %v1561, 64
    %v1677 = vpop.permute.xlu0 %1676
    %1678 = vrot.lane.b32.xlu0 %v1563, 64
    %v1679 = vpop.permute.xlu0 %1678
    %1680 = vrot.lane.b32.xlu0 %v1566, 64
    %v1681 = vpop.permute.xlu0 %1680
    %1682 = vrot.lane.b32.xlu0 %v1568, 64
    %v1683 = vpop.permute.xlu0 %1682
    %1684 = vrot.lane.b32.xlu0 %v1570, 64
    %v1685 = vpop.permute.xlu0 %1684
    %1686 = vrot.lane.b32.xlu0 %v1572, 64
    %v1687 = vpop.permute.xlu0 %1686
    %1688 = vrot.lane.b32.xlu0 %v1574, 64
    %v1689 = vpop.permute.xlu0 %1688
    %1690 = vrot.lane.b32.xlu0 %v1576, 64
    %v1691 = vpop.permute.xlu0 %1690
    %1692 = vrot.lane.b32.xlu0 %v1578, 64
    %v1693 = vpop.permute.xlu0 %1692
    %1694 = vrot.lane.b32.xlu0 %v1581, 64
    %v1695 = vpop.permute.xlu0 %1694
    %1696 = vrot.lane.b32.xlu0 %v1583, 64
    %v1697 = vpop.permute.xlu0 %1696
    %1698 = vrot.lane.b32.xlu0 %v1585, 64
    %v1699 = vpop.permute.xlu0 %1698
    %1700 = vrot.lane.b32.xlu0 %v1587, 64
    %v1701 = vpop.permute.xlu0 %1700
    %1702 = vrot.lane.b32.xlu0 %v1589, 64
    %v1703 = vpop.permute.xlu0 %1702
    %1704 = vrot.lane.b32.xlu0 %v1591, 64
    %v1705 = vpop.permute.xlu0 %1704
    %1706 = vrot.lane.b32.xlu0 %v1593, 64
    %v1707 = vpop.permute.xlu0 %1706
    %1708 = vrot.lane.b32.xlu0 %v1596, 64
    %v1709 = vpop.permute.xlu0 %1708
    %1710 = vrot.lane.b32.xlu0 %v1598, 64
    %v1711 = vpop.permute.xlu0 %1710
    %1712 = vrot.lane.b32.xlu0 %v1600, 64
    %v1713 = vpop.permute.xlu0 %1712
    %1714 = vrot.lane.b32.xlu0 %v1602, 64
    %v1715 = vpop.permute.xlu0 %1714
    %1716 = vrot.lane.b32.xlu0 %v1604, 64
    %v1717 = vpop.permute.xlu0 %1716
    %1718 = vrot.lane.b32.xlu0 %v1606, 64
    %v1719 = vpop.permute.xlu0 %1718
    %1720 = vrot.lane.b32.xlu0 %v1608, 64
    %v1721 = vpop.permute.xlu0 %1720
    %1722 = vrot.lane.b32.xlu0 %v1611, 64
    %v1723 = vpop.permute.xlu0 %1722
    %1724 = vrot.lane.b32.xlu0 %v1613, 64
    %v1725 = vpop.permute.xlu0 %1724
    %1726 = vrot.lane.b32.xlu0 %v1615, 64
    %v1727 = vpop.permute.xlu0 %1726
    %1728 = vrot.lane.b32.xlu0 %v1617, 64
    %v1729 = vpop.permute.xlu0 %1728
    %1730 = vrot.lane.b32.xlu0 %v1619, 64
    %v1731 = vpop.permute.xlu0 %1730
    %1732 = vrot.lane.b32.xlu0 %v1621, 64
    %v1733 = vpop.permute.xlu0 %1732
    %1734 = vrot.lane.b32.xlu0 %v1623, 64
    %v1735 = vpop.permute.xlu0 %1734
    %vm1792 = vcmask 1041408
    %v1793 = vrot.slane %v1087, 6
    %v1794 = vrot.slane %v1088, 6
    %v1795 = vsel %vm1792, %v1793, %v1794
    %v1796 = vrot.slane %v1089, 6
    %v1797 = vsel %vm1792, %v1794, %v1796
    %v1798 = vrot.slane %v1090, 6
    %v1799 = vsel %vm1792, %v1796, %v1798
    %v1800 = vrot.slane %v1091, 6
    %v1801 = vsel %vm1792, %v1798, %v1800
    %v1802 = vrot.slane %v1092, 6
    %v1803 = vsel %vm1792, %v1800, %v1802
    %v1804 = vrot.slane %v1093, 6
    %v1805 = vsel %vm1792, %v1802, %v1804
    %v1806 = vrot.slane %v1094, 6
    %v1807 = vsel %vm1792, %v1804, %v1806
    %v1808 = vrot.slane %v1095, 6
    %v1809 = vrot.slane %v1096, 6
    %v1810 = vsel %vm1792, %v1808, %v1809
    %v1811 = vrot.slane %v1097, 6
    %v1812 = vsel %vm1792, %v1809, %v1811
    %v1813 = vrot.slane %v1098, 6
    %v1814 = vsel %vm1792, %v1811, %v1813
    %v1815 = vrot.slane %v1099, 6
    %v1816 = vsel %vm1792, %v1813, %v1815
    %v1817 = vrot.slane %v1100, 6
    %v1818 = vsel %vm1792, %v1815, %v1817
    %v1819 = vrot.slane %v1101, 6
    %v1820 = vsel %vm1792, %v1817, %v1819
    %v1821 = vrot.slane %v1102, 6
    %v1822 = vsel %vm1792, %v1819, %v1821
    %v1823 = vrot.slane %v1103, 6
    %v1824 = vrot.slane %v1104, 6
    %v1825 = vsel %vm1792, %v1823, %v1824
    %v1826 = vrot.slane %v1105, 6
    %v1827 = vsel %vm1792, %v1824, %v1826
    %v1828 = vrot.slane %v1106, 6
    %v1829 = vsel %vm1792, %v1826, %v1828
    %v1830 = vrot.slane %v1107, 6
    %v1831 = vsel %vm1792, %v1828, %v1830
    %v1832 = vrot.slane %v1108, 6
    %v1833 = vsel %vm1792, %v1830, %v1832
    %v1834 = vrot.slane %v1109, 6
    %v1835 = vsel %vm1792, %v1832, %v1834
    %v1836 = vrot.slane %v1110, 6
    %v1837 = vsel %vm1792, %v1834, %v1836
    %v1838 = vrot.slane %v1111, 6
    %v1839 = vrot.slane %v1112, 6
    %v1840 = vsel %vm1792, %v1838, %v1839
    %v1841 = vrot.slane %v1113, 6
    %v1842 = vsel %vm1792, %v1839, %v1841
    %v1843 = vrot.slane %v1114, 6
    %v1844 = vsel %vm1792, %v1841, %v1843
    %v1845 = vrot.slane %v1115, 6
    %v1846 = vsel %vm1792, %v1843, %v1845
    %v1847 = vrot.slane %v1116, 6
    %v1848 = vsel %vm1792, %v1845, %v1847
    %v1849 = vrot.slane %v1117, 6
    %v1850 = vsel %vm1792, %v1847, %v1849
    %v1851 = vrot.slane %v1118, 6
    %v1852 = vsel %vm1792, %v1849, %v1851
    %v1853 = vrot.slane %v1119, 6
    %v1854 = vrot.slane %v1120, 6
    %v1855 = vsel %vm1792, %v1853, %v1854
    %v1856 = vrot.slane %v1121, 6
    %v1857 = vsel %vm1792, %v1854, %v1856
    %v1858 = vrot.slane %v1122, 6
    %v1859 = vsel %vm1792, %v1856, %v1858
    %v1860 = vrot.slane %v1123, 6
    %v1861 = vsel %vm1792, %v1858, %v1860
    %v1862 = vrot.slane %v1124, 6
    %v1863 = vsel %vm1792, %v1860, %v1862
    %v1864 = vrot.slane %v1125, 6
    %v1865 = vsel %vm1792, %v1862, %v1864
    %v1866 = vrot.slane %v1126, 6
    %v1867 = vsel %vm1792, %v1864, %v1866
    %v1868 = vrot.slane %v1127, 6
    %v1869 = vrot.slane %v1128, 6
    %v1870 = vsel %vm1792, %v1868, %v1869
    %v1871 = vrot.slane %v1129, 6
    %v1872 = vsel %vm1792, %v1869, %v1871
    %v1873 = vrot.slane %v1130, 6
    %v1874 = vsel %vm1792, %v1871, %v1873
    %v1875 = vrot.slane %v1131, 6
    %v1876 = vsel %vm1792, %v1873, %v1875
    %v1877 = vrot.slane %v1132, 6
    %v1878 = vsel %vm1792, %v1875, %v1877
    %v1879 = vrot.slane %v1133, 6
    %v1880 = vsel %vm1792, %v1877, %v1879
    %v1881 = vrot.slane %v1134, 6
    %v1882 = vsel %vm1792, %v1879, %v1881
    %v1883 = vrot.slane %v1135, 6
    %v1884 = vrot.slane %v1136, 6
    %v1885 = vsel %vm1792, %v1883, %v1884
    %v1886 = vrot.slane %v1137, 6
    %v1887 = vsel %vm1792, %v1884, %v1886
    %v1888 = vrot.slane %v1138, 6
    %v1889 = vsel %vm1792, %v1886, %v1888
    %v1890 = vrot.slane %v1139, 6
    %v1891 = vsel %vm1792, %v1888, %v1890
    %v1892 = vrot.slane %v1140, 6
    %v1893 = vsel %vm1792, %v1890, %v1892
    %v1894 = vrot.slane %v1141, 6
    %v1895 = vsel %vm1792, %v1892, %v1894
    %v1896 = vrot.slane %v1142, 6
    %v1897 = vsel %vm1792, %v1894, %v1896
    %v1898 = vrot.slane %v1143, 6
    %v1899 = vrot.slane %v1144, 6
    %v1900 = vsel %vm1792, %v1898, %v1899
    %v1901 = vrot.slane %v1145, 6
    %v1902 = vsel %vm1792, %v1899, %v1901
    %v1903 = vrot.slane %v1146, 6
    %v1904 = vsel %vm1792, %v1901, %v1903
    %v1905 = vrot.slane %v1147, 6
    %v1906 = vsel %vm1792, %v1903, %v1905
    %v1907 = vrot.slane %v1148, 6
    %v1908 = vsel %vm1792, %v1905, %v1907
    %v1909 = vrot.slane %v1149, 6
    %v1910 = vsel %vm1792, %v1907, %v1909
    %v1911 = vrot.slane %v1150, 6
    %v1912 = vsel %vm1792, %v1909, %v1911
    %1913 = vrot.lane.b32.xlu0 %v1795, 96
    %v1914 = vpop.permute.xlu0 %1913
    %1915 = vrot.lane.b32.xlu0 %v1797, 96
    %v1916 = vpop.permute.xlu0 %1915
    %1917 = vrot.lane.b32.xlu0 %v1799, 96
    %v1918 = vpop.permute.xlu0 %1917
    %1919 = vrot.lane.b32.xlu0 %v1801, 96
    %v1920 = vpop.permute.xlu0 %1919
    %1921 = vrot.lane.b32.xlu0 %v1803, 96
    %v1922 = vpop.permute.xlu0 %1921
    %1923 = vrot.lane.b32.xlu0 %v1805, 96
    %v1924 = vpop.permute.xlu0 %1923
    %1925 = vrot.lane.b32.xlu0 %v1807, 96
    %v1926 = vpop.permute.xlu0 %1925
    %1927 = vrot.lane.b32.xlu0 %v1810, 96
    %v1928 = vpop.permute.xlu0 %1927
    %1929 = vrot.lane.b32.xlu0 %v1812, 96
    %v1930 = vpop.permute.xlu0 %1929
    %1931 = vrot.lane.b32.xlu0 %v1814, 96
    %v1932 = vpop.permute.xlu0 %1931
    %1933 = vrot.lane.b32.xlu0 %v1816, 96
    %v1934 = vpop.permute.xlu0 %1933
    %1935 = vrot.lane.b32.xlu0 %v1818, 96
    %v1936 = vpop.permute.xlu0 %1935
    %1937 = vrot.lane.b32.xlu0 %v1820, 96
    %v1938 = vpop.permute.xlu0 %1937
    %1939 = vrot.lane.b32.xlu0 %v1822, 96
    %v1940 = vpop.permute.xlu0 %1939
    %1941 = vrot.lane.b32.xlu0 %v1825, 96
    %v1942 = vpop.permute.xlu0 %1941
    %1943 = vrot.lane.b32.xlu0 %v1827, 96
    %v1944 = vpop.permute.xlu0 %1943
    %1945 = vrot.lane.b32.xlu0 %v1829, 96
    %v1946 = vpop.permute.xlu0 %1945
    %1947 = vrot.lane.b32.xlu0 %v1831, 96
    %v1948 = vpop.permute.xlu0 %1947
    %1949 = vrot.lane.b32.xlu0 %v1833, 96
    %v1950 = vpop.permute.xlu0 %1949
    %1951 = vrot.lane.b32.xlu0 %v1835, 96
    %v1952 = vpop.permute.xlu0 %1951
    %1953 = vrot.lane.b32.xlu0 %v1837, 96
    %v1954 = vpop.permute.xlu0 %1953
    %1955 = vrot.lane.b32.xlu0 %v1840, 96
    %v1956 = vpop.permute.xlu0 %1955
    %1957 = vrot.lane.b32.xlu0 %v1842, 96
    %v1958 = vpop.permute.xlu0 %1957
    %1959 = vrot.lane.b32.xlu0 %v1844, 96
    %v1960 = vpop.permute.xlu0 %1959
    %1961 = vrot.lane.b32.xlu0 %v1846, 96
    %v1962 = vpop.permute.xlu0 %1961
    %1963 = vrot.lane.b32.xlu0 %v1848, 96
    %v1964 = vpop.permute.xlu0 %1963
    %1965 = vrot.lane.b32.xlu0 %v1850, 96
    %v1966 = vpop.permute.xlu0 %1965
    %1967 = vrot.lane.b32.xlu0 %v1852, 96
    %v1968 = vpop.permute.xlu0 %1967
    %1969 = vrot.lane.b32.xlu0 %v1855, 96
    %v1970 = vpop.permute.xlu0 %1969
    %1971 = vrot.lane.b32.xlu0 %v1857, 96
    %v1972 = vpop.permute.xlu0 %1971
    %1973 = vrot.lane.b32.xlu0 %v1859, 96
    %v1974 = vpop.permute.xlu0 %1973
    %1975 = vrot.lane.b32.xlu0 %v1861, 96
    %v1976 = vpop.permute.xlu0 %1975
    %1977 = vrot.lane.b32.xlu0 %v1863, 96
    %v1978 = vpop.permute.xlu0 %1977
    %1979 = vrot.lane.b32.xlu0 %v1865, 96
    %v1980 = vpop.permute.xlu0 %1979
    %1981 = vrot.lane.b32.xlu0 %v1867, 96
    %v1982 = vpop.permute.xlu0 %1981
    %1983 = vrot.lane.b32.xlu0 %v1870, 96
    %v1984 = vpop.permute.xlu0 %1983
    %1985 = vrot.lane.b32.xlu0 %v1872, 96
    %v1986 = vpop.permute.xlu0 %1985
    %1987 = vrot.lane.b32.xlu0 %v1874, 96
    %v1988 = vpop.permute.xlu0 %1987
    %1989 = vrot.lane.b32.xlu0 %v1876, 96
    %v1990 = vpop.permute.xlu0 %1989
    %1991 = vrot.lane.b32.xlu0 %v1878, 96
    %v1992 = vpop.permute.xlu0 %1991
    %1993 = vrot.lane.b32.xlu0 %v1880, 96
    %v1994 = vpop.permute.xlu0 %1993
    %1995 = vrot.lane.b32.xlu0 %v1882, 96
    %v1996 = vpop.permute.xlu0 %1995
    %1997 = vrot.lane.b32.xlu0 %v1885, 96
    %v1998 = vpop.permute.xlu0 %1997
    %1999 = vrot.lane.b32.xlu0 %v1887, 96
    %v2000 = vpop.permute.xlu0 %1999
    %2001 = vrot.lane.b32.xlu0 %v1889, 96
    %v2002 = vpop.permute.xlu0 %2001
    %2003 = vrot.lane.b32.xlu0 %v1891, 96
    %v2004 = vpop.permute.xlu0 %2003
    %2005 = vrot.lane.b32.xlu0 %v1893, 96
    %v2006 = vpop.permute.xlu0 %2005
    %2007 = vrot.lane.b32.xlu0 %v1895, 96
    %v2008 = vpop.permute.xlu0 %2007
    %2009 = vrot.lane.b32.xlu0 %v1897, 96
    %v2010 = vpop.permute.xlu0 %2009
    %2011 = vrot.lane.b32.xlu0 %v1900, 96
    %v2012 = vpop.permute.xlu0 %2011
    %2013 = vrot.lane.b32.xlu0 %v1902, 96
    %v2014 = vpop.permute.xlu0 %2013
    %2015 = vrot.lane.b32.xlu0 %v1904, 96
    %v2016 = vpop.permute.xlu0 %2015
    %2017 = vrot.lane.b32.xlu0 %v1906, 96
    %v2018 = vpop.permute.xlu0 %2017
    %2019 = vrot.lane.b32.xlu0 %v1908, 96
    %v2020 = vpop.permute.xlu0 %2019
    %2021 = vrot.lane.b32.xlu0 %v1910, 96
    %v2022 = vpop.permute.xlu0 %2021
    %2023 = vrot.lane.b32.xlu0 %v1912, 96
    %v2024 = vpop.permute.xlu0 %2023
    %vm2081 = vcmask 261120
    %v2082 = vsel %vm2081, %v1087, %v1336
    %v2083 = vsel %vm2081, %v1088, %v1338
    %v2084 = vsel %vm2081, %v1089, %v1340
    %v2085 = vsel %vm2081, %v1090, %v1342
    %v2086 = vsel %vm2081, %v1091, %v1344
    %v2087 = vsel %vm2081, %v1092, %v1346
    %v2088 = vsel %vm2081, %v1093, %v1348
    %v2089 = vsel %vm2081, %v1095, %v1350
    %v2090 = vsel %vm2081, %v1096, %v1352
    %v2091 = vsel %vm2081, %v1097, %v1354
    %v2092 = vsel %vm2081, %v1098, %v1356
    %v2093 = vsel %vm2081, %v1099, %v1358
    %v2094 = vsel %vm2081, %v1100, %v1360
    %v2095 = vsel %vm2081, %v1101, %v1362
    %v2096 = vsel %vm2081, %v1103, %v1364
    %v2097 = vsel %vm2081, %v1104, %v1366
    %v2098 = vsel %vm2081, %v1105, %v1368
    %v2099 = vsel %vm2081, %v1106, %v1370
    %v2100 = vsel %vm2081, %v1107, %v1372
    %v2101 = vsel %vm2081, %v1108, %v1374
    %v2102 = vsel %vm2081, %v1109, %v1376
    %v2103 = vsel %vm2081, %v1111, %v1378
    %v2104 = vsel %vm2081, %v1112, %v1380
    %v2105 = vsel %vm2081, %v1113, %v1382
    %v2106 = vsel %vm2081, %v1114, %v1384
    %v2107 = vsel %vm2081, %v1115, %v1386
    %v2108 = vsel %vm2081, %v1116, %v1388
    %v2109 = vsel %vm2081, %v1117, %v1390
    %v2110 = vsel %vm2081, %v1119, %v1392
    %v2111 = vsel %vm2081, %v1120, %v1394
    %v2112 = vsel %vm2081, %v1121, %v1396
    %v2113 = vsel %vm2081, %v1122, %v1398
    %v2114 = vsel %vm2081, %v1123, %v1400
    %v2115 = vsel %vm2081, %v1124, %v1402
    %v2116 = vsel %vm2081, %v1125, %v1404
    %v2117 = vsel %vm2081, %v1127, %v1406
    %v2118 = vsel %vm2081, %v1128, %v1408
    %v2119 = vsel %vm2081, %v1129, %v1410
    %v2120 = vsel %vm2081, %v1130, %v1412
    %v2121 = vsel %vm2081, %v1131, %v1414
    %v2122 = vsel %vm2081, %v1132, %v1416
    %v2123 = vsel %vm2081, %v1133, %v1418
    %v2124 = vsel %vm2081, %v1135, %v1420
    %v2125 = vsel %vm2081, %v1136, %v1422
    %v2126 = vsel %vm2081, %v1137, %v1424
    %v2127 = vsel %vm2081, %v1138, %v1426
    %v2128 = vsel %vm2081, %v1139, %v1428
    %v2129 = vsel %vm2081, %v1140, %v1430
    %v2130 = vsel %vm2081, %v1141, %v1432
    %v2131 = vsel %vm2081, %v1143, %v1434
    %v2132 = vsel %vm2081, %v1144, %v1436
    %v2133 = vsel %vm2081, %v1145, %v1438
    %v2134 = vsel %vm2081, %v1146, %v1440
    %v2135 = vsel %vm2081, %v1147, %v1442
    %v2136 = vsel %vm2081, %v1148, %v1444
    %v2137 = vsel %vm2081, %v1149, %v1446
    %vm2138 = vcmask 523264
    %v2139 = vsel %vm2138, %v2082, %v1625
    %v2140 = vsel %vm2138, %v2083, %v1627
    %v2141 = vsel %vm2138, %v2084, %v1629
    %v2142 = vsel %vm2138, %v2085, %v1631
    %v2143 = vsel %vm2138, %v2086, %v1633
    %v2144 = vsel %vm2138, %v2087, %v1635
    %v2145 = vsel %vm2138, %v2088, %v1637
    %v2146 = vsel %vm2138, %v2089, %v1639
    %v2147 = vsel %vm2138, %v2090, %v1641
    %v2148 = vsel %vm2138, %v2091, %v1643
    %v2149 = vsel %vm2138, %v2092, %v1645
    %v2150 = vsel %vm2138, %v2093, %v1647
    %v2151 = vsel %vm2138, %v2094, %v1649
    %v2152 = vsel %vm2138, %v2095, %v1651
    %v2153 = vsel %vm2138, %v2096, %v1653
    %v2154 = vsel %vm2138, %v2097, %v1655
    %v2155 = vsel %vm2138, %v2098, %v1657
    %v2156 = vsel %vm2138, %v2099, %v1659
    %v2157 = vsel %vm2138, %v2100, %v1661
    %v2158 = vsel %vm2138, %v2101, %v1663
    %v2159 = vsel %vm2138, %v2102, %v1665
    %v2160 = vsel %vm2138, %v2103, %v1667
    %v2161 = vsel %vm2138, %v2104, %v1669
    %v2162 = vsel %vm2138, %v2105, %v1671
    %v2163 = vsel %vm2138, %v2106, %v1673
    %v2164 = vsel %vm2138, %v2107, %v1675
    %v2165 = vsel %vm2138, %v2108, %v1677
    %v2166 = vsel %vm2138, %v2109, %v1679
    %v2167 = vsel %vm2138, %v2110, %v1681
    %v2168 = vsel %vm2138, %v2111, %v1683
    %v2169 = vsel %vm2138, %v2112, %v1685
    %v2170 = vsel %vm2138, %v2113, %v1687
    %v2171 = vsel %vm2138, %v2114, %v1689
    %v2172 = vsel %vm2138, %v2115, %v1691
    %v2173 = vsel %vm2138, %v2116, %v1693
    %v2174 = vsel %vm2138, %v2117, %v1695
    %v2175 = vsel %vm2138, %v2118, %v1697
    %v2176 = vsel %vm2138, %v2119, %v1699
    %v2177 = vsel %vm2138, %v2120, %v1701
    %v2178 = vsel %vm2138, %v2121, %v1703
    %v2179 = vsel %vm2138, %v2122, %v1705
    %v2180 = vsel %vm2138, %v2123, %v1707
    %v2181 = vsel %vm2138, %v2124, %v1709
    %v2182 = vsel %vm2138, %v2125, %v1711
    %v2183 = vsel %vm2138, %v2126, %v1713
    %v2184 = vsel %vm2138, %v2127, %v1715
    %v2185 = vsel %vm2138, %v2128, %v1717
    %v2186 = vsel %vm2138, %v2129, %v1719
    %v2187 = vsel %vm2138, %v2130, %v1721
    %v2188 = vsel %vm2138, %v2131, %v1723
    %v2189 = vsel %vm2138, %v2132, %v1725
    %v2190 = vsel %vm2138, %v2133, %v1727
    %v2191 = vsel %vm2138, %v2134, %v1729
    %v2192 = vsel %vm2138, %v2135, %v1731
    %v2193 = vsel %vm2138, %v2136, %v1733
    %v2194 = vsel %vm2138, %v2137, %v1735
    %vm2195 = vcmask 785408
    %v2196 = vsel %vm2195, %v2139, %v1914
    %v2197 = vsel %vm2195, %v2140, %v1916
    %v2198 = vsel %vm2195, %v2141, %v1918
    %v2199 = vsel %vm2195, %v2142, %v1920
    %v2200 = vsel %vm2195, %v2143, %v1922
    %v2201 = vsel %vm2195, %v2144, %v1924
    %v2202 = vsel %vm2195, %v2145, %v1926
    %v2203 = vsel %vm2195, %v2146, %v1928
    %v2204 = vsel %vm2195, %v2147, %v1930
    %v2205 = vsel %vm2195, %v2148, %v1932
    %v2206 = vsel %vm2195, %v2149, %v1934
    %v2207 = vsel %vm2195, %v2150, %v1936
    %v2208 = vsel %vm2195, %v2151, %v1938
    %v2209 = vsel %vm2195, %v2152, %v1940
    %v2210 = vsel %vm2195, %v2153, %v1942
    %v2211 = vsel %vm2195, %v2154, %v1944
    %v2212 = vsel %vm2195, %v2155, %v1946
    %v2213 = vsel %vm2195, %v2156, %v1948
    %v2214 = vsel %vm2195, %v2157, %v1950
    %v2215 = vsel %vm2195, %v2158, %v1952
    %v2216 = vsel %vm2195, %v2159, %v1954
    %v2217 = vsel %vm2195, %v2160, %v1956
    %v2218 = vsel %vm2195, %v2161, %v1958
    %v2219 = vsel %vm2195, %v2162, %v1960
    %v2220 = vsel %vm2195, %v2163, %v1962
    %v2221 = vsel %vm2195, %v2164, %v1964
    %v2222 = vsel %vm2195, %v2165, %v1966
    %v2223 = vsel %vm2195, %v2166, %v1968
    %v2224 = vsel %vm2195, %v2167, %v1970
    %v2225 = vsel %vm2195, %v2168, %v1972
    %v2226 = vsel %vm2195, %v2169, %v1974
    %v2227 = vsel %vm2195, %v2170, %v1976
    %v2228 = vsel %vm2195, %v2171, %v1978
    %v2229 = vsel %vm2195, %v2172, %v1980
    %v2230 = vsel %vm2195, %v2173, %v1982
    %v2231 = vsel %vm2195, %v2174, %v1984
    %v2232 = vsel %vm2195, %v2175, %v1986
    %v2233 = vsel %vm2195, %v2176, %v1988
    %v2234 = vsel %vm2195, %v2177, %v1990
    %v2235 = vsel %vm2195, %v2178, %v1992
    %v2236 = vsel %vm2195, %v2179, %v1994
    %v2237 = vsel %vm2195, %v2180, %v1996
    %v2238 = vsel %vm2195, %v2181, %v1998
    %v2239 = vsel %vm2195, %v2182, %v2000
    %v2240 = vsel %vm2195, %v2183, %v2002
    %v2241 = vsel %vm2195, %v2184, %v2004
    %v2242 = vsel %vm2195, %v2185, %v2006
    %v2243 = vsel %vm2195, %v2186, %v2008
    %v2244 = vsel %vm2195, %v2187, %v2010
    %v2245 = vsel %vm2195, %v2188, %v2012
    %v2246 = vsel %vm2195, %v2189, %v2014
    %v2247 = vsel %vm2195, %v2190, %v2016
    %v2248 = vsel %vm2195, %v2191, %v2018
    %v2249 = vsel %vm2195, %v2192, %v2020
    %v2250 = vsel %vm2195, %v2193, %v2022
    %v2251 = vsel %vm2195, %v2194, %v2024
    %v2252 = vpack.c.bf16 %v2197, %v2196
    %v2253 = vpack.c.bf16 %v1089, %v1088
    %v2254 = vpack.c.bf16 %v2199, %v2198
    %v2255 = vpack.c.bf16 %v1091, %v1090
    %v2256 = vpack.c.bf16 %v2201, %v2200
    %v2257 = vpack.c.bf16 %v1093, %v1092
    %v2258 = vpack.c.bf16 %v2203, %v2202
    %v2259 = vpack.c.bf16 %v1096, %v1094
    %v2260 = vpack.c.bf16 %v2205, %v2204
    %v2261 = vpack.c.bf16 %v1098, %v1097
    %v2262 = vpack.c.bf16 %v2207, %v2206
    %v2263 = vpack.c.bf16 %v1100, %v1099
    %v2264 = vpack.c.bf16 %v2209, %v2208
    %v2265 = vpack.c.bf16 %v1102, %v1101
    %v2266 = vpack.c.bf16 %v2211, %v2210
    %v2267 = vpack.c.bf16 %v1105, %v1104
    %v2268 = vpack.c.bf16 %v2213, %v2212
    %v2269 = vpack.c.bf16 %v1107, %v1106
    %v2270 = vpack.c.bf16 %v2215, %v2214
    %v2271 = vpack.c.bf16 %v1109, %v1108
    %v2272 = vpack.c.bf16 %v2217, %v2216
    %v2273 = vpack.c.bf16 %v1112, %v1110
    %v2274 = vpack.c.bf16 %v2219, %v2218
    %v2275 = vpack.c.bf16 %v1114, %v1113
    %v2276 = vpack.c.bf16 %v2221, %v2220
    %v2277 = vpack.c.bf16 %v1116, %v1115
    %v2278 = vpack.c.bf16 %v2223, %v2222
    %v2279 = vpack.c.bf16 %v1118, %v1117
    %v2280 = vpack.c.bf16 %v2225, %v2224
    %v2281 = vpack.c.bf16 %v1121, %v1120
    %v2282 = vpack.c.bf16 %v2227, %v2226
    %v2283 = vpack.c.bf16 %v1123, %v1122
    %v2284 = vpack.c.bf16 %v2229, %v2228
    %v2285 = vpack.c.bf16 %v1125, %v1124
    %v2286 = vpack.c.bf16 %v2231, %v2230
    %v2287 = vpack.c.bf16 %v1128, %v1126
    %v2288 = vpack.c.bf16 %v2233, %v2232
    %v2289 = vpack.c.bf16 %v1130, %v1129
    %v2290 = vpack.c.bf16 %v2235, %v2234
    %v2291 = vpack.c.bf16 %v1132, %v1131
    %v2292 = vpack.c.bf16 %v2237, %v2236
    %v2293 = vpack.c.bf16 %v1134, %v1133
    %v2294 = vpack.c.bf16 %v2239, %v2238
    %v2295 = vpack.c.bf16 %v1137, %v1136
    %v2296 = vpack.c.bf16 %v2241, %v2240
    %v2297 = vpack.c.bf16 %v1139, %v1138
    %v2298 = vpack.c.bf16 %v2243, %v2242
    %v2299 = vpack.c.bf16 %v1141, %v1140
    %v2300 = vpack.c.bf16 %v2245, %v2244
    %v2301 = vpack.c.bf16 %v1144, %v1142
    %v2302 = vpack.c.bf16 %v2247, %v2246
    %v2303 = vpack.c.bf16 %v1146, %v1145
    %v2304 = vpack.c.bf16 %v2249, %v2248
    %v2305 = vpack.c.bf16 %v1148, %v1147
    %v2306 = vpack.c.bf16 %v2251, %v2250
    %v2307 = vpack.c.bf16 %v1150, %v1149
    %v2308 = vld [vmem:[%s3] sm:$0xf]
    %v2309 = vld [vmem:[%s3 + $0x4] sm:$0xf]
    %v2310 = vld [vmem:[%s3 + $0x8] sm:$0xf]
    %v2311 = vld [vmem:[%s3 + $0xc] sm:$0xf]
    %v2312 = vld [vmem:[%s3 + $0x10] sm:$0xf]
    %v2313 = vld [vmem:[%s3 + $0x14] sm:$0xf]
    %v2314 = vld [vmem:[%s3 + $0x18] sm:$0xf]
    %v2315 = vld [vmem:[%s3 + $0x1c] sm:$0xf]
    %v2316 = vld [vmem:[%s3 + $0x20] sm:$0xf]
    %v2317 = vld [vmem:[%s3 + $0x24] sm:$0xf]
    %v2318 = vld [vmem:[%s3 + $0x28] sm:$0xf]
    %v2319 = vld [vmem:[%s3 + $0x2c] sm:$0xf]
    %v2320 = vld [vmem:[%s3 + $0x30] sm:$0xf]
    %v2321 = vld [vmem:[%s3 + $0x34] sm:$0xf]
    %v2322 = vld [vmem:[%s3 + $0x38] sm:$0xf]
    %v2323 = vld [vmem:[%s3 + $0x3c] sm:$0xf]
    %v2324 = vld [vmem:[%s3 + $0x40] sm:$0xf]
    %v2325 = vld [vmem:[%s3 + $0x44] sm:$0xf]
    %v2326 = vld [vmem:[%s3 + $0x48] sm:$0xf]
    %v2327 = vld [vmem:[%s3 + $0x4c] sm:$0xf]
    %v2328 = vld [vmem:[%s4] sm:$0x1]
    %v2330 = vlaneseq
    %v2331 = vshrl.u32 %v2330, 7
    %v2332 = vsub.s32 0, %v2331
    %v2333 = vrot.slane %v2328, %v2332
    %v2355 = vunpack.c.l.b16 %v2308
    %v2356 = vunpack.c.l.b16 %v2309
    %v2357 = vunpack.c.l.b16 %v2310
    %v2358 = vunpack.c.l.b16 %v2311
    %v2359 = vunpack.c.l.b16 %v2312
    %v2360 = vunpack.c.l.b16 %v2313
    %v2361 = vunpack.c.l.b16 %v2314
    %v2362 = vunpack.c.l.b16 %v2315
    %v2363 = vunpack.c.l.b16 %v2316
    %v2364 = vunpack.c.l.b16 %v2317
    %v2365 = vunpack.c.l.b16 %v2318
    %v2366 = vunpack.c.l.b16 %v2319
    %v2367 = vunpack.c.l.b16 %v2320
    %v2368 = vunpack.c.l.b16 %v2321
    %v2369 = vunpack.c.l.b16 %v2322
    %v2370 = vunpack.c.l.b16 %v2323
    %v2371 = vunpack.c.l.b16 %v2324
    %v2372 = vunpack.c.l.b16 %v2325
    %v2373 = vunpack.c.l.b16 %v2326
    %v2374 = vunpack.c.l.b16 %v2327
    %v2375 = vpack.c.b16 %v2356, %v2355
    %v2376 = vpack.c.b16 %v2358, %v2357
    %v2377 = vpack.c.b16 %v2360, %v2359
    %v2378 = vpack.c.b16 %v2362, %v2361
    %v2379 = vpack.c.b16 %v2364, %v2363
    %v2380 = vpack.c.b16 %v2366, %v2365
    %v2381 = vpack.c.b16 %v2368, %v2367
    %v2382 = vpack.c.b16 %v2370, %v2369
    %v2383 = vpack.c.b16 %v2372, %v2371
    %v2384 = vpack.c.b16 %v2374, %v2373
    %v2396 = vsel %vm2081, %v2253, 0
    %v2399 = vsel %vm2081, %v2255, 0
    %v2402 = vsel %vm2081, %v2257, 0
    %v2405 = vsel %vm2081, %v2259, 0
    %v2408 = vsel %vm2081, %v2261, 0
    %v2411 = vsel %vm2081, %v2263, 0
    %v2414 = vsel %vm2081, %v2265, 0
    %v2417 = vsel %vm2081, %v2267, 0
    %v2420 = vsel %vm2081, %v2269, 0
    %v2423 = vsel %vm2081, %v2271, 0
    %v2426 = vsel %vm2081, %v2273, 0
    %v2429 = vsel %vm2081, %v2275, 0
    %v2432 = vsel %vm2081, %v2277, 0
    %v2435 = vsel %vm2081, %v2279, 0
    %v2438 = vsel %vm2081, %v2281, 0
    %v2441 = vsel %vm2081, %v2283, 0
    %v2444 = vsel %vm2081, %v2285, 0
    %v2447 = vsel %vm2081, %v2287, 0
    %v2450 = vsel %vm2081, %v2289, 0
    %v2453 = vsel %vm2081, %v2291, 0
    %v2456 = vsel %vm2081, %v2293, 0
    %v2459 = vsel %vm2081, %v2295, 0
    %v2462 = vsel %vm2081, %v2297, 0
    %v2465 = vsel %vm2081, %v2299, 0
    %v2468 = vsel %vm2081, %v2301, 0
    %v2471 = vsel %vm2081, %v2303, 0
    %v2474 = vsel %vm2081, %v2305, 0
    %v2477 = vsel %vm2081, %v2307, 0
    %2479 = vmatprep.subr.bf16.mxu0 0
    %2480 = vmatpush1.bf16.msra.mxu0 %v2382
    %2481 = vmatprep.subr.bf16.mxu0 0
    %2482 = vmatpush1.bf16.msra.mxu0 %v2381
    %2483 = vmatprep.subr.bf16.mxu0 0
    %2484 = vmatpush1.bf16.msra.mxu0 %v2380
    %2485 = vmatprep.subr.bf16.mxu0 0
    %2486 = vmatpush1.bf16.msra.mxu0 %v2379
    %2487 = vmatprep.subr.bf16.mxu0 0
    %2488 = vmatpush1.bf16.msra.mxu0 %v2378
    %2489 = vmatprep.subr.bf16.mxu0 0
    %2490 = vmatpush1.bf16.msra.mxu0 %v2377
    %2491 = vmatprep.subr.bf16.mxu0 0
    %2492 = vmatpush1.bf16.msra.mxu0 %v2376
    %2493 = vmatprep.subr.bf16.mxu0 0
    %2494 = vmatpush1.bf16.msra.mxu0 %v2375
    %2495 = vmatprep.subr.bf16.mxu0 0
    %2496 = vmatpush2.bf16.msra.mxu0 0
    %2497 = vmatprep.subr.bf16.mxu0 0
    %2498 = vmatpush2.bf16.msra.mxu0 0
    %2499 = vmatprep.subr.bf16.mxu0 0
    %2500 = vmatpush2.bf16.msra.mxu0 0
    %2501 = vmatprep.subr.bf16.mxu0 0
    %2502 = vmatpush2.bf16.msra.mxu0 0
    %2503 = vmatprep.subr.bf16.mxu0 0
    %2504 = vmatpush2.bf16.msra.mxu0 0
    %2505 = vmatprep.subr.bf16.mxu0 0
    %2506 = vmatpush2.bf16.msra.mxu0 0
    %2507 = vmatprep.subr.bf16.mxu0 0
    %2508 = vmatpush2.bf16.msra.mxu0 %v2384
    %2509 = vmatprep.subr.bf16.mxu0 0
    %2510 = vmatpush2.bf16.msra.mxu0 %v2383
    %2511 = vmatprep.mubr.bf16.mxu0 %v2396
    %2512 = vmatmul.mubr.bf16.gmra.mxu0 %v2252
    %v2513 = vpop.f32.mrf.mxu0
    %v2514 = vadd.f32 %v2333, %v2513
    %v2515 = vpop.f32.mrf.mxu0
    %v2516 = vpop.f32.mrf.mxu0
    %v2517 = vadd.f32 %v2333, %v2516
    %v2518 = vpop.f32.mrf.mxu0
    %2519 = vmatprep.mubr.bf16.mxu0 %v2399
    %2520 = vmatmul.mubr.bf16.gmra.mxu0 %v2254
    %v2521 = vpop.f32.mrf.mxu0
    %v2522 = vadd.f32 %v2333, %v2521
    %v2523 = vpop.f32.mrf.mxu0
    %v2524 = vpop.f32.mrf.mxu0
    %v2525 = vadd.f32 %v2333, %v2524
    %v2526 = vpop.f32.mrf.mxu0
    %2527 = vmatprep.mubr.bf16.mxu0 %v2402
    %2528 = vmatmul.mubr.bf16.gmra.mxu0 %v2256
    %v2529 = vpop.f32.mrf.mxu0
    %v2530 = vadd.f32 %v2333, %v2529
    %v2531 = vpop.f32.mrf.mxu0
    %v2532 = vpop.f32.mrf.mxu0
    %v2533 = vadd.f32 %v2333, %v2532
    %v2534 = vpop.f32.mrf.mxu0
    %2535 = vmatprep.mubr.bf16.mxu0 %v2405
    %2536 = vmatmul.mubr.bf16.gmra.mxu0 %v2258
    %v2537 = vpop.f32.mrf.mxu0
    %v2538 = vadd.f32 %v2333, %v2537
    %v2539 = vpop.f32.mrf.mxu0
    %v2540 = vpop.f32.mrf.mxu0
    %v2541 = vadd.f32 %v2333, %v2540
    %v2542 = vpop.f32.mrf.mxu0
    %2543 = vmatprep.mubr.bf16.mxu0 %v2408
    %2544 = vmatmul.mubr.bf16.gmra.mxu0 %v2260
    %v2545 = vpop.f32.mrf.mxu0
    %v2546 = vadd.f32 %v2333, %v2545
    %v2547 = vpop.f32.mrf.mxu0
    %v2548 = vpop.f32.mrf.mxu0
    %v2549 = vadd.f32 %v2333, %v2548
    %v2550 = vpop.f32.mrf.mxu0
    %2551 = vmatprep.mubr.bf16.mxu0 %v2411
    %2552 = vmatmul.mubr.bf16.gmra.mxu0 %v2262
    %v2553 = vpop.f32.mrf.mxu0
    %v2554 = vadd.f32 %v2333, %v2553
    %v2555 = vpop.f32.mrf.mxu0
    %v2556 = vpop.f32.mrf.mxu0
    %v2557 = vadd.f32 %v2333, %v2556
    %v2558 = vpop.f32.mrf.mxu0
    %2559 = vmatprep.mubr.bf16.mxu0 %v2414
    %2560 = vmatmul.mubr.bf16.gmra.mxu0 %v2264
    %v2561 = vpop.f32.mrf.mxu0
    %v2562 = vadd.f32 %v2333, %v2561
    %v2563 = vpop.f32.mrf.mxu0
    %v2564 = vpop.f32.mrf.mxu0
    %v2565 = vadd.f32 %v2333, %v2564
    %v2566 = vpop.f32.mrf.mxu0
    %2567 = vmatprep.mubr.bf16.mxu0 %v2417
    %2568 = vmatmul.mubr.bf16.gmra.mxu0 %v2266
    %v2569 = vpop.f32.mrf.mxu0
    %v2570 = vadd.f32 %v2333, %v2569
    %v2571 = vpop.f32.mrf.mxu0
    %v2572 = vpop.f32.mrf.mxu0
    %v2573 = vadd.f32 %v2333, %v2572
    %v2574 = vpop.f32.mrf.mxu0
    %2575 = vmatprep.mubr.bf16.mxu0 %v2420
    %2576 = vmatmul.mubr.bf16.gmra.mxu0 %v2268
    %v2577 = vpop.f32.mrf.mxu0
    %v2578 = vadd.f32 %v2333, %v2577
    %v2579 = vpop.f32.mrf.mxu0
    %v2580 = vpop.f32.mrf.mxu0
    %v2581 = vadd.f32 %v2333, %v2580
    %v2582 = vpop.f32.mrf.mxu0
    %2583 = vmatprep.mubr.bf16.mxu0 %v2423
    %2584 = vmatmul.mubr.bf16.gmra.mxu0 %v2270
    %v2585 = vpop.f32.mrf.mxu0
    %v2586 = vadd.f32 %v2333, %v2585
    %v2587 = vpop.f32.mrf.mxu0
    %v2588 = vpop.f32.mrf.mxu0
    %v2589 = vadd.f32 %v2333, %v2588
    %v2590 = vpop.f32.mrf.mxu0
    %2591 = vmatprep.mubr.bf16.mxu0 %v2426
    %2592 = vmatmul.mubr.bf16.gmra.mxu0 %v2272
    %v2593 = vpop.f32.mrf.mxu0
    %v2594 = vadd.f32 %v2333, %v2593
    %v2595 = vpop.f32.mrf.mxu0
    %v2596 = vpop.f32.mrf.mxu0
    %v2597 = vadd.f32 %v2333, %v2596
    %v2598 = vpop.f32.mrf.mxu0
    %2599 = vmatprep.mubr.bf16.mxu0 %v2429
    %2600 = vmatmul.mubr.bf16.gmra.mxu0 %v2274
    %v2601 = vpop.f32.mrf.mxu0
    %v2602 = vadd.f32 %v2333, %v2601
    %v2603 = vpop.f32.mrf.mxu0
    %v2604 = vpop.f32.mrf.mxu0
    %v2605 = vadd.f32 %v2333, %v2604
    %v2606 = vpop.f32.mrf.mxu0
    %2607 = vmatprep.mubr.bf16.mxu0 %v2432
    %2608 = vmatmul.mubr.bf16.gmra.mxu0 %v2276
    %v2609 = vpop.f32.mrf.mxu0
    %v2610 = vadd.f32 %v2333, %v2609
    %v2611 = vpop.f32.mrf.mxu0
    %v2612 = vpop.f32.mrf.mxu0
    %v2613 = vadd.f32 %v2333, %v2612
    %v2614 = vpop.f32.mrf.mxu0
    %2615 = vmatprep.mubr.bf16.mxu0 %v2435
    %2616 = vmatmul.mubr.bf16.gmra.mxu0 %v2278
    %v2617 = vpop.f32.mrf.mxu0
    %v2618 = vadd.f32 %v2333, %v2617
    %v2619 = vpop.f32.mrf.mxu0
    %v2620 = vpop.f32.mrf.mxu0
    %v2621 = vadd.f32 %v2333, %v2620
    %v2622 = vpop.f32.mrf.mxu0
    %2623 = vmatprep.mubr.bf16.mxu0 %v2438
    %2624 = vmatmul.mubr.bf16.gmra.mxu0 %v2280
    %v2625 = vpop.f32.mrf.mxu0
    %v2626 = vadd.f32 %v2333, %v2625
    %v2627 = vpop.f32.mrf.mxu0
    %v2628 = vpop.f32.mrf.mxu0
    %v2629 = vadd.f32 %v2333, %v2628
    %v2630 = vpop.f32.mrf.mxu0
    %2631 = vmatprep.mubr.bf16.mxu0 %v2441
    %2632 = vmatmul.mubr.bf16.gmra.mxu0 %v2282
    %v2633 = vpop.f32.mrf.mxu0
    %v2634 = vadd.f32 %v2333, %v2633
    %v2635 = vpop.f32.mrf.mxu0
    %v2636 = vpop.f32.mrf.mxu0
    %v2637 = vadd.f32 %v2333, %v2636
    %v2638 = vpop.f32.mrf.mxu0
    %2639 = vmatprep.mubr.bf16.mxu0 %v2444
    %2640 = vmatmul.mubr.bf16.gmra.mxu0 %v2284
    %v2641 = vpop.f32.mrf.mxu0
    %v2642 = vadd.f32 %v2333, %v2641
    %v2643 = vpop.f32.mrf.mxu0
    %v2644 = vpop.f32.mrf.mxu0
    %v2645 = vadd.f32 %v2333, %v2644
    %v2646 = vpop.f32.mrf.mxu0
    %2647 = vmatprep.mubr.bf16.mxu0 %v2447
    %2648 = vmatmul.mubr.bf16.gmra.mxu0 %v2286
    %v2649 = vpop.f32.mrf.mxu0
    %v2650 = vadd.f32 %v2333, %v2649
    %v2651 = vpop.f32.mrf.mxu0
    %v2652 = vpop.f32.mrf.mxu0
    %v2653 = vadd.f32 %v2333, %v2652
    %v2654 = vpop.f32.mrf.mxu0
    %2655 = vmatprep.mubr.bf16.mxu0 %v2450
    %2656 = vmatmul.mubr.bf16.gmra.mxu0 %v2288
    %v2657 = vpop.f32.mrf.mxu0
    %v2658 = vadd.f32 %v2333, %v2657
    %v2659 = vpop.f32.mrf.mxu0
    %v2660 = vpop.f32.mrf.mxu0
    %v2661 = vadd.f32 %v2333, %v2660
    %v2662 = vpop.f32.mrf.mxu0
    %2663 = vmatprep.mubr.bf16.mxu0 %v2453
    %2664 = vmatmul.mubr.bf16.gmra.mxu0 %v2290
    %v2665 = vpop.f32.mrf.mxu0
    %v2666 = vadd.f32 %v2333, %v2665
    %v2667 = vpop.f32.mrf.mxu0
    %v2668 = vpop.f32.mrf.mxu0
    %v2669 = vadd.f32 %v2333, %v2668
    %v2670 = vpop.f32.mrf.mxu0
    %2671 = vmatprep.mubr.bf16.mxu0 %v2456
    %2672 = vmatmul.mubr.bf16.gmra.mxu0 %v2292
    %v2673 = vpop.f32.mrf.mxu0
    %v2674 = vadd.f32 %v2333, %v2673
    %v2675 = vpop.f32.mrf.mxu0
    %v2676 = vpop.f32.mrf.mxu0
    %v2677 = vadd.f32 %v2333, %v2676
    %v2678 = vpop.f32.mrf.mxu0
    %2679 = vmatprep.mubr.bf16.mxu0 %v2459
    %2680 = vmatmul.mubr.bf16.gmra.mxu0 %v2294
    %v2681 = vpop.f32.mrf.mxu0
    %v2682 = vadd.f32 %v2333, %v2681
    %v2683 = vpop.f32.mrf.mxu0
    %v2684 = vpop.f32.mrf.mxu0
    %v2685 = vadd.f32 %v2333, %v2684
    %v2686 = vpop.f32.mrf.mxu0
    %2687 = vmatprep.mubr.bf16.mxu0 %v2462
    %2688 = vmatmul.mubr.bf16.gmra.mxu0 %v2296
    %v2689 = vpop.f32.mrf.mxu0
    %v2690 = vadd.f32 %v2333, %v2689
    %v2691 = vpop.f32.mrf.mxu0
    %v2692 = vpop.f32.mrf.mxu0
    %v2693 = vadd.f32 %v2333, %v2692
    %v2694 = vpop.f32.mrf.mxu0
    %2695 = vmatprep.mubr.bf16.mxu0 %v2465
    %2696 = vmatmul.mubr.bf16.gmra.mxu0 %v2298
    %v2697 = vpop.f32.mrf.mxu0
    %v2698 = vadd.f32 %v2333, %v2697
    %v2699 = vpop.f32.mrf.mxu0
    %v2700 = vpop.f32.mrf.mxu0
    %v2701 = vadd.f32 %v2333, %v2700
    %v2702 = vpop.f32.mrf.mxu0
    %2703 = vmatprep.mubr.bf16.mxu0 %v2468
    %2704 = vmatmul.mubr.bf16.gmra.mxu0 %v2300
    %v2705 = vpop.f32.mrf.mxu0
    %v2706 = vadd.f32 %v2333, %v2705
    %v2707 = vpop.f32.mrf.mxu0
    %v2708 = vpop.f32.mrf.mxu0
    %v2709 = vadd.f32 %v2333, %v2708
    %v2710 = vpop.f32.mrf.mxu0
    %2711 = vmatprep.mubr.bf16.mxu0 %v2471
    %2712 = vmatmul.mubr.bf16.gmra.mxu0 %v2302
    %v2713 = vpop.f32.mrf.mxu0
    %v2714 = vadd.f32 %v2333, %v2713
    %v2715 = vpop.f32.mrf.mxu0
    %v2716 = vpop.f32.mrf.mxu0
    %v2717 = vadd.f32 %v2333, %v2716
    %v2718 = vpop.f32.mrf.mxu0
    %2719 = vmatprep.mubr.bf16.mxu0 %v2474
    %2720 = vmatmul.mubr.bf16.gmra.mxu0 %v2304
    %v2721 = vpop.f32.mrf.mxu0
    %v2722 = vadd.f32 %v2333, %v2721
    %v2723 = vpop.f32.mrf.mxu0
    %v2724 = vpop.f32.mrf.mxu0
    %v2725 = vadd.f32 %v2333, %v2724
    %v2726 = vpop.f32.mrf.mxu0
    %2727 = vmatprep.mubr.bf16.mxu0 %v2477
    %2728 = vmatmul.mubr.bf16.gmra.mxu0 %v2306
    %v2729 = vpop.f32.mrf.mxu0
    %v2730 = vadd.f32 %v2333, %v2729
    %v2731 = vpop.f32.mrf.mxu0
    %v2732 = vpop.f32.mrf.mxu0
    %v2733 = vadd.f32 %v2333, %v2732
    %v2734 = vpop.f32.mrf.mxu0
    %2735 = vdwg.mxu0
    %v2736 = vmax.f32 %v2514, 0.0
    %v2737 = vmax.f32 %v2517, 0.0
    %v2738 = vmax.f32 %v2522, 0.0
    %v2739 = vmax.f32 %v2525, 0.0
    %v2740 = vmax.f32 %v2530, 0.0
    %v2741 = vmax.f32 %v2533, 0.0
    %v2742 = vmax.f32 %v2538, 0.0
    %v2743 = vmax.f32 %v2541, 0.0
    %v2744 = vmax.f32 %v2546, 0.0
    %v2745 = vmax.f32 %v2549, 0.0
    %v2746 = vmax.f32 %v2554, 0.0
    %v2747 = vmax.f32 %v2557, 0.0
    %v2748 = vmax.f32 %v2562, 0.0
    %v2749 = vmax.f32 %v2565, 0.0
    %v2750 = vmax.f32 %v2570, 0.0
    %v2751 = vmax.f32 %v2573, 0.0
    %v2752 = vmax.f32 %v2578, 0.0
    %v2753 = vmax.f32 %v2581, 0.0
    %v2754 = vmax.f32 %v2586, 0.0
    %v2755 = vmax.f32 %v2589, 0.0
    %v2756 = vmax.f32 %v2594, 0.0
    %v2757 = vmax.f32 %v2597, 0.0
    %v2758 = vmax.f32 %v2602, 0.0
    %v2759 = vmax.f32 %v2605, 0.0
    %v2760 = vmax.f32 %v2610, 0.0
    %v2761 = vmax.f32 %v2613, 0.0
    %v2762 = vmax.f32 %v2618, 0.0
    %v2763 = vmax.f32 %v2621, 0.0
    %v2764 = vmax.f32 %v2626, 0.0
    %v2765 = vmax.f32 %v2629, 0.0
    %v2766 = vmax.f32 %v2634, 0.0
    %v2767 = vmax.f32 %v2637, 0.0
    %v2768 = vmax.f32 %v2642, 0.0
    %v2769 = vmax.f32 %v2645, 0.0
    %v2770 = vmax.f32 %v2650, 0.0
    %v2771 = vmax.f32 %v2653, 0.0
    %v2772 = vmax.f32 %v2658, 0.0
    %v2773 = vmax.f32 %v2661, 0.0
    %v2774 = vmax.f32 %v2666, 0.0
    %v2775 = vmax.f32 %v2669, 0.0
    %v2776 = vmax.f32 %v2674, 0.0
    %v2777 = vmax.f32 %v2677, 0.0
    %v2778 = vmax.f32 %v2682, 0.0
    %v2779 = vmax.f32 %v2685, 0.0
    %v2780 = vmax.f32 %v2690, 0.0
    %v2781 = vmax.f32 %v2693, 0.0
    %v2782 = vmax.f32 %v2698, 0.0
    %v2783 = vmax.f32 %v2701, 0.0
    %v2784 = vmax.f32 %v2706, 0.0
    %v2785 = vmax.f32 %v2709, 0.0
    %v2786 = vmax.f32 %v2714, 0.0
    %v2787 = vmax.f32 %v2717, 0.0
    %v2788 = vmax.f32 %v2722, 0.0
    %v2789 = vmax.f32 %v2725, 0.0
    %v2790 = vmax.f32 %v2730, 0.0
    %v2791 = vmax.f32 %v2733, 0.0
    %v2848 = vrot.slane %v2736, 2
    %v2849 = vrot.slane %v2737, 2
    %v2850 = vsel %vm417, %v2848, %v2849
    %v2851 = vrot.slane %v2738, 2
    %v2852 = vsel %vm417, %v2849, %v2851
    %v2853 = vrot.slane %v2739, 2
    %v2854 = vsel %vm417, %v2851, %v2853
    %v2855 = vrot.slane %v2740, 2
    %v2856 = vsel %vm417, %v2853, %v2855
    %v2857 = vrot.slane %v2741, 2
    %v2858 = vsel %vm417, %v2855, %v2857
    %v2859 = vrot.slane %v2742, 2
    %v2860 = vsel %vm417, %v2857, %v2859
    %v2861 = vrot.slane %v2743, 2
    %v2862 = vrot.slane %v2744, 2
    %v2863 = vsel %vm417, %v2861, %v2862
    %v2864 = vrot.slane %v2745, 2
    %v2865 = vsel %vm417, %v2862, %v2864
    %v2866 = vrot.slane %v2746, 2
    %v2867 = vsel %vm417, %v2864, %v2866
    %v2868 = vrot.slane %v2747, 2
    %v2869 = vsel %vm417, %v2866, %v2868
    %v2870 = vrot.slane %v2748, 2
    %v2871 = vsel %vm417, %v2868, %v2870
    %v2872 = vrot.slane %v2749, 2
    %v2873 = vsel %vm417, %v2870, %v2872
    %v2874 = vrot.slane %v2750, 2
    %v2875 = vrot.slane %v2751, 2
    %v2876 = vsel %vm417, %v2874, %v2875
    %v2877 = vrot.slane %v2752, 2
    %v2878 = vsel %vm417, %v2875, %v2877
    %v2879 = vrot.slane %v2753, 2
    %v2880 = vsel %vm417, %v2877, %v2879
    %v2881 = vrot.slane %v2754, 2
    %v2882 = vsel %vm417, %v2879, %v2881
    %v2883 = vrot.slane %v2755, 2
    %v2884 = vsel %vm417, %v2881, %v2883
    %v2885 = vrot.slane %v2756, 2
    %v2886 = vsel %vm417, %v2883, %v2885
    %v2887 = vrot.slane %v2757, 2
    %v2888 = vrot.slane %v2758, 2
    %v2889 = vsel %vm417, %v2887, %v2888
    %v2890 = vrot.slane %v2759, 2
    %v2891 = vsel %vm417, %v2888, %v2890
    %v2892 = vrot.slane %v2760, 2
    %v2893 = vsel %vm417, %v2890, %v2892
    %v2894 = vrot.slane %v2761, 2
    %v2895 = vsel %vm417, %v2892, %v2894
    %v2896 = vrot.slane %v2762, 2
    %v2897 = vsel %vm417, %v2894, %v2896
    %v2898 = vrot.slane %v2763, 2
    %v2899 = vsel %vm417, %v2896, %v2898
    %v2900 = vrot.slane %v2764, 2
    %v2901 = vrot.slane %v2765, 2
    %v2902 = vsel %vm417, %v2900, %v2901
    %v2903 = vrot.slane %v2766, 2
    %v2904 = vsel %vm417, %v2901, %v2903
    %v2905 = vrot.slane %v2767, 2
    %v2906 = vsel %vm417, %v2903, %v2905
    %v2907 = vrot.slane %v2768, 2
    %v2908 = vsel %vm417, %v2905, %v2907
    %v2909 = vrot.slane %v2769, 2
    %v2910 = vsel %vm417, %v2907, %v2909
    %v2911 = vrot.slane %v2770, 2
    %v2912 = vsel %vm417, %v2909, %v2911
    %v2913 = vrot.slane %v2771, 2
    %v2914 = vrot.slane %v2772, 2
    %v2915 = vsel %vm417, %v2913, %v2914
    %v2916 = vrot.slane %v2773, 2
    %v2917 = vsel %vm417, %v2914, %v2916
    %v2918 = vrot.slane %v2774, 2
    %v2919 = vsel %vm417, %v2916, %v2918
    %v2920 = vrot.slane %v2775, 2
    %v2921 = vsel %vm417, %v2918, %v2920
    %v2922 = vrot.slane %v2776, 2
    %v2923 = vsel %vm417, %v2920, %v2922
    %v2924 = vrot.slane %v2777, 2
    %v2925 = vsel %vm417, %v2922, %v2924
    %v2926 = vrot.slane %v2778, 2
    %v2927 = vrot.slane %v2779, 2
    %v2928 = vsel %vm417, %v2926, %v2927
    %v2929 = vrot.slane %v2780, 2
    %v2930 = vsel %vm417, %v2927, %v2929
    %v2931 = vrot.slane %v2781, 2
    %v2932 = vsel %vm417, %v2929, %v2931
    %v2933 = vrot.slane %v2782, 2
    %v2934 = vsel %vm417, %v2931, %v2933
    %v2935 = vrot.slane %v2783, 2
    %v2936 = vsel %vm417, %v2933, %v2935
    %v2937 = vrot.slane %v2784, 2
    %v2938 = vsel %vm417, %v2935, %v2937
    %v2939 = vrot.slane %v2785, 2
    %v2940 = vrot.slane %v2786, 2
    %v2941 = vsel %vm417, %v2939, %v2940
    %v2942 = vrot.slane %v2787, 2
    %v2943 = vsel %vm417, %v2940, %v2942
    %v2944 = vrot.slane %v2788, 2
    %v2945 = vsel %vm417, %v2942, %v2944
    %v2946 = vrot.slane %v2789, 2
    %v2947 = vsel %vm417, %v2944, %v2946
    %v2948 = vrot.slane %v2790, 2
    %v2949 = vsel %vm417, %v2946, %v2948
    %v2950 = vrot.slane %v2791, 2
    %v2951 = vsel %vm417, %v2948, %v2950
    %v3000 = vmax.f32 %v2736, %v2850
    %v3001 = vmax.f32 %v2737, %v2852
    %v3002 = vmax.f32 %v2738, %v2854
    %v3003 = vmax.f32 %v2739, %v2856
    %v3004 = vmax.f32 %v2740, %v2858
    %v3005 = vmax.f32 %v2741, %v2860
    %v3006 = vmax.f32 %v2743, %v2863
    %v3007 = vmax.f32 %v2744, %v2865
    %v3008 = vmax.f32 %v2745, %v2867
    %v3009 = vmax.f32 %v2746, %v2869
    %v3010 = vmax.f32 %v2747, %v2871
    %v3011 = vmax.f32 %v2748, %v2873
    %v3012 = vmax.f32 %v2750, %v2876
    %v3013 = vmax.f32 %v2751, %v2878
    %v3014 = vmax.f32 %v2752, %v2880
    %v3015 = vmax.f32 %v2753, %v2882
    %v3016 = vmax.f32 %v2754, %v2884
    %v3017 = vmax.f32 %v2755, %v2886
    %v3018 = vmax.f32 %v2757, %v2889
    %v3019 = vmax.f32 %v2758, %v2891
    %v3020 = vmax.f32 %v2759, %v2893
    %v3021 = vmax.f32 %v2760, %v2895
    %v3022 = vmax.f32 %v2761, %v2897
    %v3023 = vmax.f32 %v2762, %v2899
    %v3024 = vmax.f32 %v2764, %v2902
    %v3025 = vmax.f32 %v2765, %v2904
    %v3026 = vmax.f32 %v2766, %v2906
    %v3027 = vmax.f32 %v2767, %v2908
    %v3028 = vmax.f32 %v2768, %v2910
    %v3029 = vmax.f32 %v2769, %v2912
    %v3030 = vmax.f32 %v2771, %v2915
    %v3031 = vmax.f32 %v2772, %v2917
    %v3032 = vmax.f32 %v2773, %v2919
    %v3033 = vmax.f32 %v2774, %v2921
    %v3034 = vmax.f32 %v2775, %v2923
    %v3035 = vmax.f32 %v2776, %v2925
    %v3036 = vmax.f32 %v2778, %v2928
    %v3037 = vmax.f32 %v2779, %v2930
    %v3038 = vmax.f32 %v2780, %v2932
    %v3039 = vmax.f32 %v2781, %v2934
    %v3040 = vmax.f32 %v2782, %v2936
    %v3041 = vmax.f32 %v2783, %v2938
    %v3042 = vmax.f32 %v2785, %v2941
    %v3043 = vmax.f32 %v2786, %v2943
    %v3044 = vmax.f32 %v2787, %v2945
    %v3045 = vmax.f32 %v2788, %v2947
    %v3046 = vmax.f32 %v2789, %v2949
    %v3047 = vmax.f32 %v2790, %v2951
    %v3096 = vrot.slane %v3000, 4
    %v3097 = vrot.slane %v3001, 4
    %v3098 = vsel %vm1503, %v3096, %v3097
    %v3099 = vrot.slane %v3002, 4
    %v3100 = vsel %vm1503, %v3097, %v3099
    %v3101 = vrot.slane %v3003, 4
    %v3102 = vsel %vm1503, %v3099, %v3101
    %v3103 = vrot.slane %v3004, 4
    %v3104 = vsel %vm1503, %v3101, %v3103
    %v3105 = vrot.slane %v3005, 4
    %v3106 = vsel %vm1503, %v3103, %v3105
    %v3107 = vrot.slane %v3006, 4
    %v3108 = vrot.slane %v3007, 4
    %v3109 = vsel %vm1503, %v3107, %v3108
    %v3110 = vrot.slane %v3008, 4
    %v3111 = vsel %vm1503, %v3108, %v3110
    %v3112 = vrot.slane %v3009, 4
    %v3113 = vsel %vm1503, %v3110, %v3112
    %v3114 = vrot.slane %v3010, 4
    %v3115 = vsel %vm1503, %v3112, %v3114
    %v3116 = vrot.slane %v3011, 4
    %v3117 = vsel %vm1503, %v3114, %v3116
    %v3118 = vrot.slane %v3012, 4
    %v3119 = vrot.slane %v3013, 4
    %v3120 = vsel %vm1503, %v3118, %v3119
    %v3121 = vrot.slane %v3014, 4
    %v3122 = vsel %vm1503, %v3119, %v3121
    %v3123 = vrot.slane %v3015, 4
    %v3124 = vsel %vm1503, %v3121, %v3123
    %v3125 = vrot.slane %v3016, 4
    %v3126 = vsel %vm1503, %v3123, %v3125
    %v3127 = vrot.slane %v3017, 4
    %v3128 = vsel %vm1503, %v3125, %v3127
    %v3129 = vrot.slane %v3018, 4
    %v3130 = vrot.slane %v3019, 4
    %v3131 = vsel %vm1503, %v3129, %v3130
    %v3132 = vrot.slane %v3020, 4
    %v3133 = vsel %vm1503, %v3130, %v3132
    %v3134 = vrot.slane %v3021, 4
    %v3135 = vsel %vm1503, %v3132, %v3134
    %v3136 = vrot.slane %v3022, 4
    %v3137 = vsel %vm1503, %v3134, %v3136
    %v3138 = vrot.slane %v3023, 4
    %v3139 = vsel %vm1503, %v3136, %v3138
    %v3140 = vrot.slane %v3024, 4
    %v3141 = vrot.slane %v3025, 4
    %v3142 = vsel %vm1503, %v3140, %v3141
    %v3143 = vrot.slane %v3026, 4
    %v3144 = vsel %vm1503, %v3141, %v3143
    %v3145 = vrot.slane %v3027, 4
    %v3146 = vsel %vm1503, %v3143, %v3145
    %v3147 = vrot.slane %v3028, 4
    %v3148 = vsel %vm1503, %v3145, %v3147
    %v3149 = vrot.slane %v3029, 4
    %v3150 = vsel %vm1503, %v3147, %v3149
    %v3151 = vrot.slane %v3030, 4
    %v3152 = vrot.slane %v3031, 4
    %v3153 = vsel %vm1503, %v3151, %v3152
    %v3154 = vrot.slane %v3032, 4
    %v3155 = vsel %vm1503, %v3152, %v3154
    %v3156 = vrot.slane %v3033, 4
    %v3157 = vsel %vm1503, %v3154, %v3156
    %v3158 = vrot.slane %v3034, 4
    %v3159 = vsel %vm1503, %v3156, %v3158
    %v3160 = vrot.slane %v3035, 4
    %v3161 = vsel %vm1503, %v3158, %v3160
    %v3162 = vrot.slane %v3036, 4
    %v3163 = vrot.slane %v3037, 4
    %v3164 = vsel %vm1503, %v3162, %v3163
    %v3165 = vrot.slane %v3038, 4
    %v3166 = vsel %vm1503, %v3163, %v3165
    %v3167 = vrot.slane %v3039, 4
    %v3168 = vsel %vm1503, %v3165, %v3167
    %v3169 = vrot.slane %v3040, 4
    %v3170 = vsel %vm1503, %v3167, %v3169
    %v3171 = vrot.slane %v3041, 4
    %v3172 = vsel %vm1503, %v3169, %v3171
    %v3173 = vrot.slane %v3042, 4
    %v3174 = vrot.slane %v3043, 4
    %v3175 = vsel %vm1503, %v3173, %v3174
    %v3176 = vrot.slane %v3044, 4
    %v3177 = vsel %vm1503, %v3174, %v3176
    %v3178 = vrot.slane %v3045, 4
    %v3179 = vsel %vm1503, %v3176, %v3178
    %v3180 = vrot.slane %v3046, 4
    %v3181 = vsel %vm1503, %v3178, %v3180
    %v3182 = vrot.slane %v3047, 4
    %v3183 = vsel %vm1503, %v3180, %v3182
    %3184 = vrot.lane.b32.xlu0 %v3098, 64
    %v3185 = vpop.permute.xlu0 %3184
    %3186 = vrot.lane.b32.xlu0 %v3100, 64
    %v3187 = vpop.permute.xlu0 %3186
    %3188 = vrot.lane.b32.xlu0 %v3102, 64
    %v3189 = vpop.permute.xlu0 %3188
    %3190 = vrot.lane.b32.xlu0 %v3104, 64
    %v3191 = vpop.permute.xlu0 %3190
    %3192 = vrot.lane.b32.xlu0 %v3106, 64
    %v3193 = vpop.permute.xlu0 %3192
    %3194 = vrot.lane.b32.xlu0 %v3109, 64
    %v3195 = vpop.permute.xlu0 %3194
    %3196 = vrot.lane.b32.xlu0 %v3111, 64
    %v3197 = vpop.permute.xlu0 %3196
    %3198 = vrot.lane.b32.xlu0 %v3113, 64
    %v3199 = vpop.permute.xlu0 %3198
    %3200 = vrot.lane.b32.xlu0 %v3115, 64
    %v3201 = vpop.permute.xlu0 %3200
    %3202 = vrot.lane.b32.xlu0 %v3117, 64
    %v3203 = vpop.permute.xlu0 %3202
    %3204 = vrot.lane.b32.xlu0 %v3120, 64
    %v3205 = vpop.permute.xlu0 %3204
    %3206 = vrot.lane.b32.xlu0 %v3122, 64
    %v3207 = vpop.permute.xlu0 %3206
    %3208 = vrot.lane.b32.xlu0 %v3124, 64
    %v3209 = vpop.permute.xlu0 %3208
    %3210 = vrot.lane.b32.xlu0 %v3126, 64
    %v3211 = vpop.permute.xlu0 %3210
    %3212 = vrot.lane.b32.xlu0 %v3128, 64
    %v3213 = vpop.permute.xlu0 %3212
    %3214 = vrot.lane.b32.xlu0 %v3131, 64
    %v3215 = vpop.permute.xlu0 %3214
    %3216 = vrot.lane.b32.xlu0 %v3133, 64
    %v3217 = vpop.permute.xlu0 %3216
    %3218 = vrot.lane.b32.xlu0 %v3135, 64
    %v3219 = vpop.permute.xlu0 %3218
    %3220 = vrot.lane.b32.xlu0 %v3137, 64
    %v3221 = vpop.permute.xlu0 %3220
    %3222 = vrot.lane.b32.xlu0 %v3139, 64
    %v3223 = vpop.permute.xlu0 %3222
    %3224 = vrot.lane.b32.xlu0 %v3142, 64
    %v3225 = vpop.permute.xlu0 %3224
    %3226 = vrot.lane.b32.xlu0 %v3144, 64
    %v3227 = vpop.permute.xlu0 %3226
    %3228 = vrot.lane.b32.xlu0 %v3146, 64
    %v3229 = vpop.permute.xlu0 %3228
    %3230 = vrot.lane.b32.xlu0 %v3148, 64
    %v3231 = vpop.permute.xlu0 %3230
    %3232 = vrot.lane.b32.xlu0 %v3150, 64
    %v3233 = vpop.permute.xlu0 %3232
    %3234 = vrot.lane.b32.xlu0 %v3153, 64
    %v3235 = vpop.permute.xlu0 %3234
    %3236 = vrot.lane.b32.xlu0 %v3155, 64
    %v3237 = vpop.permute.xlu0 %3236
    %3238 = vrot.lane.b32.xlu0 %v3157, 64
    %v3239 = vpop.permute.xlu0 %3238
    %3240 = vrot.lane.b32.xlu0 %v3159, 64
    %v3241 = vpop.permute.xlu0 %3240
    %3242 = vrot.lane.b32.xlu0 %v3161, 64
    %v3243 = vpop.permute.xlu0 %3242
    %3244 = vrot.lane.b32.xlu0 %v3164, 64
    %v3245 = vpop.permute.xlu0 %3244
    %3246 = vrot.lane.b32.xlu0 %v3166, 64
    %v3247 = vpop.permute.xlu0 %3246
    %3248 = vrot.lane.b32.xlu0 %v3168, 64
    %v3249 = vpop.permute.xlu0 %3248
    %3250 = vrot.lane.b32.xlu0 %v3170, 64
    %v3251 = vpop.permute.xlu0 %3250
    %3252 = vrot.lane.b32.xlu0 %v3172, 64
    %v3253 = vpop.permute.xlu0 %3252
    %3254 = vrot.lane.b32.xlu0 %v3175, 64
    %v3255 = vpop.permute.xlu0 %3254
    %3256 = vrot.lane.b32.xlu0 %v3177, 64
    %v3257 = vpop.permute.xlu0 %3256
    %3258 = vrot.lane.b32.xlu0 %v3179, 64
    %v3259 = vpop.permute.xlu0 %3258
    %3260 = vrot.lane.b32.xlu0 %v3181, 64
    %v3261 = vpop.permute.xlu0 %3260
    %3262 = vrot.lane.b32.xlu0 %v3183, 64
    %v3263 = vpop.permute.xlu0 %3262
    %v3304 = vsel %vm2138, %v3000, %v3185
    %v3305 = vsel %vm2138, %v3001, %v3187
    %v3306 = vsel %vm2138, %v3002, %v3189
    %v3307 = vsel %vm2138, %v3003, %v3191
    %v3308 = vsel %vm2138, %v3004, %v3193
    %v3309 = vsel %vm2138, %v3006, %v3195
    %v3310 = vsel %vm2138, %v3007, %v3197
    %v3311 = vsel %vm2138, %v3008, %v3199
    %v3312 = vsel %vm2138, %v3009, %v3201
    %v3313 = vsel %vm2138, %v3010, %v3203
    %v3314 = vsel %vm2138, %v3012, %v3205
    %v3315 = vsel %vm2138, %v3013, %v3207
    %v3316 = vsel %vm2138, %v3014, %v3209
    %v3317 = vsel %vm2138, %v3015, %v3211
    %v3318 = vsel %vm2138, %v3016, %v3213
    %v3319 = vsel %vm2138, %v3018, %v3215
    %v3320 = vsel %vm2138, %v3019, %v3217
    %v3321 = vsel %vm2138, %v3020, %v3219
    %v3322 = vsel %vm2138, %v3021, %v3221
    %v3323 = vsel %vm2138, %v3022, %v3223
    %v3324 = vsel %vm2138, %v3024, %v3225
    %v3325 = vsel %vm2138, %v3025, %v3227
    %v3326 = vsel %vm2138, %v3026, %v3229
    %v3327 = vsel %vm2138, %v3027, %v3231
    %v3328 = vsel %vm2138, %v3028, %v3233
    %v3329 = vsel %vm2138, %v3030, %v3235
    %v3330 = vsel %vm2138, %v3031, %v3237
    %v3331 = vsel %vm2138, %v3032, %v3239
    %v3332 = vsel %vm2138, %v3033, %v3241
    %v3333 = vsel %vm2138, %v3034, %v3243
    %v3334 = vsel %vm2138, %v3036, %v3245
    %v3335 = vsel %vm2138, %v3037, %v3247
    %v3336 = vsel %vm2138, %v3038, %v3249
    %v3337 = vsel %vm2138, %v3039, %v3251
    %v3338 = vsel %vm2138, %v3040, %v3253
    %v3339 = vsel %vm2138, %v3042, %v3255
    %v3340 = vsel %vm2138, %v3043, %v3257
    %v3341 = vsel %vm2138, %v3044, %v3259
    %v3342 = vsel %vm2138, %v3045, %v3261
    %v3343 = vsel %vm2138, %v3046, %v3263
    %v3344 = vpack.c.bf16 %v3305, %v3304
    %v3345 = vpack.c.bf16 %v3002, %v3001
    %v3346 = vpack.c.bf16 %v3307, %v3306
    %v3347 = vpack.c.bf16 %v3004, %v3003
    %v3348 = vpack.c.bf16 %v3309, %v3308
    %v3349 = vpack.c.bf16 %v3007, %v3005
    %v3350 = vpack.c.bf16 %v3311, %v3310
    %v3351 = vpack.c.bf16 %v3009, %v3008
    %v3352 = vpack.c.bf16 %v3313, %v3312
    %v3353 = vpack.c.bf16 %v3011, %v3010
    %v3354 = vpack.c.bf16 %v3315, %v3314
    %v3355 = vpack.c.bf16 %v3014, %v3013
    %v3356 = vpack.c.bf16 %v3317, %v3316
    %v3357 = vpack.c.bf16 %v3016, %v3015
    %v3358 = vpack.c.bf16 %v3319, %v3318
    %v3359 = vpack.c.bf16 %v3019, %v3017
    %v3360 = vpack.c.bf16 %v3321, %v3320
    %v3361 = vpack.c.bf16 %v3021, %v3020
    %v3362 = vpack.c.bf16 %v3323, %v3322
    %v3363 = vpack.c.bf16 %v3023, %v3022
    %v3364 = vpack.c.bf16 %v3325, %v3324
    %v3365 = vpack.c.bf16 %v3026, %v3025
    %v3366 = vpack.c.bf16 %v3327, %v3326
    %v3367 = vpack.c.bf16 %v3028, %v3027
    %v3368 = vpack.c.bf16 %v3329, %v3328
    %v3369 = vpack.c.bf16 %v3031, %v3029
    %v3370 = vpack.c.bf16 %v3331, %v3330
    %v3371 = vpack.c.bf16 %v3033, %v3032
    %v3372 = vpack.c.bf16 %v3333, %v3332
    %v3373 = vpack.c.bf16 %v3035, %v3034
    %v3374 = vpack.c.bf16 %v3335, %v3334
    %v3375 = vpack.c.bf16 %v3038, %v3037
    %v3376 = vpack.c.bf16 %v3337, %v3336
    %v3377 = vpack.c.bf16 %v3040, %v3039
    %v3378 = vpack.c.bf16 %v3339, %v3338
    %v3379 = vpack.c.bf16 %v3043, %v3041
    %v3380 = vpack.c.bf16 %v3341, %v3340
    %v3381 = vpack.c.bf16 %v3045, %v3044
    %v3382 = vpack.c.bf16 %v3343, %v3342
    %v3383 = vpack.c.bf16 %v3047, %v3046
    %v3384 = vld [vmem:[%s5] sm:$0xf]
    %v3385 = vld [vmem:[%s5 + $0x4] sm:$0xf]
    %v3386 = vld [vmem:[%s5 + $0x8] sm:$0xf]
    %v3387 = vld [vmem:[%s5 + $0xc] sm:$0xf]
    %v3388 = vld [vmem:[%s5 + $0x10] sm:$0xf]
    %v3389 = vld [vmem:[%s5 + $0x14] sm:$0xf]
    %v3390 = vld [vmem:[%s5 + $0x18] sm:$0xf]
    %v3391 = vld [vmem:[%s5 + $0x1c] sm:$0xf]
    %v3392 = vld [vmem:[%s5 + $0x20] sm:$0xf]
    %v3393 = vld [vmem:[%s5 + $0x24] sm:$0xf]
    %v3394 = vld [vmem:[%s5 + $0x28] sm:$0xf]
    %v3395 = vld [vmem:[%s5 + $0x2c] sm:$0xf]
    %v3396 = vld [vmem:[%s5 + $0x30] sm:$0xf]
    %v3397 = vld [vmem:[%s5 + $0x34] sm:$0xf]
    %v3398 = vld [vmem:[%s5 + $0x38] sm:$0xf]
    %v3399 = vld [vmem:[%s5 + $0x3c] sm:$0xf]
    %v3400 = vld [vmem:[%s5 + $0x40] sm:$0xf]
    %v3401 = vld [vmem:[%s5 + $0x44] sm:$0xf]
    %v3402 = vld [vmem:[%s5 + $0x48] sm:$0xf]
    %v3403 = vld [vmem:[%s5 + $0x4c] sm:$0xf]
    %v3404 = vld [vmem:[%s5 + $0x50] sm:$0xf]
    %v3405 = vld [vmem:[%s5 + $0x54] sm:$0xf]
    %v3406 = vld [vmem:[%s5 + $0x58] sm:$0xf]
    %v3407 = vld [vmem:[%s5 + $0x5c] sm:$0xf]
    %v3408 = vld [vmem:[%s6] sm:$0x1]
    %v3410 = vlaneseq
    %v3411 = vshrl.u32 %v3410, 7
    %v3412 = vsub.s32 0, %v3411
    %v3413 = vrot.slane %v3408, %v3412
    %v3439 = vunpack.c.l.b16 %v3384
    %v3440 = vunpack.c.l.b16 %v3385
    %v3441 = vunpack.c.l.b16 %v3386
    %v3442 = vunpack.c.l.b16 %v3387
    %v3443 = vunpack.c.l.b16 %v3388
    %v3444 = vunpack.c.l.b16 %v3389
    %v3445 = vunpack.c.l.b16 %v3390
    %v3446 = vunpack.c.l.b16 %v3391
    %v3447 = vunpack.c.l.b16 %v3392
    %v3448 = vunpack.c.l.b16 %v3393
    %v3449 = vunpack.c.l.b16 %v3394
    %v3450 = vunpack.c.l.b16 %v3395
    %v3451 = vunpack.c.l.b16 %v3396
    %v3452 = vunpack.c.l.b16 %v3397
    %v3453 = vunpack.c.l.b16 %v3398
    %v3454 = vunpack.c.l.b16 %v3399
    %v3455 = vunpack.c.l.b16 %v3400
    %v3456 = vunpack.c.l.b16 %v3401
    %v3457 = vunpack.c.l.b16 %v3402
    %v3458 = vunpack.c.l.b16 %v3403
    %v3459 = vunpack.c.l.b16 %v3404
    %v3460 = vunpack.c.l.b16 %v3405
    %v3461 = vunpack.c.l.b16 %v3406
    %v3462 = vunpack.c.l.b16 %v3407
    %v3463 = vpack.c.b16 %v3440, %v3439
    %v3464 = vpack.c.b16 %v3442, %v3441
    %v3465 = vpack.c.b16 %v3444, %v3443
    %v3466 = vpack.c.b16 %v3446, %v3445
    %v3467 = vpack.c.b16 %v3448, %v3447
    %v3468 = vpack.c.b16 %v3450, %v3449
    %v3469 = vpack.c.b16 %v3452, %v3451
    %v3470 = vpack.c.b16 %v3454, %v3453
    %v3471 = vpack.c.b16 %v3456, %v3455
    %v3472 = vpack.c.b16 %v3458, %v3457
    %v3473 = vpack.c.b16 %v3460, %v3459
    %v3474 = vpack.c.b16 %v3462, %v3461
    %v3488 = vsel %vm2138, %v3345, 0
    %v3491 = vsel %vm2138, %v3347, 0
    %v3494 = vsel %vm2138, %v3349, 0
    %v3497 = vsel %vm2138, %v3351, 0
    %v3500 = vsel %vm2138, %v3353, 0
    %v3503 = vsel %vm2138, %v3355, 0
    %v3506 = vsel %vm2138, %v3357, 0
    %v3509 = vsel %vm2138, %v3359, 0
    %v3512 = vsel %vm2138, %v3361, 0
    %v3515 = vsel %vm2138, %v3363, 0
    %v3518 = vsel %vm2138, %v3365, 0
    %v3521 = vsel %vm2138, %v3367, 0
    %v3524 = vsel %vm2138, %v3369, 0
    %v3527 = vsel %vm2138, %v3371, 0
    %v3530 = vsel %vm2138, %v3373, 0
    %v3533 = vsel %vm2138, %v3375, 0
    %v3536 = vsel %vm2138, %v3377, 0
    %v3539 = vsel %vm2138, %v3379, 0
    %v3542 = vsel %vm2138, %v3381, 0
    %v3545 = vsel %vm2138, %v3383, 0
    %3547 = vmatprep.subr.bf16.mxu0 0
    %3548 = vmatpush1.bf16.msra.mxu0 %v3470
    %3549 = vmatprep.subr.bf16.mxu0 0
    %3550 = vmatpush1.bf16.msra.mxu0 %v3469
    %3551 = vmatprep.subr.bf16.mxu0 0
    %3552 = vmatpush1.bf16.msra.mxu0 %v3468
    %3553 = vmatprep.subr.bf16.mxu0 0
    %3554 = vmatpush1.bf16.msra.mxu0 %v3467
    %3555 = vmatprep.subr.bf16.mxu0 0
    %3556 = vmatpush1.bf16.msra.mxu0 %v3466
    %3557 = vmatprep.subr.bf16.mxu0 0
    %3558 = vmatpush1.bf16.msra.mxu0 %v3465
    %3559 = vmatprep.subr.bf16.mxu0 0
    %3560 = vmatpush1.bf16.msra.mxu0 %v3464
    %3561 = vmatprep.subr.bf16.mxu0 0
    %3562 = vmatpush1.bf16.msra.mxu0 %v3463
    %3563 = vmatprep.subr.bf16.mxu0 0
    %3564 = vmatpush2.bf16.msra.mxu0 0
    %3565 = vmatprep.subr.bf16.mxu0 0
    %3566 = vmatpush2.bf16.msra.mxu0 0
    %3567 = vmatprep.subr.bf16.mxu0 0
    %3568 = vmatpush2.bf16.msra.mxu0 0
    %3569 = vmatprep.subr.bf16.mxu0 0
    %3570 = vmatpush2.bf16.msra.mxu0 0
    %3571 = vmatprep.subr.bf16.mxu0 0
    %3572 = vmatpush2.bf16.msra.mxu0 %v3474
    %3573 = vmatprep.subr.bf16.mxu0 0
    %3574 = vmatpush2.bf16.msra.mxu0 %v3473
    %3575 = vmatprep.subr.bf16.mxu0 0
    %3576 = vmatpush2.bf16.msra.mxu0 %v3472
    %3577 = vmatprep.subr.bf16.mxu0 0
    %3578 = vmatpush2.bf16.msra.mxu0 %v3471
    %3579 = vmatprep.mubr.bf16.mxu0 %v3488
    %3580 = vmatmul.mubr.bf16.gmra.mxu0 %v3344
    %v3581 = vpop.f32.mrf.mxu0
    %v3582 = vadd.f32 %v3413, %v3581
    %v3583 = vpop.f32.mrf.mxu0
    %v3584 = vpop.f32.mrf.mxu0
    %v3585 = vadd.f32 %v3413, %v3584
    %v3586 = vpop.f32.mrf.mxu0
    %3587 = vmatprep.mubr.bf16.mxu0 %v3491
    %3588 = vmatmul.mubr.bf16.gmra.mxu0 %v3346
    %v3589 = vpop.f32.mrf.mxu0
    %v3590 = vadd.f32 %v3413, %v3589
    %v3591 = vpop.f32.mrf.mxu0
    %v3592 = vpop.f32.mrf.mxu0
    %v3593 = vadd.f32 %v3413, %v3592
    %v3594 = vpop.f32.mrf.mxu0
    %3595 = vmatprep.mubr.bf16.mxu0 %v3494
    %3596 = vmatmul.mubr.bf16.gmra.mxu0 %v3348
    %v3597 = vpop.f32.mrf.mxu0
    %v3598 = vadd.f32 %v3413, %v3597
    %v3599 = vpop.f32.mrf.mxu0
    %v3600 = vpop.f32.mrf.mxu0
    %v3601 = vadd.f32 %v3413, %v3600
    %v3602 = vpop.f32.mrf.mxu0
    %3603 = vmatprep.mubr.bf16.mxu0 %v3497
    %3604 = vmatmul.mubr.bf16.gmra.mxu0 %v3350
    %v3605 = vpop.f32.mrf.mxu0
    %v3606 = vadd.f32 %v3413, %v3605
    %v3607 = vpop.f32.mrf.mxu0
    %v3608 = vpop.f32.mrf.mxu0
    %v3609 = vadd.f32 %v3413, %v3608
    %v3610 = vpop.f32.mrf.mxu0
    %3611 = vmatprep.mubr.bf16.mxu0 %v3500
    %3612 = vmatmul.mubr.bf16.gmra.mxu0 %v3352
    %v3613 = vpop.f32.mrf.mxu0
    %v3614 = vadd.f32 %v3413, %v3613
    %v3615 = vpop.f32.mrf.mxu0
    %v3616 = vpop.f32.mrf.mxu0
    %v3617 = vadd.f32 %v3413, %v3616
    %v3618 = vpop.f32.mrf.mxu0
    %3619 = vmatprep.mubr.bf16.mxu0 %v3503
    %3620 = vmatmul.mubr.bf16.gmra.mxu0 %v3354
    %v3621 = vpop.f32.mrf.mxu0
    %v3622 = vadd.f32 %v3413, %v3621
    %v3623 = vpop.f32.mrf.mxu0
    %v3624 = vpop.f32.mrf.mxu0
    %v3625 = vadd.f32 %v3413, %v3624
    %v3626 = vpop.f32.mrf.mxu0
    %3627 = vmatprep.mubr.bf16.mxu0 %v3506
    %3628 = vmatmul.mubr.bf16.gmra.mxu0 %v3356
    %v3629 = vpop.f32.mrf.mxu0
    %v3630 = vadd.f32 %v3413, %v3629
    %v3631 = vpop.f32.mrf.mxu0
    %v3632 = vpop.f32.mrf.mxu0
    %v3633 = vadd.f32 %v3413, %v3632
    %v3634 = vpop.f32.mrf.mxu0
    %3635 = vmatprep.mubr.bf16.mxu0 %v3509
    %3636 = vmatmul.mubr.bf16.gmra.mxu0 %v3358
    %v3637 = vpop.f32.mrf.mxu0
    %v3638 = vadd.f32 %v3413, %v3637
    %v3639 = vpop.f32.mrf.mxu0
    %v3640 = vpop.f32.mrf.mxu0
    %v3641 = vadd.f32 %v3413, %v3640
    %v3642 = vpop.f32.mrf.mxu0
    %3643 = vmatprep.mubr.bf16.mxu0 %v3512
    %3644 = vmatmul.mubr.bf16.gmra.mxu0 %v3360
    %v3645 = vpop.f32.mrf.mxu0
    %v3646 = vadd.f32 %v3413, %v3645
    %v3647 = vpop.f32.mrf.mxu0
    %v3648 = vpop.f32.mrf.mxu0
    %v3649 = vadd.f32 %v3413, %v3648
    %v3650 = vpop.f32.mrf.mxu0
    %3651 = vmatprep.mubr.bf16.mxu0 %v3515
    %3652 = vmatmul.mubr.bf16.gmra.mxu0 %v3362
    %v3653 = vpop.f32.mrf.mxu0
    %v3654 = vadd.f32 %v3413, %v3653
    %v3655 = vpop.f32.mrf.mxu0
    %v3656 = vpop.f32.mrf.mxu0
    %v3657 = vadd.f32 %v3413, %v3656
    %v3658 = vpop.f32.mrf.mxu0
    %3659 = vmatprep.mubr.bf16.mxu0 %v3518
    %3660 = vmatmul.mubr.bf16.gmra.mxu0 %v3364
    %v3661 = vpop.f32.mrf.mxu0
    %v3662 = vadd.f32 %v3413, %v3661
    %v3663 = vpop.f32.mrf.mxu0
    %v3664 = vpop.f32.mrf.mxu0
    %v3665 = vadd.f32 %v3413, %v3664
    %v3666 = vpop.f32.mrf.mxu0
    %3667 = vmatprep.mubr.bf16.mxu0 %v3521
    %3668 = vmatmul.mubr.bf16.gmra.mxu0 %v3366
    %v3669 = vpop.f32.mrf.mxu0
    %v3670 = vadd.f32 %v3413, %v3669
    %v3671 = vpop.f32.mrf.mxu0
    %v3672 = vpop.f32.mrf.mxu0
    %v3673 = vadd.f32 %v3413, %v3672
    %v3674 = vpop.f32.mrf.mxu0
    %3675 = vmatprep.mubr.bf16.mxu0 %v3524
    %3676 = vmatmul.mubr.bf16.gmra.mxu0 %v3368
    %v3677 = vpop.f32.mrf.mxu0
    %v3678 = vadd.f32 %v3413, %v3677
    %v3679 = vpop.f32.mrf.mxu0
    %v3680 = vpop.f32.mrf.mxu0
    %v3681 = vadd.f32 %v3413, %v3680
    %v3682 = vpop.f32.mrf.mxu0
    %3683 = vmatprep.mubr.bf16.mxu0 %v3527
    %3684 = vmatmul.mubr.bf16.gmra.mxu0 %v3370
    %v3685 = vpop.f32.mrf.mxu0
    %v3686 = vadd.f32 %v3413, %v3685
    %v3687 = vpop.f32.mrf.mxu0
    %v3688 = vpop.f32.mrf.mxu0
    %v3689 = vadd.f32 %v3413, %v3688
    %v3690 = vpop.f32.mrf.mxu0
    %3691 = vmatprep.mubr.bf16.mxu0 %v3530
    %3692 = vmatmul.mubr.bf16.gmra.mxu0 %v3372
    %v3693 = vpop.f32.mrf.mxu0
    %v3694 = vadd.f32 %v3413, %v3693
    %v3695 = vpop.f32.mrf.mxu0
    %v3696 = vpop.f32.mrf.mxu0
    %v3697 = vadd.f32 %v3413, %v3696
    %v3698 = vpop.f32.mrf.mxu0
    %3699 = vmatprep.mubr.bf16.mxu0 %v3533
    %3700 = vmatmul.mubr.bf16.gmra.mxu0 %v3374
    %v3701 = vpop.f32.mrf.mxu0
    %v3702 = vadd.f32 %v3413, %v3701
    %v3703 = vpop.f32.mrf.mxu0
    %v3704 = vpop.f32.mrf.mxu0
    %v3705 = vadd.f32 %v3413, %v3704
    %v3706 = vpop.f32.mrf.mxu0
    %3707 = vmatprep.mubr.bf16.mxu0 %v3536
    %3708 = vmatmul.mubr.bf16.gmra.mxu0 %v3376
    %v3709 = vpop.f32.mrf.mxu0
    %v3710 = vadd.f32 %v3413, %v3709
    %v3711 = vpop.f32.mrf.mxu0
    %v3712 = vpop.f32.mrf.mxu0
    %v3713 = vadd.f32 %v3413, %v3712
    %v3714 = vpop.f32.mrf.mxu0
    %3715 = vmatprep.mubr.bf16.mxu0 %v3539
    %3716 = vmatmul.mubr.bf16.gmra.mxu0 %v3378
    %v3717 = vpop.f32.mrf.mxu0
    %v3718 = vadd.f32 %v3413, %v3717
    %v3719 = vpop.f32.mrf.mxu0
    %v3720 = vpop.f32.mrf.mxu0
    %v3721 = vadd.f32 %v3413, %v3720
    %v3722 = vpop.f32.mrf.mxu0
    %3723 = vmatprep.mubr.bf16.mxu0 %v3542
    %3724 = vmatmul.mubr.bf16.gmra.mxu0 %v3380
    %v3725 = vpop.f32.mrf.mxu0
    %v3726 = vadd.f32 %v3413, %v3725
    %v3727 = vpop.f32.mrf.mxu0
    %v3728 = vpop.f32.mrf.mxu0
    %v3729 = vadd.f32 %v3413, %v3728
    %v3730 = vpop.f32.mrf.mxu0
    %3731 = vmatprep.mubr.bf16.mxu0 %v3545
    %3732 = vmatmul.mubr.bf16.gmra.mxu0 %v3382
    %v3733 = vpop.f32.mrf.mxu0
    %v3734 = vadd.f32 %v3413, %v3733
    %v3735 = vpop.f32.mrf.mxu0
    %v3736 = vpop.f32.mrf.mxu0
    %v3737 = vadd.f32 %v3413, %v3736
    %v3738 = vpop.f32.mrf.mxu0
    %3739 = vdwg.mxu0
    %v3740 = vmax.f32 %v3582, 0.0
    %v3741 = vmax.f32 %v3585, 0.0
    %v3742 = vmax.f32 %v3590, 0.0
    %v3743 = vmax.f32 %v3593, 0.0
    %v3744 = vmax.f32 %v3598, 0.0
    %v3745 = vmax.f32 %v3601, 0.0
    %v3746 = vmax.f32 %v3606, 0.0
    %v3747 = vmax.f32 %v3609, 0.0
    %v3748 = vmax.f32 %v3614, 0.0
    %v3749 = vmax.f32 %v3617, 0.0
    %v3750 = vmax.f32 %v3622, 0.0
    %v3751 = vmax.f32 %v3625, 0.0
    %v3752 = vmax.f32 %v3630, 0.0
    %v3753 = vmax.f32 %v3633, 0.0
    %v3754 = vmax.f32 %v3638, 0.0
    %v3755 = vmax.f32 %v3641, 0.0
    %v3756 = vmax.f32 %v3646, 0.0
    %v3757 = vmax.f32 %v3649, 0.0
    %v3758 = vmax.f32 %v3654, 0.0
    %v3759 = vmax.f32 %v3657, 0.0
    %v3760 = vmax.f32 %v3662, 0.0
    %v3761 = vmax.f32 %v3665, 0.0
    %v3762 = vmax.f32 %v3670, 0.0
    %v3763 = vmax.f32 %v3673, 0.0
    %v3764 = vmax.f32 %v3678, 0.0
    %v3765 = vmax.f32 %v3681, 0.0
    %v3766 = vmax.f32 %v3686, 0.0
    %v3767 = vmax.f32 %v3689, 0.0
    %v3768 = vmax.f32 %v3694, 0.0
    %v3769 = vmax.f32 %v3697, 0.0
    %v3770 = vmax.f32 %v3702, 0.0
    %v3771 = vmax.f32 %v3705, 0.0
    %v3772 = vmax.f32 %v3710, 0.0
    %v3773 = vmax.f32 %v3713, 0.0
    %v3774 = vmax.f32 %v3718, 0.0
    %v3775 = vmax.f32 %v3721, 0.0
    %v3776 = vmax.f32 %v3726, 0.0
    %v3777 = vmax.f32 %v3729, 0.0
    %v3778 = vmax.f32 %v3734, 0.0
    %v3779 = vmax.f32 %v3737, 0.0
    %v3780 = vlaneseq
    %v3781 = vshrl.u32 %v3780, 7
    %v3782 = vadd.s32 %v3781, 8
    %v3783 = vadd.s32 %v3781, 16
    %v3784 = vadd.s32 %v3781, 24
    %v3785 = vadd.s32 %v3781, 32
    %v3786 = vand.u32 %v3781, 3
    %v3787 = vand.u32 %v3782, 3
    %v3788 = vand.u32 %v3783, 3
    %v3789 = vand.u32 %v3784, 3
    %v3790 = vand.u32 %v3785, 3
    %vm3791 = vcmp.eq.s32.totalorder %v3786, 0
    %vm3792 = vcmp.eq.s32.totalorder %v3787, 0
    %vm3793 = vcmp.eq.s32.totalorder %v3788, 0
    %vm3794 = vcmp.eq.s32.totalorder %v3789, 0
    %vm3795 = vcmp.eq.s32.totalorder %v3790, 0
    %v3796 = vsel %vm3791, 1, 0
    %v3797 = vsel %vm3792, 1, 0
    %v3798 = vsel %vm3793, 1, 0
    %v3799 = vsel %vm3794, 1, 0
    %v3800 = vsel %vm3795, 1, 0
    %vm3801 = vcmp.eq.s32.totalorder %v3796, 1
    %vm3802 = vcmp.eq.s32.totalorder %v3797, 1
    %vm3803 = vcmp.eq.s32.totalorder %v3798, 1
    %vm3804 = vcmp.eq.s32.totalorder %v3799, 1
    %vm3805 = vcmp.eq.s32.totalorder %v3800, 1
    %v3806 = vsel %vm3801, %v3740, 0.0
    %v3807 = vsel %vm3802, %v3741, 0.0
    %v3808 = vsel %vm3803, %v3742, 0.0
    %v3809 = vsel %vm3804, %v3743, 0.0
    %v3810 = vsel %vm3805, %v3744, 0.0
    %v3811 = vsel %vm3801, %v3745, 0.0
    %v3812 = vsel %vm3802, %v3746, 0.0
    %v3813 = vsel %vm3803, %v3747, 0.0
    %v3814 = vsel %vm3804, %v3748, 0.0
    %v3815 = vsel %vm3805, %v3749, 0.0
    %v3816 = vsel %vm3801, %v3750, 0.0
    %v3817 = vsel %vm3802, %v3751, 0.0
    %v3818 = vsel %vm3803, %v3752, 0.0
    %v3819 = vsel %vm3804, %v3753, 0.0
    %v3820 = vsel %vm3805, %v3754, 0.0
    %v3821 = vsel %vm3801, %v3755, 0.0
    %v3822 = vsel %vm3802, %v3756, 0.0
    %v3823 = vsel %vm3803, %v3757, 0.0
    %v3824 = vsel %vm3804, %v3758, 0.0
    %v3825 = vsel %vm3805, %v3759, 0.0
    %v3826 = vsel %vm3801, %v3760, 0.0
    %v3827 = vsel %vm3802, %v3761, 0.0
    %v3828 = vsel %vm3803, %v3762, 0.0
    %v3829 = vsel %vm3804, %v3763, 0.0
    %v3830 = vsel %vm3805, %v3764, 0.0
    %v3831 = vsel %vm3801, %v3765, 0.0
    %v3832 = vsel %vm3802, %v3766, 0.0
    %v3833 = vsel %vm3803, %v3767, 0.0
    %v3834 = vsel %vm3804, %v3768, 0.0
    %v3835 = vsel %vm3805, %v3769, 0.0
    %v3836 = vsel %vm3801, %v3770, 0.0
    %v3837 = vsel %vm3802, %v3771, 0.0
    %v3838 = vsel %vm3803, %v3772, 0.0
    %v3839 = vsel %vm3804, %v3773, 0.0
    %v3840 = vsel %vm3805, %v3774, 0.0
    %v3841 = vsel %vm3801, %v3775, 0.0
    %v3842 = vsel %vm3802, %v3776, 0.0
    %v3843 = vsel %vm3803, %v3777, 0.0
    %v3844 = vsel %vm3804, %v3778, 0.0
    %v3845 = vsel %vm3805, %v3779, 0.0
    %v3846 = vadd.f32 %v3806, %v3807
    %v3847 = vadd.f32 %v3846, %v3808
    %v3848 = vadd.f32 %v3847, %v3809
    %v3849 = vadd.f32 %v3848, %v3810
    %v3850 = vrot.slane %v3849, 4
    %v3851 = vadd.f32 %v3849, %v3850
    %v3852 = vrot.slane %v3851, 2
    %v3853 = vadd.f32 %v3851, %v3852
    %v3854 = vrot.slane %v3853, 1
    %v3855 = vadd.f32 %v3853, %v3854
    %v3856 = vadd.f32 %v3811, %v3812
    %v3857 = vadd.f32 %v3856, %v3813
    %v3858 = vadd.f32 %v3857, %v3814
    %v3859 = vadd.f32 %v3858, %v3815
    %v3860 = vrot.slane %v3859, 4
    %v3861 = vadd.f32 %v3859, %v3860
    %v3862 = vrot.slane %v3861, 2
    %v3863 = vadd.f32 %v3861, %v3862
    %v3864 = vrot.slane %v3863, 1
    %v3865 = vadd.f32 %v3863, %v3864
    %v3866 = vadd.f32 %v3816, %v3817
    %v3867 = vadd.f32 %v3866, %v3818
    %v3868 = vadd.f32 %v3867, %v3819
    %v3869 = vadd.f32 %v3868, %v3820
    %v3870 = vrot.slane %v3869, 4
    %v3871 = vadd.f32 %v3869, %v3870
    %v3872 = vrot.slane %v3871, 2
    %v3873 = vadd.f32 %v3871, %v3872
    %v3874 = vrot.slane %v3873, 1
    %v3875 = vadd.f32 %v3873, %v3874
    %v3876 = vadd.f32 %v3821, %v3822
    %v3877 = vadd.f32 %v3876, %v3823
    %v3878 = vadd.f32 %v3877, %v3824
    %v3879 = vadd.f32 %v3878, %v3825
    %v3880 = vrot.slane %v3879, 4
    %v3881 = vadd.f32 %v3879, %v3880
    %v3882 = vrot.slane %v3881, 2
    %v3883 = vadd.f32 %v3881, %v3882
    %v3884 = vrot.slane %v3883, 1
    %v3885 = vadd.f32 %v3883, %v3884
    %v3886 = vadd.f32 %v3826, %v3827
    %v3887 = vadd.f32 %v3886, %v3828
    %v3888 = vadd.f32 %v3887, %v3829
    %v3889 = vadd.f32 %v3888, %v3830
    %v3890 = vrot.slane %v3889, 4
    %v3891 = vadd.f32 %v3889, %v3890
    %v3892 = vrot.slane %v3891, 2
    %v3893 = vadd.f32 %v3891, %v3892
    %v3894 = vrot.slane %v3893, 1
    %v3895 = vadd.f32 %v3893, %v3894
    %v3896 = vadd.f32 %v3831, %v3832
    %v3897 = vadd.f32 %v3896, %v3833
    %v3898 = vadd.f32 %v3897, %v3834
    %v3899 = vadd.f32 %v3898, %v3835
    %v3900 = vrot.slane %v3899, 4
    %v3901 = vadd.f32 %v3899, %v3900
    %v3902 = vrot.slane %v3901, 2
    %v3903 = vadd.f32 %v3901, %v3902
    %v3904 = vrot.slane %v3903, 1
    %v3905 = vadd.f32 %v3903, %v3904
    %v3906 = vadd.f32 %v3836, %v3837
    %v3907 = vadd.f32 %v3906, %v3838
    %v3908 = vadd.f32 %v3907, %v3839
    %v3909 = vadd.f32 %v3908, %v3840
    %v3910 = vrot.slane %v3909, 4
    %v3911 = vadd.f32 %v3909, %v3910
    %v3912 = vrot.slane %v3911, 2
    %v3913 = vadd.f32 %v3911, %v3912
    %v3914 = vrot.slane %v3913, 1
    %v3915 = vadd.f32 %v3913, %v3914
    %v3916 = vadd.f32 %v3841, %v3842
    %v3917 = vadd.f32 %v3916, %v3843
    %v3918 = vadd.f32 %v3917, %v3844
    %v3919 = vadd.f32 %v3918, %v3845
    %v3920 = vrot.slane %v3919, 4
    %v3921 = vadd.f32 %v3919, %v3920
    %v3922 = vrot.slane %v3921, 2
    %v3923 = vadd.f32 %v3921, %v3922
    %v3924 = vrot.slane %v3923, 1
    %v3925 = vadd.f32 %v3923, %v3924
    %v3926 = vpack.c.bf16 %v3855, %v3855
    %v3927 = vpack.c.bf16 %v3865, %v3865
    %v3928 = vpack.c.bf16 %v3875, %v3875
    %v3929 = vpack.c.bf16 %v3885, %v3885
    %v3930 = vpack.c.bf16 %v3895, %v3895
    %v3931 = vpack.c.bf16 %v3905, %v3905
    %v3932 = vpack.c.bf16 %v3915, %v3915
    %v3933 = vpack.c.bf16 %v3925, %v3925
    %v3934 = vld [vmem:[%s7] sm:$0xf]
    %v3935 = vld [vmem:[%s7 + $0x4] sm:$0xf]
    %v3936 = vld [vmem:[%s7 + $0x8] sm:$0xf]
    %v3937 = vld [vmem:[%s7 + $0xc] sm:$0xf]
    %v3938 = vld [vmem:[%s7 + $0x10] sm:$0xf]
    %v3939 = vld [vmem:[%s7 + $0x14] sm:$0xf]
    %v3940 = vld [vmem:[%s7 + $0x18] sm:$0xf]
    %v3941 = vld [vmem:[%s7 + $0x1c] sm:$0xf]
    %v3942 = vld [vmem:[%s7 + $0x20] sm:$0xf]
    %v3943 = vld [vmem:[%s7 + $0x24] sm:$0xf]
    %v3944 = vld [vmem:[%s7 + $0x28] sm:$0xf]
    %v3945 = vld [vmem:[%s7 + $0x2c] sm:$0xf]
    %v3946 = vld [vmem:[%s7 + $0x30] sm:$0xf]
    %v3947 = vld [vmem:[%s7 + $0x34] sm:$0xf]
    %v3948 = vld [vmem:[%s7 + $0x38] sm:$0xf]
    %v3949 = vld [vmem:[%s7 + $0x3c] sm:$0xf]
    %v3950 = vld [vmem:[%s8] sm:$0x1]
    %v3952 = vlaneseq
    %v3953 = vshrl.u32 %v3952, 7
    %v3954 = vsub.s32 0, %v3953
    %v3955 = vrot.slane %v3950, %v3954
    %v3965 = vunpack.c.l.b16 %v3926
    %v3966 = vunpack.c.l.b16 %v3927
    %v3967 = vunpack.c.l.b16 %v3928
    %v3968 = vunpack.c.l.b16 %v3929
    %v3969 = vunpack.c.l.b16 %v3930
    %v3970 = vunpack.c.l.b16 %v3931
    %v3971 = vunpack.c.l.b16 %v3932
    %v3972 = vunpack.c.l.b16 %v3933
    %vm3973 = vcmask 1041409
    %v3974 = vsel %vm3973, %v3966, %v3965
    %vm3975 = vcmask 1042434
    %v3976 = vsel %vm3975, %v3967, %v3974
    %vm3977 = vcmask 1043459
    %v3978 = vsel %vm3977, %v3968, %v3976
    %vm3979 = vcmask 1044484
    %v3980 = vsel %vm3979, %v3969, %v3978
    %vm3981 = vcmask 1045509
    %v3982 = vsel %vm3981, %v3970, %v3980
    %vm3983 = vcmask 1046534
    %v3984 = vsel %vm3983, %v3971, %v3982
    %vm3985 = vcmask 1047559
    %v3986 = vsel %vm3985, %v3972, %v3984
    %v3987 = vpack.c.b16 %v3986, %v3986
    %v4005 = vunpack.c.l.b16 %v3934
    %v4006 = vunpack.c.l.b16 %v3935
    %v4007 = vunpack.c.l.b16 %v3936
    %v4008 = vunpack.c.l.b16 %v3937
    %v4009 = vunpack.c.l.b16 %v3938
    %v4010 = vunpack.c.l.b16 %v3939
    %v4011 = vunpack.c.l.b16 %v3940
    %v4012 = vunpack.c.l.b16 %v3941
    %v4013 = vunpack.c.l.b16 %v3942
    %v4014 = vunpack.c.l.b16 %v3943
    %v4015 = vunpack.c.l.b16 %v3944
    %v4016 = vunpack.c.l.b16 %v3945
    %v4017 = vunpack.c.l.b16 %v3946
    %v4018 = vunpack.c.l.b16 %v3947
    %v4019 = vunpack.c.l.b16 %v3948
    %v4020 = vunpack.c.l.b16 %v3949
    %v4021 = vpack.c.b16 %v4006, %v4005
    %v4022 = vpack.c.b16 %v4008, %v4007
    %v4023 = vpack.c.b16 %v4010, %v4009
    %v4024 = vpack.c.b16 %v4012, %v4011
    %v4025 = vpack.c.b16 %v4014, %v4013
    %v4026 = vpack.c.b16 %v4016, %v4015
    %v4027 = vpack.c.b16 %v4018, %v4017
    %v4028 = vpack.c.b16 %v4020, %v4019
    %4037 = vmatprep.subr.bf16.mxu0 0
    %4038 = vmatpush1.bf16.msra.mxu0 %v4028
    %4039 = vmatprep.subr.bf16.mxu0 0
    %4040 = vmatpush1.bf16.msra.mxu0 %v4027
    %4041 = vmatprep.subr.bf16.mxu0 0
    %4042 = vmatpush1.bf16.msra.mxu0 %v4026
    %4043 = vmatprep.subr.bf16.mxu0 0
    %4044 = vmatpush1.bf16.msra.mxu0 %v4025
    %4045 = vmatprep.subr.bf16.mxu0 0
    %4046 = vmatpush1.bf16.msra.mxu0 %v4024
    %4047 = vmatprep.subr.bf16.mxu0 0
    %4048 = vmatpush1.bf16.msra.mxu0 %v4023
    %4049 = vmatprep.subr.bf16.mxu0 0
    %4050 = vmatpush1.bf16.msra.mxu0 %v4022
    %4051 = vmatprep.subr.bf16.mxu0 0
    %4052 = vmatpush1.bf16.msra.mxu0 %v4021
    %4053 = vmatprep.subr.bf16.mxu0 0
    %4054 = vmatpush2.bf16.msra.mxu0 0
    %4055 = vmatprep.subr.bf16.mxu0 0
    %4056 = vmatpush2.bf16.msra.mxu0 0
    %4057 = vmatprep.subr.bf16.mxu0 0
    %4058 = vmatpush2.bf16.msra.mxu0 0
    %4059 = vmatprep.subr.bf16.mxu0 0
    %4060 = vmatpush2.bf16.msra.mxu0 0
    %4061 = vmatprep.subr.bf16.mxu0 0
    %4062 = vmatpush2.bf16.msra.mxu0 0
    %4063 = vmatprep.subr.bf16.mxu0 0
    %4064 = vmatpush2.bf16.msra.mxu0 0
    %4065 = vmatprep.subr.bf16.mxu0 0
    %4066 = vmatpush2.bf16.msra.mxu0 0
    %4067 = vmatprep.subr.bf16.mxu0 0
    %4068 = vmatpush2.bf16.msra.mxu0 0
    %4069 = vmatprep.mubr.bf16.mxu0 0
    %4070 = vmatmul.mubr.bf16.gmra.mxu0 %v3987
    %v4071 = vpop.f32.mrf.mxu0
    %v4072 = vadd.f32 %v3955, %v4071
    %v4073 = vpop.f32.mrf.mxu0
    %v4074 = vpop.f32.mrf.mxu0
    %v4075 = vpop.f32.mrf.mxu0
    %4076 = vdwg.mxu0
    %4077 = vst [vmem:[#allocation2] sm:$0xff] %v4072
    // Predicated region
    $region38: #{tpu_custom_call.1} parent=1 // pred_check
      _
    $region39: #{tpu_custom_call.1} parent=1 // pred_check_branch
      %4079 = sbr.rel (0) target = $region41
    $region40: #{tpu_custom_call.1} parent=1 // pred_region
      %s4081 = ssub.s32 128, 128
      %4082 = vsyncadd [#allocation3], %s4081
      %s4084 = sshll.u32 [#allocation2], 4
      %s4085 = int_to_ptr.vmem [resolvable:$true] %s4084
      %4087 = dma.vmem_to_hbm [thread:$0]  %s4085, 128, %s9, [#allocation3]
    $region41: #{tpu_custom_call.1} parent=1 // pred_fallthru
      _
    // Predicated region
    $region42: #{tpu_custom_call.1} parent=1 // pred_check
      _
    $region43: #{tpu_custom_call.1} parent=1 // pred_check_branch
      %4089 = sbr.rel (0) target = $region45
    $region44: #{tpu_custom_call.1} parent=1 // pred_region
      %4090 = dma.done [#allocation3], 128
    $region45: #{tpu_custom_call.1} parent=1 // pred_fallthru
      _
    %4091 = vsyncpa [#allocation3], 1

</llo_original>
